<compile_context>
chip_gen: v5e
topology: v5e:2x2
jax: 0.10.0
libtpu: 0.0.40
codegen_flags: <defaults>
</compile_context>

<pallas_src>
import functools

import jax
import jax.numpy as jnp
from jax.experimental import pallas as pl
from jax.experimental.pallas import tpu as pltpu

VMEM_LIMIT = 40 * 1024 * 1024  # fits v7x's 64 MiB physical VMEM with headroom


def _round_up(a, b):
    return (a + b - 1) // b * b


# -----------------------------------------------------------------------------
# Pallas kernel 1: tiled matmul, f32 accumulation in the resident output block,
# folded-BN (scale/bias) + optional ReLU epilogue on the last K step.
# -----------------------------------------------------------------------------
def _mm_bn_act_kernel(x_ref, w_ref, s_ref, b_ref, o_ref, *, relu):
    k = pl.program_id(2)

    @pl.when(k == 0)
    def _():
        o_ref[...] = jnp.zeros_like(o_ref)

    o_ref[...] += jnp.dot(x_ref[...], w_ref[...],
                          preferred_element_type=jnp.float32)

    @pl.when(k == pl.num_programs(2) - 1)
    def _():
        y = o_ref[...] * s_ref[...] + b_ref[...]
        if relu:
            y = jnp.maximum(y, 0.0)
        o_ref[...] = y.astype(o_ref.dtype)


def matmul_bn_act(x, w, scale, bias, *, relu=True, tm=512, tn=512, tk=512):
    """relu_opt((x @ w) * scale + bias). x:(M,K), w:(K,N). bf16 operands, f32 out."""
    M, K = x.shape
    K2, Nout = w.shape
    assert K == K2

    tm = min(tm, _round_up(M, 8))
    tn = min(tn, _round_up(Nout, 128))
    tk = min(tk, _round_up(K, 128))
    Mp, Kp, Np = _round_up(M, tm), _round_up(K, tk), _round_up(Nout, tn)

    if (Mp, Kp) != (M, K):
        x = jnp.pad(x, ((0, Mp - M), (0, Kp - K)))
    if (Kp, Np) != (K, Nout):
        w = jnp.pad(w, ((0, Kp - K), (0, Np - Nout)))
    s2 = jnp.pad(scale.astype(jnp.float32), (0, Np - Nout)).reshape(1, Np)
    b2 = jnp.pad(bias.astype(jnp.float32), (0, Np - Nout)).reshape(1, Np)
    x = x.astype(jnp.bfloat16)
    w = w.astype(jnp.bfloat16)

    kernel = functools.partial(_mm_bn_act_kernel, relu=relu)
    out = pl.pallas_call(
        kernel,
        out_shape=jax.ShapeDtypeStruct((Mp, Np), jnp.float32),
        grid_spec=pltpu.PrefetchScalarGridSpec(
            num_scalar_prefetch=0,
            grid=(Mp // tm, Np // tn, Kp // tk),
            in_specs=[
                pl.BlockSpec((tm, tk), lambda i, j, k: (i, k)),
                pl.BlockSpec((tk, tn), lambda i, j, k: (k, j)),
                pl.BlockSpec((1, tn), lambda i, j, k: (0, j)),
                pl.BlockSpec((1, tn), lambda i, j, k: (0, j)),
            ],
            out_specs=pl.BlockSpec((tm, tn), lambda i, j, k: (i, j)),
        ),
        compiler_params=pltpu.CompilerParams(
            dimension_semantics=("parallel", "parallel", "arbitrary"),
            vmem_limit_bytes=VMEM_LIMIT),
        cost_estimate=pl.CostEstimate(
            flops=2 * Mp * Kp * Np,
            transcendentals=0,
            bytes_accessed=(Mp * Kp + Kp * Np) * 2 + Mp * Np * 4),
    )(x, w, s2, b2)
    return out[:M, :Nout]


# -----------------------------------------------------------------------------
# Pallas kernel 2: fused head  conv1(1x1, split over the 5 concat inputs)
#                  -> conv2(1x1, padded to 128 lanes) -> sigmoid.  M-tiled.
# -----------------------------------------------------------------------------
def _head_kernel(x1_ref, x2_ref, x3_ref, x4_ref, x5_ref, w1_ref, w2_ref, o_ref):
    acc = jnp.dot(x1_ref[...], w1_ref[0], preferred_element_type=jnp.float32)
    for t, xr in enumerate((x2_ref, x3_ref, x4_ref, x5_ref), start=1):
        acc = acc + jnp.dot(xr[...], w1_ref[t],
                            preferred_element_type=jnp.float32)
    y = jnp.dot(acc.astype(jnp.bfloat16), w2_ref[...],
                preferred_element_type=jnp.float32)
    # sigmoid: exp on the EUP, approx reciprocal on the EUP (VPU stays free)
    o_ref[...] = pl.reciprocal(1.0 + jnp.exp(-y),
                               approx=True).astype(o_ref.dtype)


def head_conv_sigmoid(x1, x2, x3, x4, x5, w1, w2, *, tm=512):
    M = x1.shape[0]
    tm = min(tm, _round_up(M, 8))
    Mp = _round_up(M, tm)

    def prep(x):
        if Mp != M:
            x = jnp.pad(x, ((0, Mp - M), (0, 0)))
        return x.astype(jnp.bfloat16)

    xs = [prep(x) for x in (x1, x2, x3, x4, x5)]
    w1r = w1.reshape(5, 256, 256).astype(jnp.bfloat16)
    n2 = w2.shape[1]
    n2p = _round_up(n2, 128)                       # lane-dense (unmasked) stores
    w2p = jnp.pad(w2, ((0, 0), (0, n2p - n2))).astype(jnp.bfloat16)

    x_spec = pl.BlockSpec((tm, 256), lambda i: (i, 0))
    out = pl.pallas_call(
        _head_kernel,
        out_shape=jax.ShapeDtypeStruct((Mp, n2p), jnp.float32),
        grid_spec=pltpu.PrefetchScalarGridSpec(
            num_scalar_prefetch=0,
            grid=(Mp // tm,),
            in_specs=[x_spec] * 5 + [
                pl.BlockSpec((5, 256, 256), lambda i: (0, 0, 0)),
                pl.BlockSpec((256, n2p), lambda i: (0, 0)),
            ],
            out_specs=pl.BlockSpec((tm, n2p), lambda i: (i, 0)),
        ),
        compiler_params=pltpu.CompilerParams(
            dimension_semantics=("parallel",),
            vmem_limit_bytes=VMEM_LIMIT),
        cost_estimate=pl.CostEstimate(
            flops=2 * Mp * (1280 * 256 + 256 * n2p),
            transcendentals=Mp * n2p,
            bytes_accessed=5 * Mp * 256 * 2 + (5 * 256 * 256 + 256 * n2p) * 2
                           + Mp * n2p * 4),
    )(*xs, w1r, w2p)
    return out[:M, :n2]


# -----------------------------------------------------------------------------
# Glue: BN folding, bilinear (align_corners=True) interpolation matrices
# -----------------------------------------------------------------------------
def fold_bn(gamma, beta, mean, var, eps=1e-5):
    scale = gamma / jnp.sqrt(var + eps)
    bias = beta - mean * scale
    return scale, bias


def interp_matrix(T, s):
    """Row-interp matrix (T, s) for bilinear resize, align_corners=True."""
    if s == 1:
        return jnp.ones((T, 1), jnp.float32)
    if T == 1:
        return jnp.zeros((1, s), jnp.float32).at[0, 0].set(1.0)
    pos = jnp.arange(T, dtype=jnp.float32) * (s - 1) / (T - 1)
    i0 = jnp.clip(jnp.floor(pos).astype(jnp.int32), 0, s - 2)
    frac = pos - i0.astype(jnp.float32)
    m = jnp.zeros((T, s), jnp.float32)
    m = m.at[jnp.arange(T), i0].add(1.0 - frac)
    m = m.at[jnp.arange(T), i0 + 1].add(frac)
    return m


# -----------------------------------------------------------------------------
# Parameters (deterministic, synthetic)
# -----------------------------------------------------------------------------
def init_params(key, inplanes=2048, out_stride=16, in_ch=3):
    keys = iter(jax.random.split(key, 64))
    p = {}

    def conv(shape, fan_in):
        return jax.random.normal(next(keys), shape,
                                 jnp.float32) / jnp.sqrt(float(fan_in))

    def bn(c):
        gamma = 1.0 + 0.05 * jax.random.normal(next(keys), (c,), jnp.float32)
        beta = 0.05 * jax.random.normal(next(keys), (c,), jnp.float32)
        mean = 0.1 * jax.random.normal(next(keys), (c,), jnp.float32)
        var = jax.random.uniform(next(keys), (c,), jnp.float32,
                                 minval=0.5, maxval=1.5)
        return fold_bn(gamma, beta, mean, var)

    # TODO(synk): ResNet101 backbone is external/undefined; stand-in is a single
    # stride-16 16x16 patch conv (in_ch -> 2048) + BN + ReLU giving the 1/16 feature.
    kin_bb = out_stride * out_stride * in_ch
    p['bb_w'] = conv((kin_bb, inplanes), kin_bb)
    p['bb_scale'], p['bb_bias'] = bn(inplanes)

    p['aspp1_w'] = conv((inplanes, 256), inplanes)
    p['aspp1_scale'], p['aspp1_bias'] = bn(256)
    for name in ('aspp2', 'aspp3', 'aspp4'):
        # per-tap 1x1 weights of the 3x3 dilated conv: (Cin, 9 taps, 256)
        p[name + '_w'] = conv((inplanes, 9, 256), 9 * inplanes)
        p[name + '_scale'], p[name + '_bias'] = bn(256)
    p['gap_w'] = conv((inplanes, 256), inplanes)
    p['gap_scale'], p['gap_bias'] = bn(256)
    p['c1_w'] = conv((1280, 256), 1280)
    p['c2_w'] = conv((256, 56), 256)
    return p


# -----------------------------------------------------------------------------
# Forward pass (matches InstanceBranch.forward semantics)
# -----------------------------------------------------------------------------
def instance_branch_forward(params, x_nchw, out_stride=16):
    N, Cin, H, W = x_nchw.shape
    h, w = H // out_stride, W // out_stride
    M = N * h * w
    C = 2048
    x_nhwc = jnp.transpose(x_nchw, (0, 2, 3, 1))

    # Backbone stub: stride-16 patch conv -> (M, 2048)
    patches = (x_nhwc.reshape(N, h, out_stride, w, out_stride, Cin)
               .transpose(0, 1, 3, 2, 4, 5)
               .reshape(M, out_stride * out_stride * Cin))
    feat = matmul_bn_act(patches, params['bb_w'],
                         params['bb_scale'], params['bb_bias'], relu=True)
    feat_nhwc = feat.reshape(N, h, w, C)

    # ASPP: single fused matmul for the 1x1 branch + all 27 taps of the three
    # dilated 3x3 branches (BN scale folded into weight columns). No im2col.
    w_aspp = jnp.concatenate(
        [params['aspp1_w'] * params['aspp1_scale'][None, :]]
        + [(params[n + '_w'] * params[n + '_scale'][None, None, :])
           .reshape(C, 9 * 256) for n in ('aspp2', 'aspp3', 'aspp4')],
        axis=1)                                                  # (2048, 7168)
    ones = jnp.ones((w_aspp.shape[1],), jnp.float32)
    zeros = jnp.zeros((w_aspp.shape[1],), jnp.float32)
    zcat = matmul_bn_act(feat, w_aspp, ones, zeros, relu=False)  # (M, 7168) f32

    x1 = jax.nn.relu(zcat[:, :256] + params['aspp1_bias'][None, :])

    def dilated_branch(z_taps, d, bias):
        # out[y,x] = sum_t z_t[y+(ky-1)d, x+(kx-1)d]  (zeros outside == padding=d)
        z = z_taps.reshape(N, h, w, 9, 256)
        acc = jnp.zeros((N, h, w, 256), jnp.float32)
        for t in range(9):
            ky, kx = t // 3, t % 3
            oy, ox = (ky - 1) * d, (kx - 1) * d
            y0, y1 = max(0, -oy), h - max(0, oy)
            x0, x1_ = max(0, -ox), w - max(0, ox)
            if y0 >= y1 or x0 >= x1_:
                continue
            acc = acc.at[:, y0:y1, x0:x1_, :].add(
                z[:, y0 + oy:y1 + oy, x0 + ox:x1_ + ox, t, :])
        return jax.nn.relu(acc + bias[None, None, None, :]).reshape(M, 256)

    x2 = dilated_branch(zcat[:, 256:2560], 6, params['aspp2_bias'])
    x3 = dilated_branch(zcat[:, 2560:4864], 12, params['aspp3_bias'])
    x4 = dilated_branch(zcat[:, 4864:7168], 18, params['aspp4_bias'])

    # Global average pooling branch + 1x1 conv + BN + ReLU, broadcast-upsampled
    g = jnp.mean(feat_nhwc, axis=(1, 2))                         # (N, 2048)
    g = matmul_bn_act(g, params['gap_w'],
                      params['gap_scale'], params['gap_bias'], relu=True)
    x5 = jnp.broadcast_to(g[:, None, :], (N, h * w, 256)).reshape(M, 256)

    # Fused head: (implicit concat) -> conv1 -> conv2 -> sigmoid
    y = head_conv_sigmoid(x1, x2, x3, x4, x5,
                          params['c1_w'], params['c2_w'])        # (M, 56)
    y = y.reshape(N, h, w, 56)

    # Bilinear upsample to input resolution, align_corners=True (JAX glue).
    R = interp_matrix(H, h)
    Cm = interp_matrix(W, w)
    y_up = jnp.einsum('ph,qw,nhwc->npqc', R, Cm, y)              # (N, H, W, 56)
    return jnp.transpose(y_up, (0, 3, 1, 2))                     # NCHW


# -----------------------------------------------------------------------------
if __name__ == "__main__":
    key = jax.random.PRNGKey(0)
    kx, kp = jax.random.split(key)
    x = jax.random.normal(kx, (2, 3, 32, 32), jnp.float32)   # NCHW input
    params = init_params(kp)
    out = jax.jit(instance_branch_forward)(params, x)
    out = jax.block_until_ready(out)
    assert out.shape == (2, 56, 32, 32), out.shape
    assert bool(jnp.all(jnp.isfinite(out)))
    print("KERNEL_OK")
</pallas_src>

<mosaic_0001>
module attributes {stable_mosaic.version = 11 : i64} {
  func.func @_mm_bn_act_kernel(%arg0: i32, %arg1: i32, %arg2: i32, %arg3: memref<8x512xbf16, #tpu.memory_space<vmem>>, %arg4: memref<512x512xbf16, #tpu.memory_space<vmem>>, %arg5: memref<1x512xf32, #tpu.memory_space<vmem>>, %arg6: memref<1x512xf32, #tpu.memory_space<vmem>>, %arg7: memref<8x512xf32, #tpu.memory_space<vmem>>) attributes {dimension_semantics = [#tpu.dimension_semantics<parallel>, #tpu.dimension_semantics<parallel>, #tpu.dimension_semantics<arbitrary>], iteration_bounds = array<i64: 1, 4, 2>, scalar_prefetch = 0 : i64, scratch_operands = 0 : i64, tpu.core_type = #tpu.core_type<tc>, window_params = [{transform_indices = @transform_0, window_bounds = array<i64: 8, 512>}, {transform_indices = @transform_1, window_bounds = array<i64: 512, 512>}, {transform_indices = @transform_2, window_bounds = array<i64: 1, 512>}, {transform_indices = @transform_3, window_bounds = array<i64: 1, 512>}, {transform_indices = @transform_4, window_bounds = array<i64: 8, 512>}]} {
    %c0_i32 = arith.constant 0 : i32
    %0 = arith.cmpi eq, %arg2, %c0_i32 : i32
    %1 = arith.extui %0 : i1 to i32
    %c0_i32_0 = arith.constant 0 : i32
    %2 = arith.cmpi ne, %1, %c0_i32_0 : i32
    scf.if %2 {
      %cst_9 = arith.constant 0.000000e+00 : f32
      %12 = vector.broadcast %cst_9 : f32 to vector<8x512xf32>
      %c0_10 = arith.constant 0 : index
      %c0_11 = arith.constant 0 : index
      %13 = vector.load %arg7[%c0_10, %c0_11] : memref<8x512xf32, #tpu.memory_space<vmem>>, vector<8x512xf32>
      tpu.vector_store %arg7[%c0_10, %c0_11], %12 {strides = array<i32>} : memref<8x512xf32, #tpu.memory_space<vmem>>, vector<8x512xf32>,
    } else {
    }
    %c0 = arith.constant 0 : index
    %c0_1 = arith.constant 0 : index
    %3 = vector.load %arg7[%c0, %c0_1] : memref<8x512xf32, #tpu.memory_space<vmem>>, vector<8x512xf32>
    %c0_2 = arith.constant 0 : index
    %c0_3 = arith.constant 0 : index
    %4 = vector.load %arg3[%c0_2, %c0_3] : memref<8x512xbf16, #tpu.memory_space<vmem>>, vector<8x512xbf16>
    %c0_4 = arith.constant 0 : index
    %c0_5 = arith.constant 0 : index
    %5 = vector.load %arg4[%c0_4, %c0_5] : memref<512x512xbf16, #tpu.memory_space<vmem>>, vector<512x512xbf16>
    %cst = arith.constant dense<0.000000e+00> : vector<8x512xf32>
    %6 = tpu.matmul %4, %5, %cst {dimension_numbers = #tpu.dot_dimension_numbers<[1], [0], [0], [1], [0, 0, 1, 1], [], []>} : vector<8x512xbf16>, vector<512x512xbf16>, vector<8x512xf32> -> vector<8x512xf32>
    %7 = arith.addf %3, %6 : vector<8x512xf32>
    %c0_6 = arith.constant 0 : index
    %c0_7 = arith.constant 0 : index
    %8 = vector.load %arg7[%c0_6, %c0_7] : memref<8x512xf32, #tpu.memory_space<vmem>>, vector<8x512xf32>
    tpu.vector_store %arg7[%c0_6, %c0_7], %7 {strides = array<i32>} : memref<8x512xf32, #tpu.memory_space<vmem>>, vector<8x512xf32>,
    %c1_i32 = arith.constant 1 : i32
    %9 = arith.cmpi eq, %arg2, %c1_i32 : i32
    %10 = arith.extui %9 : i1 to i32
    %c0_i32_8 = arith.constant 0 : i32
    %11 = arith.cmpi ne, %10, %c0_i32_8 : i32
    scf.if %11 {
      %c0_9 = arith.constant 0 : index
      %c0_10 = arith.constant 0 : index
      %12 = vector.load %arg7[%c0_9, %c0_10] : memref<8x512xf32, #tpu.memory_space<vmem>>, vector<8x512xf32>
      %c0_11 = arith.constant 0 : index
      %c0_12 = arith.constant 0 : index
      %13 = vector.load %arg5[%c0_11, %c0_12] : memref<1x512xf32, #tpu.memory_space<vmem>>, vector<1x512xf32>
      %14 = vector.broadcast %13 : vector<1x512xf32> to vector<8x512xf32>
      %15 = arith.mulf %12, %14 : vector<8x512xf32>
      %c0_13 = arith.constant 0 : index
      %c0_14 = arith.constant 0 : index
      %16 = vector.load %arg6[%c0_13, %c0_14] : memref<1x512xf32, #tpu.memory_space<vmem>>, vector<1x512xf32>
      %17 = vector.broadcast %16 : vector<1x512xf32> to vector<8x512xf32>
      %18 = arith.addf %15, %17 : vector<8x512xf32>
      %cst_15 = arith.constant 0.000000e+00 : f32
      %19 = vector.broadcast %cst_15 : f32 to vector<8x512xf32>
      %20 = arith.maximumf %18, %19 : vector<8x512xf32>
      %c0_16 = arith.constant 0 : index
      %c0_17 = arith.constant 0 : index
      %21 = vector.load %arg7[%c0_16, %c0_17] : memref<8x512xf32, #tpu.memory_space<vmem>>, vector<8x512xf32>
      tpu.vector_store %arg7[%c0_16, %c0_17], %20 {strides = array<i32>} : memref<8x512xf32, #tpu.memory_space<vmem>>, vector<8x512xf32>,
    } else {
    }
    return
  }
  func.func @transform_0(%arg0: i32, %arg1: i32, %arg2: i32) -> (i32, i32) {
    %c0_i32 = arith.constant 0 : i32
    return %arg0, %arg2 : i32, i32
  }
  func.func @transform_1(%arg0: i32, %arg1: i32, %arg2: i32) -> (i32, i32) {
    %c0_i32 = arith.constant 0 : i32
    return %arg2, %arg1 : i32, i32
  }
  func.func @transform_2(%arg0: i32, %arg1: i32, %arg2: i32) -> (i32, i32) {
    %c0_i32 = arith.constant 0 : i32
    %c0_i32_0 = arith.constant 0 : i32
    return %c0_i32, %arg1 : i32, i32
  }
  func.func @transform_3(%arg0: i32, %arg1: i32, %arg2: i32) -> (i32, i32) {
    %c0_i32 = arith.constant 0 : i32
    %c0_i32_0 = arith.constant 0 : i32
    return %c0_i32, %arg1 : i32, i32
  }
  func.func @transform_4(%arg0: i32, %arg1: i32, %arg2: i32) -> (i32, i32) {
    %c0_i32 = arith.constant 0 : i32
    return %arg0, %arg1 : i32, i32
  }
}

module attributes {stable_mosaic.version = 11 : i64} {
  func.func @_mm_bn_act_kernel(%arg0: i32, %arg1: i32, %arg2: i32, %arg3: memref<8x512xbf16, #tpu.memory_space<vmem>>, %arg4: memref<512x512xbf16, #tpu.memory_space<vmem>>, %arg5: memref<1x512xf32, #tpu.memory_space<vmem>>, %arg6: memref<1x512xf32, #tpu.memory_space<vmem>>, %arg7: memref<8x512xf32, #tpu.memory_space<vmem>>) attributes {dimension_semantics = [#tpu.dimension_semantics<parallel>, #tpu.dimension_semantics<parallel>, #tpu.dimension_semantics<arbitrary>], iteration_bounds = array<i64: 1, 14, 4>, scalar_prefetch = 0 : i64, scratch_operands = 0 : i64, tpu.core_type = #tpu.core_type<tc>, window_params = [{transform_indices = @transform_0, window_bounds = array<i64: 8, 512>}, {transform_indices = @transform_1, window_bounds = array<i64: 512, 512>}, {transform_indices = @transform_2, window_bounds = array<i64: 1, 512>}, {transform_indices = @transform_3, window_bounds = array<i64: 1, 512>}, {transform_indices = @transform_4, window_bounds = array<i64: 8, 512>}]} {
    %c0_i32 = arith.constant 0 : i32
    %0 = arith.cmpi eq, %arg2, %c0_i32 : i32
    %1 = arith.extui %0 : i1 to i32
    %c0_i32_0 = arith.constant 0 : i32
    %2 = arith.cmpi ne, %1, %c0_i32_0 : i32
    scf.if %2 {
      %cst_9 = arith.constant 0.000000e+00 : f32
      %12 = vector.broadcast %cst_9 : f32 to vector<8x512xf32>
      %c0_10 = arith.constant 0 : index
      %c0_11 = arith.constant 0 : index
      %13 = vector.load %arg7[%c0_10, %c0_11] : memref<8x512xf32, #tpu.memory_space<vmem>>, vector<8x512xf32>
      tpu.vector_store %arg7[%c0_10, %c0_11], %12 {strides = array<i32>} : memref<8x512xf32, #tpu.memory_space<vmem>>, vector<8x512xf32>,
    } else {
    }
    %c0 = arith.constant 0 : index
    %c0_1 = arith.constant 0 : index
    %3 = vector.load %arg7[%c0, %c0_1] : memref<8x512xf32, #tpu.memory_space<vmem>>, vector<8x512xf32>
    %c0_2 = arith.constant 0 : index
    %c0_3 = arith.constant 0 : index
    %4 = vector.load %arg3[%c0_2, %c0_3] : memref<8x512xbf16, #tpu.memory_space<vmem>>, vector<8x512xbf16>
    %c0_4 = arith.constant 0 : index
    %c0_5 = arith.constant 0 : index
    %5 = vector.load %arg4[%c0_4, %c0_5] : memref<512x512xbf16, #tpu.memory_space<vmem>>, vector<512x512xbf16>
    %cst = arith.constant dense<0.000000e+00> : vector<8x512xf32>
    %6 = tpu.matmul %4, %5, %cst {dimension_numbers = #tpu.dot_dimension_numbers<[1], [0], [0], [1], [0, 0, 1, 1], [], []>} : vector<8x512xbf16>, vector<512x512xbf16>, vector<8x512xf32> -> vector<8x512xf32>
    %7 = arith.addf %3, %6 : vector<8x512xf32>
    %c0_6 = arith.constant 0 : index
    %c0_7 = arith.constant 0 : index
    %8 = vector.load %arg7[%c0_6, %c0_7] : memref<8x512xf32, #tpu.memory_space<vmem>>, vector<8x512xf32>
    tpu.vector_store %arg7[%c0_6, %c0_7], %7 {strides = array<i32>} : memref<8x512xf32, #tpu.memory_space<vmem>>, vector<8x512xf32>,
    %c3_i32 = arith.constant 3 : i32
    %9 = arith.cmpi eq, %arg2, %c3_i32 : i32
    %10 = arith.extui %9 : i1 to i32
    %c0_i32_8 = arith.constant 0 : i32
    %11 = arith.cmpi ne, %10, %c0_i32_8 : i32
    scf.if %11 {
      %c0_9 = arith.constant 0 : index
      %c0_10 = arith.constant 0 : index
      %12 = vector.load %arg7[%c0_9, %c0_10] : memref<8x512xf32, #tpu.memory_space<vmem>>, vector<8x512xf32>
      %c0_11 = arith.constant 0 : index
      %c0_12 = arith.constant 0 : index
      %13 = vector.load %arg5[%c0_11, %c0_12] : memref<1x512xf32, #tpu.memory_space<vmem>>, vector<1x512xf32>
      %14 = vector.broadcast %13 : vector<1x512xf32> to vector<8x512xf32>
      %15 = arith.mulf %12, %14 : vector<8x512xf32>
      %c0_13 = arith.constant 0 : index
      %c0_14 = arith.constant 0 : index
      %16 = vector.load %arg6[%c0_13, %c0_14] : memref<1x512xf32, #tpu.memory_space<vmem>>, vector<1x512xf32>
      %17 = vector.broadcast %16 : vector<1x512xf32> to vector<8x512xf32>
      %18 = arith.addf %15, %17 : vector<8x512xf32>
      %c0_15 = arith.constant 0 : index
      %c0_16 = arith.constant 0 : index
      %19 = vector.load %arg7[%c0_15, %c0_16] : memref<8x512xf32, #tpu.memory_space<vmem>>, vector<8x512xf32>
      tpu.vector_store %arg7[%c0_15, %c0_16], %18 {strides = array<i32>} : memref<8x512xf32, #tpu.memory_space<vmem>>, vector<8x512xf32>,
    } else {
    }
    return
  }
  func.func @transform_0(%arg0: i32, %arg1: i32, %arg2: i32) -> (i32, i32) {
    %c0_i32 = arith.constant 0 : i32
    return %arg0, %arg2 : i32, i32
  }
  func.func @transform_1(%arg0: i32, %arg1: i32, %arg2: i32) -> (i32, i32) {
    %c0_i32 = arith.constant 0 : i32
    return %arg2, %arg1 : i32, i32
  }
  func.func @transform_2(%arg0: i32, %arg1: i32, %arg2: i32) -> (i32, i32) {
    %c0_i32 = arith.constant 0 : i32
    %c0_i32_0 = arith.constant 0 : i32
    return %c0_i32, %arg1 : i32, i32
  }
  func.func @transform_3(%arg0: i32, %arg1: i32, %arg2: i32) -> (i32, i32) {
    %c0_i32 = arith.constant 0 : i32
    %c0_i32_0 = arith.constant 0 : i32
    return %c0_i32, %arg1 : i32, i32
  }
  func.func @transform_4(%arg0: i32, %arg1: i32, %arg2: i32) -> (i32, i32) {
    %c0_i32 = arith.constant 0 : i32
    return %arg0, %arg1 : i32, i32
  }
}

module attributes {stable_mosaic.version = 11 : i64} {
  func.func @_mm_bn_act_kernel(%arg0: i32, %arg1: i32, %arg2: i32, %arg3: memref<8x512xbf16, #tpu.memory_space<vmem>>, %arg4: memref<512x256xbf16, #tpu.memory_space<vmem>>, %arg5: memref<1x256xf32, #tpu.memory_space<vmem>>, %arg6: memref<1x256xf32, #tpu.memory_space<vmem>>, %arg7: memref<8x256xf32, #tpu.memory_space<vmem>>) attributes {dimension_semantics = [#tpu.dimension_semantics<parallel>, #tpu.dimension_semantics<parallel>, #tpu.dimension_semantics<arbitrary>], iteration_bounds = array<i64: 1, 1, 4>, scalar_prefetch = 0 : i64, scratch_operands = 0 : i64, tpu.core_type = #tpu.core_type<tc>, window_params = [{transform_indices = @transform_0, window_bounds = array<i64: 8, 512>}, {transform_indices = @transform_1, window_bounds = array<i64: 512, 256>}, {transform_indices = @transform_2, window_bounds = array<i64: 1, 256>}, {transform_indices = @transform_3, window_bounds = array<i64: 1, 256>}, {transform_indices = @transform_4, window_bounds = array<i64: 8, 256>}]} {
    %c0_i32 = arith.constant 0 : i32
    %0 = arith.cmpi eq, %arg2, %c0_i32 : i32
    %1 = arith.extui %0 : i1 to i32
    %c0_i32_0 = arith.constant 0 : i32
    %2 = arith.cmpi ne, %1, %c0_i32_0 : i32
    scf.if %2 {
      %cst_9 = arith.constant 0.000000e+00 : f32
      %12 = vector.broadcast %cst_9 : f32 to vector<8x256xf32>
      %c0_10 = arith.constant 0 : index
      %c0_11 = arith.constant 0 : index
      %13 = vector.load %arg7[%c0_10, %c0_11] : memref<8x256xf32, #tpu.memory_space<vmem>>, vector<8x256xf32>
      tpu.vector_store %arg7[%c0_10, %c0_11], %12 {strides = array<i32>} : memref<8x256xf32, #tpu.memory_space<vmem>>, vector<8x256xf32>,
    } else {
    }
    %c0 = arith.constant 0 : index
    %c0_1 = arith.constant 0 : index
    %3 = vector.load %arg7[%c0, %c0_1] : memref<8x256xf32, #tpu.memory_space<vmem>>, vector<8x256xf32>
    %c0_2 = arith.constant 0 : index
    %c0_3 = arith.constant 0 : index
    %4 = vector.load %arg3[%c0_2, %c0_3] : memref<8x512xbf16, #tpu.memory_space<vmem>>, vector<8x512xbf16>
    %c0_4 = arith.constant 0 : index
    %c0_5 = arith.constant 0 : index
    %5 = vector.load %arg4[%c0_4, %c0_5] : memref<512x256xbf16, #tpu.memory_space<vmem>>, vector<512x256xbf16>
    %cst = arith.constant dense<0.000000e+00> : vector<8x256xf32>
    %6 = tpu.matmul %4, %5, %cst {dimension_numbers = #tpu.dot_dimension_numbers<[1], [0], [0], [1], [0, 0, 1, 1], [], []>} : vector<8x512xbf16>, vector<512x256xbf16>, vector<8x256xf32> -> vector<8x256xf32>
    %7 = arith.addf %3, %6 : vector<8x256xf32>
    %c0_6 = arith.constant 0 : index
    %c0_7 = arith.constant 0 : index
    %8 = vector.load %arg7[%c0_6, %c0_7] : memref<8x256xf32, #tpu.memory_space<vmem>>, vector<8x256xf32>
    tpu.vector_store %arg7[%c0_6, %c0_7], %7 {strides = array<i32>} : memref<8x256xf32, #tpu.memory_space<vmem>>, vector<8x256xf32>,
    %c3_i32 = arith.constant 3 : i32
    %9 = arith.cmpi eq, %arg2, %c3_i32 : i32
    %10 = arith.extui %9 : i1 to i32
    %c0_i32_8 = arith.constant 0 : i32
    %11 = arith.cmpi ne, %10, %c0_i32_8 : i32
    scf.if %11 {
      %c0_9 = arith.constant 0 : index
      %c0_10 = arith.constant 0 : index
      %12 = vector.load %arg7[%c0_9, %c0_10] : memref<8x256xf32, #tpu.memory_space<vmem>>, vector<8x256xf32>
      %c0_11 = arith.constant 0 : index
      %c0_12 = arith.constant 0 : index
      %13 = vector.load %arg5[%c0_11, %c0_12] : memref<1x256xf32, #tpu.memory_space<vmem>>, vector<1x256xf32>
      %14 = vector.broadcast %13 : vector<1x256xf32> to vector<8x256xf32>
      %15 = arith.mulf %12, %14 : vector<8x256xf32>
      %c0_13 = arith.constant 0 : index
      %c0_14 = arith.constant 0 : index
      %16 = vector.load %arg6[%c0_13, %c0_14] : memref<1x256xf32, #tpu.memory_space<vmem>>, vector<1x256xf32>
      %17 = vector.broadcast %16 : vector<1x256xf32> to vector<8x256xf32>
      %18 = arith.addf %15, %17 : vector<8x256xf32>
      %cst_15 = arith.constant 0.000000e+00 : f32
      %19 = vector.broadcast %cst_15 : f32 to vector<8x256xf32>
      %20 = arith.maximumf %18, %19 : vector<8x256xf32>
      %c0_16 = arith.constant 0 : index
      %c0_17 = arith.constant 0 : index
      %21 = vector.load %arg7[%c0_16, %c0_17] : memref<8x256xf32, #tpu.memory_space<vmem>>, vector<8x256xf32>
      tpu.vector_store %arg7[%c0_16, %c0_17], %20 {strides = array<i32>} : memref<8x256xf32, #tpu.memory_space<vmem>>, vector<8x256xf32>,
    } else {
    }
    return
  }
  func.func @transform_0(%arg0: i32, %arg1: i32, %arg2: i32) -> (i32, i32) {
    %c0_i32 = arith.constant 0 : i32
    return %arg0, %arg2 : i32, i32
  }
  func.func @transform_1(%arg0: i32, %arg1: i32, %arg2: i32) -> (i32, i32) {
    %c0_i32 = arith.constant 0 : i32
    return %arg2, %arg1 : i32, i32
  }
  func.func @transform_2(%arg0: i32, %arg1: i32, %arg2: i32) -> (i32, i32) {
    %c0_i32 = arith.constant 0 : i32
    %c0_i32_0 = arith.constant 0 : i32
    return %c0_i32, %arg1 : i32, i32
  }
  func.func @transform_3(%arg0: i32, %arg1: i32, %arg2: i32) -> (i32, i32) {
    %c0_i32 = arith.constant 0 : i32
    %c0_i32_0 = arith.constant 0 : i32
    return %c0_i32, %arg1 : i32, i32
  }
  func.func @transform_4(%arg0: i32, %arg1: i32, %arg2: i32) -> (i32, i32) {
    %c0_i32 = arith.constant 0 : i32
    return %arg0, %arg1 : i32, i32
  }
}

module attributes {stable_mosaic.version = 11 : i64} {
  func.func @_head_kernel(%arg0: i32, %arg1: memref<8x256xbf16, #tpu.memory_space<vmem>>, %arg2: memref<8x256xbf16, #tpu.memory_space<vmem>>, %arg3: memref<8x256xbf16, #tpu.memory_space<vmem>>, %arg4: memref<8x256xbf16, #tpu.memory_space<vmem>>, %arg5: memref<8x256xbf16, #tpu.memory_space<vmem>>, %arg6: memref<5x256x256xbf16, #tpu.memory_space<vmem>>, %arg7: memref<256x128xbf16, #tpu.memory_space<vmem>>, %arg8: memref<8x128xf32, #tpu.memory_space<vmem>>) attributes {dimension_semantics = [#tpu.dimension_semantics<parallel>], iteration_bounds = array<i64: 1>, scalar_prefetch = 0 : i64, scratch_operands = 0 : i64, tpu.core_type = #tpu.core_type<tc>, window_params = [{transform_indices = @transform_0, window_bounds = array<i64: 8, 256>}, {transform_indices = @transform_1, window_bounds = array<i64: 8, 256>}, {transform_indices = @transform_2, window_bounds = array<i64: 8, 256>}, {transform_indices = @transform_3, window_bounds = array<i64: 8, 256>}, {transform_indices = @transform_4, window_bounds = array<i64: 8, 256>}, {pipeline_mode = #tpu.pipeline_mode<synchronous>, transform_indices = @transform_5, window_bounds = array<i64: 5, 256, 256>}, {pipeline_mode = #tpu.pipeline_mode<synchronous>, transform_indices = @transform_6, window_bounds = array<i64: 256, 128>}, {transform_indices = @transform_7, window_bounds = array<i64: 8, 128>}]} {
    %c0 = arith.constant 0 : index
    %c0_0 = arith.constant 0 : index
    %0 = vector.load %arg1[%c0, %c0_0] : memref<8x256xbf16, #tpu.memory_space<vmem>>, vector<8x256xbf16>
    %c0_1 = arith.constant 0 : index
    %c0_2 = arith.constant 0 : index
    %c0_3 = arith.constant 0 : index
    %1 = vector.load %arg6[%c0_1, %c0_2, %c0_3] : memref<5x256x256xbf16, #tpu.memory_space<vmem>>, vector<1x256x256xbf16>
    %2 = vector.shape_cast %1 : vector<1x256x256xbf16> to vector<256x256xbf16>
    %cst = arith.constant dense<0.000000e+00> : vector<8x256xf32>
    %3 = tpu.matmul %0, %2, %cst {dimension_numbers = #tpu.dot_dimension_numbers<[1], [0], [0], [1], [0, 0, 1, 1], [], []>} : vector<8x256xbf16>, vector<256x256xbf16>, vector<8x256xf32> -> vector<8x256xf32>
    %c0_4 = arith.constant 0 : index
    %c0_5 = arith.constant 0 : index
    %4 = vector.load %arg2[%c0_4, %c0_5] : memref<8x256xbf16, #tpu.memory_space<vmem>>, vector<8x256xbf16>
    %c1 = arith.constant 1 : index
    %c0_6 = arith.constant 0 : index
    %c0_7 = arith.constant 0 : index
    %5 = vector.load %arg6[%c1, %c0_6, %c0_7] : memref<5x256x256xbf16, #tpu.memory_space<vmem>>, vector<1x256x256xbf16>
    %6 = vector.shape_cast %5 : vector<1x256x256xbf16> to vector<256x256xbf16>
    %cst_8 = arith.constant dense<0.000000e+00> : vector<8x256xf32>
    %7 = tpu.matmul %4, %6, %cst_8 {dimension_numbers = #tpu.dot_dimension_numbers<[1], [0], [0], [1], [0, 0, 1, 1], [], []>} : vector<8x256xbf16>, vector<256x256xbf16>, vector<8x256xf32> -> vector<8x256xf32>
    %8 = arith.addf %3, %7 : vector<8x256xf32>
    %c0_9 = arith.constant 0 : index
    %c0_10 = arith.constant 0 : index
    %9 = vector.load %arg3[%c0_9, %c0_10] : memref<8x256xbf16, #tpu.memory_space<vmem>>, vector<8x256xbf16>
    %c2 = arith.constant 2 : index
    %c0_11 = arith.constant 0 : index
    %c0_12 = arith.constant 0 : index
    %10 = vector.load %arg6[%c2, %c0_11, %c0_12] : memref<5x256x256xbf16, #tpu.memory_space<vmem>>, vector<1x256x256xbf16>
    %11 = vector.shape_cast %10 : vector<1x256x256xbf16> to vector<256x256xbf16>
    %cst_13 = arith.constant dense<0.000000e+00> : vector<8x256xf32>
    %12 = tpu.matmul %9, %11, %cst_13 {dimension_numbers = #tpu.dot_dimension_numbers<[1], [0], [0], [1], [0, 0, 1, 1], [], []>} : vector<8x256xbf16>, vector<256x256xbf16>, vector<8x256xf32> -> vector<8x256xf32>
    %13 = arith.addf %8, %12 : vector<8x256xf32>
    %c0_14 = arith.constant 0 : index
    %c0_15 = arith.constant 0 : index
    %14 = vector.load %arg4[%c0_14, %c0_15] : memref<8x256xbf16, #tpu.memory_space<vmem>>, vector<8x256xbf16>
    %c3 = arith.constant 3 : index
    %c0_16 = arith.constant 0 : index
    %c0_17 = arith.constant 0 : index
    %15 = vector.load %arg6[%c3, %c0_16, %c0_17] : memref<5x256x256xbf16, #tpu.memory_space<vmem>>, vector<1x256x256xbf16>
    %16 = vector.shape_cast %15 : vector<1x256x256xbf16> to vector<256x256xbf16>
    %cst_18 = arith.constant dense<0.000000e+00> : vector<8x256xf32>
    %17 = tpu.matmul %14, %16, %cst_18 {dimension_numbers = #tpu.dot_dimension_numbers<[1], [0], [0], [1], [0, 0, 1, 1], [], []>} : vector<8x256xbf16>, vector<256x256xbf16>, vector<8x256xf32> -> vector<8x256xf32>
    %18 = arith.addf %13, %17 : vector<8x256xf32>
    %c0_19 = arith.constant 0 : index
    %c0_20 = arith.constant 0 : index
    %19 = vector.load %arg5[%c0_19, %c0_20] : memref<8x256xbf16, #tpu.memory_space<vmem>>, vector<8x256xbf16>
    %c4 = arith.constant 4 : index
    %c0_21 = arith.constant 0 : index
    %c0_22 = arith.constant 0 : index
    %20 = vector.load %arg6[%c4, %c0_21, %c0_22] : memref<5x256x256xbf16, #tpu.memory_space<vmem>>, vector<1x256x256xbf16>
    %21 = vector.shape_cast %20 : vector<1x256x256xbf16> to vector<256x256xbf16>
    %cst_23 = arith.constant dense<0.000000e+00> : vector<8x256xf32>
    %22 = tpu.matmul %19, %21, %cst_23 {dimension_numbers = #tpu.dot_dimension_numbers<[1], [0], [0], [1], [0, 0, 1, 1], [], []>} : vector<8x256xbf16>, vector<256x256xbf16>, vector<8x256xf32> -> vector<8x256xf32>
    %23 = arith.addf %18, %22 : vector<8x256xf32>
    %24 = arith.truncf %23 : vector<8x256xf32> to vector<8x256xbf16>
    %c0_24 = arith.constant 0 : index
    %c0_25 = arith.constant 0 : index
    %25 = vector.load %arg7[%c0_24, %c0_25] : memref<256x128xbf16, #tpu.memory_space<vmem>>, vector<256x128xbf16>
    %cst_26 = arith.constant dense<0.000000e+00> : vector<8x128xf32>
    %26 = tpu.matmul %24, %25, %cst_26 {dimension_numbers = #tpu.dot_dimension_numbers<[1], [0], [0], [1], [0, 0, 1, 1], [], []>} : vector<8x256xbf16>, vector<256x128xbf16>, vector<8x128xf32> -> vector<8x128xf32>
    %cst_27 = arith.constant 0.000000e+00 : f32
    %27 = vector.broadcast %cst_27 : f32 to vector<8x128xf32>
    %28 = arith.subf %27, %26 : vector<8x128xf32>
    %29 = math.exp %28 : vector<8x128xf32>
    %cst_28 = arith.constant 1.000000e+00 : f32
    %30 = vector.broadcast %cst_28 : f32 to vector<8x128xf32>
    %31 = arith.addf %30, %29 : vector<8x128xf32>
    %32 = tpu.reciprocal %31 {approx = true} : vector<8x128xf32> -> vector<8x128xf32>
    %c0_29 = arith.constant 0 : index
    %c0_30 = arith.constant 0 : index
    %33 = vector.load %arg8[%c0_29, %c0_30] : memref<8x128xf32, #tpu.memory_space<vmem>>, vector<8x128xf32>
    tpu.vector_store %arg8[%c0_29, %c0_30], %32 {strides = array<i32>} : memref<8x128xf32, #tpu.memory_space<vmem>>, vector<8x128xf32>,
    return
  }
  func.func @transform_0(%arg0: i32) -> (i32, i32) {
    %c0_i32 = arith.constant 0 : i32
    %c0_i32_0 = arith.constant 0 : i32
    return %arg0, %c0_i32 : i32, i32
  }
  func.func @transform_1(%arg0: i32) -> (i32, i32) {
    %c0_i32 = arith.constant 0 : i32
    %c0_i32_0 = arith.constant 0 : i32
    return %arg0, %c0_i32 : i32, i32
  }
  func.func @transform_2(%arg0: i32) -> (i32, i32) {
    %c0_i32 = arith.constant 0 : i32
    %c0_i32_0 = arith.constant 0 : i32
    return %arg0, %c0_i32 : i32, i32
  }
  func.func @transform_3(%arg0: i32) -> (i32, i32) {
    %c0_i32 = arith.constant 0 : i32
    %c0_i32_0 = arith.constant 0 : i32
    return %arg0, %c0_i32 : i32, i32
  }
  func.func @transform_4(%arg0: i32) -> (i32, i32) {
    %c0_i32 = arith.constant 0 : i32
    %c0_i32_0 = arith.constant 0 : i32
    return %arg0, %c0_i32 : i32, i32
  }
  func.func @transform_5(%arg0: i32) -> (i32, i32, i32) {
    %c0_i32 = arith.constant 0 : i32
    %c0_i32_0 = arith.constant 0 : i32
    %c0_i32_1 = arith.constant 0 : i32
    %c0_i32_2 = arith.constant 0 : i32
    return %c0_i32, %c0_i32_0, %c0_i32_1 : i32, i32, i32
  }
  func.func @transform_6(%arg0: i32) -> (i32, i32) {
    %c0_i32 = arith.constant 0 : i32
    %c0_i32_0 = arith.constant 0 : i32
    %c0_i32_1 = arith.constant 0 : i32
    return %c0_i32, %c0_i32_0 : i32, i32
  }
  func.func @transform_7(%arg0: i32) -> (i32, i32) {
    %c0_i32 = arith.constant 0 : i32
    %c0_i32_0 = arith.constant 0 : i32
    return %arg0, %c0_i32 : i32, i32
  }
}

</mosaic_0001>

<llo_original>
// kernel: instance_branch_forward.4
$region0: #{instance_branch_forward.4}
  #allocation0 [shape = 'u32[]', space=smem, size = 0x4, offset = 0x4, fixed_abs, tag = 'smem constant byte address 0x4 - core index']
  #allocation1 [shape = 'u32[72,128]{1,0:T(1,128)}', space=vmem, size = 0x9000, scoped, tag = 'internal scratch']
  %s0 = inlined_call_operand.vmem [shape: bf16[8,1024], index: 0, kind: input, shape index: {}]
  %s1 = inlined_call_operand.vmem [shape: bf16[1024,2048], index: 1, kind: input, shape index: {}]
  %s2 = inlined_call_operand.hbm [shape: f32[1,2048], index: 2, kind: input, shape index: {}]
  %s3 = inlined_call_operand.hbm [shape: f32[1,2048], index: 3, kind: input, shape index: {}]
  %s4 = inlined_call_operand.vmem [shape: f32[8,2048], index: 4, kind: output, shape index: {}]
  %s5 = sld [smem:[#allocation0]]
  $region88: #{instance_branch_forward.4} parent=0
    _
  %s7 = ssub.s32 1, %s5
  %s8 = scalar_select 0, %s7, %s5
  $region1: #{instance_branch_forward.4} parent=0
    #allocation2 [shape = 'u8[1048576]{0}', space=vmem, size = 0x100000, scoped, tag = 'input window, operand 1']
    #allocation3 [shape = 'u8[4096]{0}', space=vmem, size = 0x1000, scoped, tag = 'input window, operand 2']
    #allocation4 [shape = 's32[2]{0}', space=sflag, size = 0x8, scoped, tag = 'scoped memory for instance_branch_forward.4']
    #allocation5 [shape = 'u8[4096]{0}', space=vmem, size = 0x1000, scoped, tag = 'input window, operand 3']
    #allocation6 [shape = 's32[2]{0}', space=sflag, size = 0x8, scoped, tag = 'scoped memory for instance_branch_forward.4']
    %9 = vsyncpa [#allocation4], 0
    %s10 = scalar_lea.sflag [#allocation4], 1
    %11 = vsyncpa %s10, 0
    %12 = vsyncpa [#allocation6], 0
    %s13 = scalar_lea.sflag [#allocation6], 1
    %14 = vsyncpa %s13, 0
    loop: start=0, step=1, limit=10
    $region2: #{instance_branch_forward.4} parent=1 // loop_pre_header
      _
    $region3: #{instance_branch_forward.4} parent=1 // loop_header
      %s16 = sphi 0, %s20
      %p17 = scmp.ge.s32.totalorder %s16, 10
      %s23 = sphi 0, %s42
      %s24 = sphi 0, %s38
      %s25 = sphi 0, %s34
      %s26 = sphi 0, %s23
      %s27 = sphi 0, %s24
      %s28 = sphi 0, %s25
      %s29 = sphi 0, %s26
      %s30 = sphi 0, %s27
      %s31 = sphi 0, %s28
      %s47 = sphi 0, %s49
      %s50 = sphi 0, %s47
      %s51 = sphi 0, %s50
      %s67 = sphi 0, %s51
      %s75 = sphi 0, %s77
      %s78 = sphi 0, %s75
      %s79 = sphi 0, %s78
      %s95 = sphi 0, %s79
      %s101 = sphi 0, %s103
      %s104 = sphi 0, %s101
      %s105 = sphi 0, %s104
      %s121 = sphi 0, %s105
      %s127 = sphi 0, %s129
      %s130 = sphi 0, %s127
      %s131 = sphi 0, %s130
      %s147 = sphi 0, %s131
      %s155 = sphi 0, %s157
      %s158 = sphi 0, %s155
      %s159 = sphi 0, %s158
      %s175 = sphi 0, %s159
    $region4: #{instance_branch_forward.4} parent=1 // loop_header_branch
      %19 = sbr.rel (%p17) target = $region8
    $region5: #{instance_branch_forward.4} parent=1 // loop_body
      %s21 = ssub.s32 %s16, 1
      %s22 = ssub.s32 %s16, 2
      %s32 = sadd.s32 1, %s25
      %p33 = scmp.ge.s32.totalorder %s32, 2
      %s34 = scalar_select %p33, 0, %s32
      %s35 = sadd.s32 1, %s24
      %s36 = scalar_select %p33, %s35, %s24
      %p37 = scmp.ge.s32.totalorder %s36, 4
      %s38 = scalar_select %p37, 0, %s36
      %s39 = sadd.s32 1, %s23
      %s40 = scalar_select %p37, %s39, %s23
      %p41 = scmp.ge.s32.totalorder %s40, 1
      %s42 = scalar_select %p41, 0, %s40
      %s43 = ssub.s32 %s23, %s42
      %s44 = ssub.s32 %s25, %s34
      %s45 = sor.u32 %s43, %s44
      %p46 = scmp.eq.s32.totalorder %s45, 0
      %s48 = sadd.s32 %s47, 1
      %s49 = scalar_select %p46, %s47, %s48
      %p52 = pneg %p46
      %p53 = scmp.eq.s32.totalorder %s16, 7
      %p54 = por %p52, %p53
      %p55 = scmp.ne.s32.totalorder %s47, %s50
      %p56 = scmp.eq.s32.totalorder %s16, 0
      %p57 = por %p55, %p56
      %p58 = scmp.ne.s32.totalorder %s47, %s50
      %p59 = scmp.eq.s32.totalorder %s21, 7
      %p60 = por %p58, %p59
      %p61 = scmp.ne.s32.totalorder %s50, %s51
      %p62 = scmp.eq.s32.totalorder %s21, 0
      %p63 = por %p61, %p62
      %p64 = scmp.ne.s32.totalorder %s50, %s51
      %p65 = scmp.eq.s32.totalorder %s22, 7
      %p66 = por %p64, %p65
      %p68 = scmp.ne.s32.totalorder %s51, %s67
      %p69 = scmp.eq.s32.totalorder %s22, 0
      %p70 = por %p68, %p69
      %s71 = ssub.s32 %s25, %s34
      %s72 = ssub.s32 %s24, %s38
      %s73 = sor.u32 %s71, %s72
      %p74 = scmp.eq.s32.totalorder %s73, 0
      %s76 = sadd.s32 %s75, 1
      %s77 = scalar_select %p74, %s75, %s76
      %p80 = pneg %p74
      %p81 = scmp.eq.s32.totalorder %s16, 7
      %p82 = por %p80, %p81
      %p83 = scmp.ne.s32.totalorder %s75, %s78
      %p84 = scmp.eq.s32.totalorder %s16, 0
      %p85 = por %p83, %p84
      %p86 = scmp.ne.s32.totalorder %s75, %s78
      %p87 = scmp.eq.s32.totalorder %s21, 7
      %p88 = por %p86, %p87
      %p89 = scmp.ne.s32.totalorder %s78, %s79
      %p90 = scmp.eq.s32.totalorder %s21, 0
      %p91 = por %p89, %p90
      %p92 = scmp.ne.s32.totalorder %s78, %s79
      %p93 = scmp.eq.s32.totalorder %s22, 7
      %p94 = por %p92, %p93
      %p96 = scmp.ne.s32.totalorder %s79, %s95
      %p97 = scmp.eq.s32.totalorder %s22, 0
      %p98 = por %p96, %p97
      %s99 = ssub.s32 %s24, %s38
      %p100 = scmp.eq.s32.totalorder %s99, 0
      %s102 = sadd.s32 %s101, 1
      %s103 = scalar_select %p100, %s101, %s102
      %p106 = pneg %p100
      %p107 = scmp.eq.s32.totalorder %s16, 7
      %p108 = por %p106, %p107
      %p109 = scmp.ne.s32.totalorder %s101, %s104
      %p110 = scmp.eq.s32.totalorder %s16, 0
      %p111 = por %p109, %p110
      %p112 = scmp.ne.s32.totalorder %s101, %s104
      %p113 = scmp.eq.s32.totalorder %s21, 7
      %p114 = por %p112, %p113
      %p115 = scmp.ne.s32.totalorder %s104, %s105
      %p116 = scmp.eq.s32.totalorder %s21, 0
      %p117 = por %p115, %p116
      %p118 = scmp.ne.s32.totalorder %s104, %s105
      %p119 = scmp.eq.s32.totalorder %s22, 7
      %p120 = por %p118, %p119
      %p122 = scmp.ne.s32.totalorder %s105, %s121
      %p123 = scmp.eq.s32.totalorder %s22, 0
      %p124 = por %p122, %p123
      %s125 = ssub.s32 %s24, %s38
      %p126 = scmp.eq.s32.totalorder %s125, 0
      %s128 = sadd.s32 %s127, 1
      %s129 = scalar_select %p126, %s127, %s128
      %p132 = pneg %p126
      %p133 = scmp.eq.s32.totalorder %s16, 7
      %p134 = por %p132, %p133
      %p135 = scmp.ne.s32.totalorder %s127, %s130
      %p136 = scmp.eq.s32.totalorder %s16, 0
      %p137 = por %p135, %p136
      %p138 = scmp.ne.s32.totalorder %s127, %s130
      %p139 = scmp.eq.s32.totalorder %s21, 7
      %p140 = por %p138, %p139
      %p141 = scmp.ne.s32.totalorder %s130, %s131
      %p142 = scmp.eq.s32.totalorder %s21, 0
      %p143 = por %p141, %p142
      %p144 = scmp.ne.s32.totalorder %s130, %s131
      %p145 = scmp.eq.s32.totalorder %s22, 7
      %p146 = por %p144, %p145
      %p148 = scmp.ne.s32.totalorder %s131, %s147
      %p149 = scmp.eq.s32.totalorder %s22, 0
      %p150 = por %p148, %p149
      %s151 = ssub.s32 %s23, %s42
      %s152 = ssub.s32 %s24, %s38
      %s153 = sor.u32 %s151, %s152
      %p154 = scmp.eq.s32.totalorder %s153, 0
      %s156 = sadd.s32 %s155, 1
      %s157 = scalar_select %p154, %s155, %s156
      %p160 = pneg %p154
      %p161 = scmp.eq.s32.totalorder %s16, 7
      %p162 = por %p160, %p161
      %p163 = scmp.ne.s32.totalorder %s155, %s158
      %p164 = scmp.eq.s32.totalorder %s16, 0
      %p165 = por %p163, %p164
      %p166 = scmp.ne.s32.totalorder %s155, %s158
      %p167 = scmp.eq.s32.totalorder %s21, 7
      %p168 = por %p166, %p167
      %p169 = scmp.ne.s32.totalorder %s158, %s159
      %p170 = scmp.eq.s32.totalorder %s21, 0
      %p171 = por %p169, %p170
      %p172 = scmp.ne.s32.totalorder %s158, %s159
      %p173 = scmp.eq.s32.totalorder %s22, 7
      %p174 = por %p172, %p173
      %p176 = scmp.ne.s32.totalorder %s159, %s175
      %p177 = scmp.eq.s32.totalorder %s22, 0
      %p178 = por %p176, %p177
      %p179 = scmp.le.s32.totalorder 1, %s16
      %p180 = scmp.lt.s32.totalorder %s16, 9
      %p181 = pnand %p179, %p180
      %p182 = pneg %p181
      // Predicated region
      $region9: #{instance_branch_forward.4} parent=5 // pred_check
        _
      $region10: #{instance_branch_forward.4} parent=5 // pred_check_branch
        %184 = sbr.rel (%p181) target = $region12
      $region11: #{instance_branch_forward.4} parent=5 // pred_region
        %s185 = ssub.s32 %s16, 1
      $region12: #{instance_branch_forward.4} parent=5 // pred_fallthru
        _
      %p186 = scmp.lt.s32.totalorder %s16, 8
      // Predicated region
      $region13: #{instance_branch_forward.4} parent=5 // pred_check
        %p187 = pneg %p186
      $region14: #{instance_branch_forward.4} parent=5 // pred_check_branch
        %189 = sbr.rel (%p187) target = $region16
      $region15: #{instance_branch_forward.4} parent=5 // pred_region
        // Predicated region
        $region17: #{instance_branch_forward.4} parent=15 // pred_check
          %p190 = pneg %p57
        $region18: #{instance_branch_forward.4} parent=15 // pred_check_branch
          %192 = sbr.rel (%p190) target = $region20
        $region19: #{instance_branch_forward.4} parent=15 // pred_region
          %s193 = smul.u32 4, %s25
          %p194 = scmp.lt.s32.totalorder %s23, 0
          %s195 = scalar_select %p194, %s23, 0
          %p196 = scmp.lt.s32.totalorder %s193, 7
          %s197 = scalar_select %p196, %s193, 7
          %s198 = smul.addr %s195, 8
          %s199 = sadd.s32 %s197, %s198
          %s200 = smul.addr %s199, 4
          %s201 = scalar_lea.vmem %s0, %s200
          %s202 = smul.u32 4, %s25
        $region20: #{instance_branch_forward.4} parent=15 // pred_fallthru
          _
        // Predicated region
        $region21: #{instance_branch_forward.4} parent=15 // pred_check
          %p203 = pneg %p85
        $region22: #{instance_branch_forward.4} parent=15 // pred_check_branch
          %205 = sbr.rel (%p203) target = $region24
        $region23: #{instance_branch_forward.4} parent=15 // pred_region
          %s206 = sand.u32 %s75, 1
          %s207 = sand.u32 %s75, 1
          %s208 = smul.addr %s207, 1024
          %s209 = scalar_lea.vmem [#allocation2], %s208
          %s210 = smul.u32 64, %s25
          %s211 = smul.u32 4, %s24
          %s212 = smul.addr %s210, 16
          %s213 = sadd.s32 %s211, %s212
          %s214 = smul.addr %s213, 4
          %s215 = scalar_lea.vmem %s1, %s214
          // Predicated region
          $region25: #{instance_branch_forward.4} parent=23 // pred_check
            _
          $region26: #{instance_branch_forward.4} parent=23 // pred_check_branch
            %217 = sbr.rel (0) target = $region28
          $region27: #{instance_branch_forward.4} parent=23 // pred_region
            // Predicated region
            $region29: #{instance_branch_forward.4} parent=27 // pred_check
              _
            $region30: #{instance_branch_forward.4} parent=27 // pred_check_branch
              %219 = sbr.rel (0) target = $region32
            $region31: #{instance_branch_forward.4} parent=27 // pred_region
              loop: start=0, step=1, limit=1
              $region33: #{instance_branch_forward.4} parent=31 // loop_pre_header
                _
              $region34: #{instance_branch_forward.4} parent=31 // loop_header
                %s221 = sphi 0, %s225
                %p222 = scmp.ge.s32.totalorder %s221, 1
                %s226 = sphi %s215, %s215
                %s227 = sphi %s209, %s209
              $region35: #{instance_branch_forward.4} parent=31 // loop_header_branch
                %224 = sbr.rel (%p222) target = $region39
              $region36: #{instance_branch_forward.4} parent=31 // loop_body
                %v228 = vld [vmem:[%s226] sm:$0xff]
                %229 = vst [vmem:[%s227] sm:$0xff] %v228
                %v230 = vld [vmem:[%s226 + $0x8] sm:$0xff]
                %231 = vst [vmem:[%s227 + $0x8] sm:$0xff] %v230
                %v232 = vld [vmem:[%s226 + $0x40] sm:$0xff]
                %233 = vst [vmem:[%s227 + $0x10] sm:$0xff] %v232
                %v234 = vld [vmem:[%s226 + $0x48] sm:$0xff]
                %235 = vst [vmem:[%s227 + $0x18] sm:$0xff] %v234
                %v236 = vld [vmem:[%s226 + $0x80] sm:$0xff]
                %237 = vst [vmem:[%s227 + $0x20] sm:$0xff] %v236
                %v238 = vld [vmem:[%s226 + $0x88] sm:$0xff]
                %239 = vst [vmem:[%s227 + $0x28] sm:$0xff] %v238
                %v240 = vld [vmem:[%s226 + $0xc0] sm:$0xff]
                %241 = vst [vmem:[%s227 + $0x30] sm:$0xff] %v240
                %v242 = vld [vmem:[%s226 + $0xc8] sm:$0xff]
                %243 = vst [vmem:[%s227 + $0x38] sm:$0xff] %v242
                %v244 = vld [vmem:[%s226 + $0x100] sm:$0xff]
                %245 = vst [vmem:[%s227 + $0x40] sm:$0xff] %v244
                %v246 = vld [vmem:[%s226 + $0x108] sm:$0xff]
                %247 = vst [vmem:[%s227 + $0x48] sm:$0xff] %v246
                %v248 = vld [vmem:[%s226 + $0x140] sm:$0xff]
                %249 = vst [vmem:[%s227 + $0x50] sm:$0xff] %v248
                %v250 = vld [vmem:[%s226 + $0x148] sm:$0xff]
                %251 = vst [vmem:[%s227 + $0x58] sm:$0xff] %v250
                %v252 = vld [vmem:[%s226 + $0x180] sm:$0xff]
                %253 = vst [vmem:[%s227 + $0x60] sm:$0xff] %v252
                %v254 = vld [vmem:[%s226 + $0x188] sm:$0xff]
                %255 = vst [vmem:[%s227 + $0x68] sm:$0xff] %v254
                %v256 = vld [vmem:[%s226 + $0x1c0] sm:$0xff]
                %257 = vst [vmem:[%s227 + $0x70] sm:$0xff] %v256
                %v258 = vld [vmem:[%s226 + $0x1c8] sm:$0xff]
                %259 = vst [vmem:[%s227 + $0x78] sm:$0xff] %v258
                %v260 = vld [vmem:[%s226 + $0x200] sm:$0xff]
                %261 = vst [vmem:[%s227 + $0x80] sm:$0xff] %v260
                %v262 = vld [vmem:[%s226 + $0x208] sm:$0xff]
                %263 = vst [vmem:[%s227 + $0x88] sm:$0xff] %v262
                %v264 = vld [vmem:[%s226 + $0x240] sm:$0xff]
                %265 = vst [vmem:[%s227 + $0x90] sm:$0xff] %v264
                %v266 = vld [vmem:[%s226 + $0x248] sm:$0xff]
                %267 = vst [vmem:[%s227 + $0x98] sm:$0xff] %v266
                %v268 = vld [vmem:[%s226 + $0x280] sm:$0xff]
                %269 = vst [vmem:[%s227 + $0xa0] sm:$0xff] %v268
                %v270 = vld [vmem:[%s226 + $0x288] sm:$0xff]
                %271 = vst [vmem:[%s227 + $0xa8] sm:$0xff] %v270
                %v272 = vld [vmem:[%s226 + $0x2c0] sm:$0xff]
                %273 = vst [vmem:[%s227 + $0xb0] sm:$0xff] %v272
                %v274 = vld [vmem:[%s226 + $0x2c8] sm:$0xff]
                %275 = vst [vmem:[%s227 + $0xb8] sm:$0xff] %v274
                %v276 = vld [vmem:[%s226 + $0x300] sm:$0xff]
                %277 = vst [vmem:[%s227 + $0xc0] sm:$0xff] %v276
                %v278 = vld [vmem:[%s226 + $0x308] sm:$0xff]
                %279 = vst [vmem:[%s227 + $0xc8] sm:$0xff] %v278
                %v280 = vld [vmem:[%s226 + $0x340] sm:$0xff]
                %281 = vst [vmem:[%s227 + $0xd0] sm:$0xff] %v280
                %v282 = vld [vmem:[%s226 + $0x348] sm:$0xff]
                %283 = vst [vmem:[%s227 + $0xd8] sm:$0xff] %v282
                %v284 = vld [vmem:[%s226 + $0x380] sm:$0xff]
                %285 = vst [vmem:[%s227 + $0xe0] sm:$0xff] %v284
                %v286 = vld [vmem:[%s226 + $0x388] sm:$0xff]
                %287 = vst [vmem:[%s227 + $0xe8] sm:$0xff] %v286
                %v288 = vld [vmem:[%s226 + $0x3c0] sm:$0xff]
                %289 = vst [vmem:[%s227 + $0xf0] sm:$0xff] %v288
                %v290 = vld [vmem:[%s226 + $0x3c8] sm:$0xff]
                %291 = vst [vmem:[%s227 + $0xf8] sm:$0xff] %v290
                %v292 = vld [vmem:[%s226 + $0x400] sm:$0xff]
                %293 = vst [vmem:[%s227 + $0x100] sm:$0xff] %v292
                %v294 = vld [vmem:[%s226 + $0x408] sm:$0xff]
                %295 = vst [vmem:[%s227 + $0x108] sm:$0xff] %v294
                %v296 = vld [vmem:[%s226 + $0x440] sm:$0xff]
                %297 = vst [vmem:[%s227 + $0x110] sm:$0xff] %v296
                %v298 = vld [vmem:[%s226 + $0x448] sm:$0xff]
                %299 = vst [vmem:[%s227 + $0x118] sm:$0xff] %v298
                %v300 = vld [vmem:[%s226 + $0x480] sm:$0xff]
                %301 = vst [vmem:[%s227 + $0x120] sm:$0xff] %v300
                %v302 = vld [vmem:[%s226 + $0x488] sm:$0xff]
                %303 = vst [vmem:[%s227 + $0x128] sm:$0xff] %v302
                %v304 = vld [vmem:[%s226 + $0x4c0] sm:$0xff]
                %305 = vst [vmem:[%s227 + $0x130] sm:$0xff] %v304
                %v306 = vld [vmem:[%s226 + $0x4c8] sm:$0xff]
                %307 = vst [vmem:[%s227 + $0x138] sm:$0xff] %v306
                %v308 = vld [vmem:[%s226 + $0x500] sm:$0xff]
                %309 = vst [vmem:[%s227 + $0x140] sm:$0xff] %v308
                %v310 = vld [vmem:[%s226 + $0x508] sm:$0xff]
                %311 = vst [vmem:[%s227 + $0x148] sm:$0xff] %v310
                %v312 = vld [vmem:[%s226 + $0x540] sm:$0xff]
                %313 = vst [vmem:[%s227 + $0x150] sm:$0xff] %v312
                %v314 = vld [vmem:[%s226 + $0x548] sm:$0xff]
                %315 = vst [vmem:[%s227 + $0x158] sm:$0xff] %v314
                %v316 = vld [vmem:[%s226 + $0x580] sm:$0xff]
                %317 = vst [vmem:[%s227 + $0x160] sm:$0xff] %v316
                %v318 = vld [vmem:[%s226 + $0x588] sm:$0xff]
                %319 = vst [vmem:[%s227 + $0x168] sm:$0xff] %v318
                %v320 = vld [vmem:[%s226 + $0x5c0] sm:$0xff]
                %321 = vst [vmem:[%s227 + $0x170] sm:$0xff] %v320
                %v322 = vld [vmem:[%s226 + $0x5c8] sm:$0xff]
                %323 = vst [vmem:[%s227 + $0x178] sm:$0xff] %v322
                %v324 = vld [vmem:[%s226 + $0x600] sm:$0xff]
                %325 = vst [vmem:[%s227 + $0x180] sm:$0xff] %v324
                %v326 = vld [vmem:[%s226 + $0x608] sm:$0xff]
                %327 = vst [vmem:[%s227 + $0x188] sm:$0xff] %v326
                %v328 = vld [vmem:[%s226 + $0x640] sm:$0xff]
                %329 = vst [vmem:[%s227 + $0x190] sm:$0xff] %v328
                %v330 = vld [vmem:[%s226 + $0x648] sm:$0xff]
                %331 = vst [vmem:[%s227 + $0x198] sm:$0xff] %v330
                %v332 = vld [vmem:[%s226 + $0x680] sm:$0xff]
                %333 = vst [vmem:[%s227 + $0x1a0] sm:$0xff] %v332
                %v334 = vld [vmem:[%s226 + $0x688] sm:$0xff]
                %335 = vst [vmem:[%s227 + $0x1a8] sm:$0xff] %v334
                %v336 = vld [vmem:[%s226 + $0x6c0] sm:$0xff]
                %337 = vst [vmem:[%s227 + $0x1b0] sm:$0xff] %v336
                %v338 = vld [vmem:[%s226 + $0x6c8] sm:$0xff]
                %339 = vst [vmem:[%s227 + $0x1b8] sm:$0xff] %v338
                %v340 = vld [vmem:[%s226 + $0x700] sm:$0xff]
                %341 = vst [vmem:[%s227 + $0x1c0] sm:$0xff] %v340
                %v342 = vld [vmem:[%s226 + $0x708] sm:$0xff]
                %343 = vst [vmem:[%s227 + $0x1c8] sm:$0xff] %v342
                %v344 = vld [vmem:[%s226 + $0x740] sm:$0xff]
                %345 = vst [vmem:[%s227 + $0x1d0] sm:$0xff] %v344
                %v346 = vld [vmem:[%s226 + $0x748] sm:$0xff]
                %347 = vst [vmem:[%s227 + $0x1d8] sm:$0xff] %v346
                %v348 = vld [vmem:[%s226 + $0x780] sm:$0xff]
                %349 = vst [vmem:[%s227 + $0x1e0] sm:$0xff] %v348
                %v350 = vld [vmem:[%s226 + $0x788] sm:$0xff]
                %351 = vst [vmem:[%s227 + $0x1e8] sm:$0xff] %v350
                %v352 = vld [vmem:[%s226 + $0x7c0] sm:$0xff]
                %353 = vst [vmem:[%s227 + $0x1f0] sm:$0xff] %v352
                %v354 = vld [vmem:[%s226 + $0x7c8] sm:$0xff]
                %355 = vst [vmem:[%s227 + $0x1f8] sm:$0xff] %v354
                %v356 = vld [vmem:[%s226 + $0x800] sm:$0xff]
                %357 = vst [vmem:[%s227 + $0x200] sm:$0xff] %v356
                %v358 = vld [vmem:[%s226 + $0x808] sm:$0xff]
                %359 = vst [vmem:[%s227 + $0x208] sm:$0xff] %v358
                %v360 = vld [vmem:[%s226 + $0x840] sm:$0xff]
                %361 = vst [vmem:[%s227 + $0x210] sm:$0xff] %v360
                %v362 = vld [vmem:[%s226 + $0x848] sm:$0xff]
                %363 = vst [vmem:[%s227 + $0x218] sm:$0xff] %v362
                %v364 = vld [vmem:[%s226 + $0x880] sm:$0xff]
                %365 = vst [vmem:[%s227 + $0x220] sm:$0xff] %v364
                %v366 = vld [vmem:[%s226 + $0x888] sm:$0xff]
                %367 = vst [vmem:[%s227 + $0x228] sm:$0xff] %v366
                %v368 = vld [vmem:[%s226 + $0x8c0] sm:$0xff]
                %369 = vst [vmem:[%s227 + $0x230] sm:$0xff] %v368
                %v370 = vld [vmem:[%s226 + $0x8c8] sm:$0xff]
                %371 = vst [vmem:[%s227 + $0x238] sm:$0xff] %v370
                %v372 = vld [vmem:[%s226 + $0x900] sm:$0xff]
                %373 = vst [vmem:[%s227 + $0x240] sm:$0xff] %v372
                %v374 = vld [vmem:[%s226 + $0x908] sm:$0xff]
                %375 = vst [vmem:[%s227 + $0x248] sm:$0xff] %v374
                %v376 = vld [vmem:[%s226 + $0x940] sm:$0xff]
                %377 = vst [vmem:[%s227 + $0x250] sm:$0xff] %v376
                %v378 = vld [vmem:[%s226 + $0x948] sm:$0xff]
                %379 = vst [vmem:[%s227 + $0x258] sm:$0xff] %v378
                %v380 = vld [vmem:[%s226 + $0x980] sm:$0xff]
                %381 = vst [vmem:[%s227 + $0x260] sm:$0xff] %v380
                %v382 = vld [vmem:[%s226 + $0x988] sm:$0xff]
                %383 = vst [vmem:[%s227 + $0x268] sm:$0xff] %v382
                %v384 = vld [vmem:[%s226 + $0x9c0] sm:$0xff]
                %385 = vst [vmem:[%s227 + $0x270] sm:$0xff] %v384
                %v386 = vld [vmem:[%s226 + $0x9c8] sm:$0xff]
                %387 = vst [vmem:[%s227 + $0x278] sm:$0xff] %v386
                %v388 = vld [vmem:[%s226 + $0xa00] sm:$0xff]
                %389 = vst [vmem:[%s227 + $0x280] sm:$0xff] %v388
                %v390 = vld [vmem:[%s226 + $0xa08] sm:$0xff]
                %391 = vst [vmem:[%s227 + $0x288] sm:$0xff] %v390
                %v392 = vld [vmem:[%s226 + $0xa40] sm:$0xff]
                %393 = vst [vmem:[%s227 + $0x290] sm:$0xff] %v392
                %v394 = vld [vmem:[%s226 + $0xa48] sm:$0xff]
                %395 = vst [vmem:[%s227 + $0x298] sm:$0xff] %v394
                %v396 = vld [vmem:[%s226 + $0xa80] sm:$0xff]
                %397 = vst [vmem:[%s227 + $0x2a0] sm:$0xff] %v396
                %v398 = vld [vmem:[%s226 + $0xa88] sm:$0xff]
                %399 = vst [vmem:[%s227 + $0x2a8] sm:$0xff] %v398
                %v400 = vld [vmem:[%s226 + $0xac0] sm:$0xff]
                %401 = vst [vmem:[%s227 + $0x2b0] sm:$0xff] %v400
                %v402 = vld [vmem:[%s226 + $0xac8] sm:$0xff]
                %403 = vst [vmem:[%s227 + $0x2b8] sm:$0xff] %v402
                %v404 = vld [vmem:[%s226 + $0xb00] sm:$0xff]
                %405 = vst [vmem:[%s227 + $0x2c0] sm:$0xff] %v404
                %v406 = vld [vmem:[%s226 + $0xb08] sm:$0xff]
                %407 = vst [vmem:[%s227 + $0x2c8] sm:$0xff] %v406
                %v408 = vld [vmem:[%s226 + $0xb40] sm:$0xff]
                %409 = vst [vmem:[%s227 + $0x2d0] sm:$0xff] %v408
                %v410 = vld [vmem:[%s226 + $0xb48] sm:$0xff]
                %411 = vst [vmem:[%s227 + $0x2d8] sm:$0xff] %v410
                %v412 = vld [vmem:[%s226 + $0xb80] sm:$0xff]
                %413 = vst [vmem:[%s227 + $0x2e0] sm:$0xff] %v412
                %v414 = vld [vmem:[%s226 + $0xb88] sm:$0xff]
                %415 = vst [vmem:[%s227 + $0x2e8] sm:$0xff] %v414
                %v416 = vld [vmem:[%s226 + $0xbc0] sm:$0xff]
                %417 = vst [vmem:[%s227 + $0x2f0] sm:$0xff] %v416
                %v418 = vld [vmem:[%s226 + $0xbc8] sm:$0xff]
                %419 = vst [vmem:[%s227 + $0x2f8] sm:$0xff] %v418
                %v420 = vld [vmem:[%s226 + $0xc00] sm:$0xff]
                %421 = vst [vmem:[%s227 + $0x300] sm:$0xff] %v420
                %v422 = vld [vmem:[%s226 + $0xc08] sm:$0xff]
                %423 = vst [vmem:[%s227 + $0x308] sm:$0xff] %v422
                %v424 = vld [vmem:[%s226 + $0xc40] sm:$0xff]
                %425 = vst [vmem:[%s227 + $0x310] sm:$0xff] %v424
                %v426 = vld [vmem:[%s226 + $0xc48] sm:$0xff]
                %427 = vst [vmem:[%s227 + $0x318] sm:$0xff] %v426
                %v428 = vld [vmem:[%s226 + $0xc80] sm:$0xff]
                %429 = vst [vmem:[%s227 + $0x320] sm:$0xff] %v428
                %v430 = vld [vmem:[%s226 + $0xc88] sm:$0xff]
                %431 = vst [vmem:[%s227 + $0x328] sm:$0xff] %v430
                %v432 = vld [vmem:[%s226 + $0xcc0] sm:$0xff]
                %433 = vst [vmem:[%s227 + $0x330] sm:$0xff] %v432
                %v434 = vld [vmem:[%s226 + $0xcc8] sm:$0xff]
                %435 = vst [vmem:[%s227 + $0x338] sm:$0xff] %v434
                %v436 = vld [vmem:[%s226 + $0xd00] sm:$0xff]
                %437 = vst [vmem:[%s227 + $0x340] sm:$0xff] %v436
                %v438 = vld [vmem:[%s226 + $0xd08] sm:$0xff]
                %439 = vst [vmem:[%s227 + $0x348] sm:$0xff] %v438
                %v440 = vld [vmem:[%s226 + $0xd40] sm:$0xff]
                %441 = vst [vmem:[%s227 + $0x350] sm:$0xff] %v440
                %v442 = vld [vmem:[%s226 + $0xd48] sm:$0xff]
                %443 = vst [vmem:[%s227 + $0x358] sm:$0xff] %v442
                %v444 = vld [vmem:[%s226 + $0xd80] sm:$0xff]
                %445 = vst [vmem:[%s227 + $0x360] sm:$0xff] %v444
                %v446 = vld [vmem:[%s226 + $0xd88] sm:$0xff]
                %447 = vst [vmem:[%s227 + $0x368] sm:$0xff] %v446
                %v448 = vld [vmem:[%s226 + $0xdc0] sm:$0xff]
                %449 = vst [vmem:[%s227 + $0x370] sm:$0xff] %v448
                %v450 = vld [vmem:[%s226 + $0xdc8] sm:$0xff]
                %451 = vst [vmem:[%s227 + $0x378] sm:$0xff] %v450
                %v452 = vld [vmem:[%s226 + $0xe00] sm:$0xff]
                %453 = vst [vmem:[%s227 + $0x380] sm:$0xff] %v452
                %v454 = vld [vmem:[%s226 + $0xe08] sm:$0xff]
                %455 = vst [vmem:[%s227 + $0x388] sm:$0xff] %v454
                %v456 = vld [vmem:[%s226 + $0xe40] sm:$0xff]
                %457 = vst [vmem:[%s227 + $0x390] sm:$0xff] %v456
                %v458 = vld [vmem:[%s226 + $0xe48] sm:$0xff]
                %459 = vst [vmem:[%s227 + $0x398] sm:$0xff] %v458
                %v460 = vld [vmem:[%s226 + $0xe80] sm:$0xff]
                %461 = vst [vmem:[%s227 + $0x3a0] sm:$0xff] %v460
                %v462 = vld [vmem:[%s226 + $0xe88] sm:$0xff]
                %463 = vst [vmem:[%s227 + $0x3a8] sm:$0xff] %v462
                %v464 = vld [vmem:[%s226 + $0xec0] sm:$0xff]
                %465 = vst [vmem:[%s227 + $0x3b0] sm:$0xff] %v464
                %v466 = vld [vmem:[%s226 + $0xec8] sm:$0xff]
                %467 = vst [vmem:[%s227 + $0x3b8] sm:$0xff] %v466
                %v468 = vld [vmem:[%s226 + $0xf00] sm:$0xff]
                %469 = vst [vmem:[%s227 + $0x3c0] sm:$0xff] %v468
                %v470 = vld [vmem:[%s226 + $0xf08] sm:$0xff]
                %471 = vst [vmem:[%s227 + $0x3c8] sm:$0xff] %v470
                %v472 = vld [vmem:[%s226 + $0xf40] sm:$0xff]
                %473 = vst [vmem:[%s227 + $0x3d0] sm:$0xff] %v472
                %v474 = vld [vmem:[%s226 + $0xf48] sm:$0xff]
                %475 = vst [vmem:[%s227 + $0x3d8] sm:$0xff] %v474
                %v476 = vld [vmem:[%s226 + $0xf80] sm:$0xff]
                %477 = vst [vmem:[%s227 + $0x3e0] sm:$0xff] %v476
                %v478 = vld [vmem:[%s226 + $0xf88] sm:$0xff]
                %479 = vst [vmem:[%s227 + $0x3e8] sm:$0xff] %v478
                %v480 = vld [vmem:[%s226 + $0xfc0] sm:$0xff]
                %481 = vst [vmem:[%s227 + $0x3f0] sm:$0xff] %v480
                %v482 = vld [vmem:[%s226 + $0xfc8] sm:$0xff]
                %483 = vst [vmem:[%s227 + $0x3f8] sm:$0xff] %v482
              $region37: #{instance_branch_forward.4} parent=31 // loop_footer
                %s225 = sadd.s32 1, %s221
              $region38: #{instance_branch_forward.4} parent=31 // loop_footer_branch
                %220 = sbr.rel target = $region34
              $region39: #{instance_branch_forward.4} parent=31 // loop_exit
                _
            $region32: #{instance_branch_forward.4} parent=27 // pred_fallthru
              _
            // Predicated region
            $region40: #{instance_branch_forward.4} parent=27 // pred_check
              _
            $region41: #{instance_branch_forward.4} parent=27 // pred_check_branch
              %485 = sbr.rel target = $region43
            $region42: #{instance_branch_forward.4} parent=27 // pred_region
              _
            $region43: #{instance_branch_forward.4} parent=27 // pred_fallthru
              _
          $region28: #{instance_branch_forward.4} parent=23 // pred_fallthru
            _
          %486 = vnop
        $region24: #{instance_branch_forward.4} parent=15 // pred_fallthru
          _
        // Predicated region
        $region44: #{instance_branch_forward.4} parent=15 // pred_check
          %p487 = pneg %p111
        $region45: #{instance_branch_forward.4} parent=15 // pred_check_branch
          %489 = sbr.rel (%p487) target = $region47
        $region46: #{instance_branch_forward.4} parent=15 // pred_region
          %s490 = sand.u32 %s101, 1
          %s491 = scalar_lea.sflag [#allocation4], %s490
          %s492 = sand.u32 %s101, 1
          %s493 = smul.addr %s492, 4
          %s494 = scalar_lea.vmem [#allocation3], %s493
          %s495 = smul.u32 4, %s24
          %497 = vsyncadd %s491, 0
          %s498 = scalar_lea.hbm %s2, %s495
          %s500 = sshll.u32 %s498, 4
          %s501 = int_to_ptr.hbm [resolvable:$true] %s500
          %s502 = sshll.u32 %s494, 4
          %s503 = int_to_ptr.vmem [resolvable:$true] %s502
          %505 = dma.hbm_to_vmem [thread:$0]  %s501, 64, %s503, %s491
        $region47: #{instance_branch_forward.4} parent=15 // pred_fallthru
          _
        // Predicated region
        $region48: #{instance_branch_forward.4} parent=15 // pred_check
          %p506 = pneg %p137
        $region49: #{instance_branch_forward.4} parent=15 // pred_check_branch
          %508 = sbr.rel (%p506) target = $region51
        $region50: #{instance_branch_forward.4} parent=15 // pred_region
          %s509 = sand.u32 %s127, 1
          %s510 = scalar_lea.sflag [#allocation6], %s509
          %s511 = sand.u32 %s127, 1
          %s512 = smul.addr %s511, 4
          %s513 = scalar_lea.vmem [#allocation5], %s512
          %s514 = smul.u32 4, %s24
          %516 = vsyncadd %s510, 0
          %s517 = scalar_lea.hbm %s3, %s514
          %s519 = sshll.u32 %s517, 4
          %s520 = int_to_ptr.hbm [resolvable:$true] %s519
          %s521 = sshll.u32 %s513, 4
          %s522 = int_to_ptr.vmem [resolvable:$true] %s521
          %524 = dma.hbm_to_vmem [thread:$0]  %s520, 64, %s522, %s510
        $region51: #{instance_branch_forward.4} parent=15 // pred_fallthru
          _
      $region16: #{instance_branch_forward.4} parent=5 // pred_fallthru
        _
      %p525 = scmp.le.s32.totalorder 1, %s16
      %p526 = scmp.lt.s32.totalorder %s16, 9
      %p527 = pnand %p525, %p526
      %p528 = pneg %p527
      // Predicated region
      $region52: #{instance_branch_forward.4} parent=5 // pred_check
        _
      $region53: #{instance_branch_forward.4} parent=5 // pred_check_branch
        %530 = sbr.rel (%p527) target = $region55
      $region54: #{instance_branch_forward.4} parent=5 // pred_region
        %s531 = ssub.s32 %s16, 1
        %s532 = sand.u32 %s78, 1
        %s533 = sand.u32 %s78, 1
        %s534 = smul.addr %s533, 1024
        %s535 = scalar_lea.vmem [#allocation2], %s534
        // Predicated region
        $region56: #{instance_branch_forward.4} parent=54 // pred_check
          %p536 = pneg %p91
        $region57: #{instance_branch_forward.4} parent=54 // pred_check_branch
          %538 = sbr.rel (%p536) target = $region59
        $region58: #{instance_branch_forward.4} parent=54 // pred_region
          _
        $region59: #{instance_branch_forward.4} parent=54 // pred_fallthru
          _
        %s539 = sand.u32 %s104, 1
        %s540 = scalar_lea.sflag [#allocation4], %s539
        %s541 = sand.u32 %s104, 1
        %s542 = smul.addr %s541, 4
        %s543 = scalar_lea.vmem [#allocation3], %s542
        // Predicated region
        $region60: #{instance_branch_forward.4} parent=54 // pred_check
          %p544 = pneg %p117
        $region61: #{instance_branch_forward.4} parent=54 // pred_check_branch
          %546 = sbr.rel (%p544) target = $region63
        $region62: #{instance_branch_forward.4} parent=54 // pred_region
          %548 = dma.done %s540, 64
        $region63: #{instance_branch_forward.4} parent=54 // pred_fallthru
          _
        %s549 = sand.u32 %s130, 1
        %s550 = scalar_lea.sflag [#allocation6], %s549
        %s551 = sand.u32 %s130, 1
        %s552 = smul.addr %s551, 4
        %s553 = scalar_lea.vmem [#allocation5], %s552
        // Predicated region
        $region64: #{instance_branch_forward.4} parent=54 // pred_check
          %p554 = pneg %p143
        $region65: #{instance_branch_forward.4} parent=54 // pred_check_branch
          %556 = sbr.rel (%p554) target = $region67
        $region66: #{instance_branch_forward.4} parent=54 // pred_region
          %558 = dma.done %s550, 64
        $region67: #{instance_branch_forward.4} parent=54 // pred_fallthru
          _
        %s559 = smul.u32 4, %s28
        %p560 = scmp.lt.s32.totalorder %s26, 0
        %s561 = scalar_select %p560, %s26, 0
        %p562 = scmp.lt.s32.totalorder %s559, 7
        %s563 = scalar_select %p562, %s559, 7
        %s564 = smul.addr %s561, 8
        %s565 = sadd.s32 %s563, %s564
        %s566 = smul.addr %s565, 4
        %s567 = scalar_lea.vmem %s0, %s566
        %p568 = pneg %p63
        %p569 = pneg %p60
        %s570 = sand.u32 %s78, 1
        %s571 = sand.u32 %s78, 1
        %s572 = smul.addr %s571, 1024
        %s573 = scalar_lea.vmem [#allocation2], %s572
        %p574 = pneg %p91
        %p575 = pneg %p88
        %s576 = sand.u32 %s104, 1
        %s577 = scalar_lea.sflag [#allocation4], %s576
        %s578 = sand.u32 %s104, 1
        %s579 = smul.addr %s578, 4
        %s580 = scalar_lea.vmem [#allocation3], %s579
        %p581 = pneg %p117
        %p582 = pneg %p114
        %s583 = sand.u32 %s130, 1
        %s584 = scalar_lea.sflag [#allocation6], %s583
        %s585 = sand.u32 %s130, 1
        %s586 = smul.addr %s585, 4
        %s587 = scalar_lea.vmem [#allocation5], %s586
        %p588 = pneg %p143
        %p589 = pneg %p140
        %p590 = pneg %p171
        %p591 = pneg %p168
        %s592 = smul.u32 4, %s27
        %p593 = scmp.lt.s32.totalorder %s26, 0
        %s594 = scalar_select %p593, %s26, 0
        %p595 = scmp.lt.s32.totalorder %s592, 15
        %s596 = scalar_select %p595, %s592, 15
        %s597 = smul.addr %s594, 16
        %s598 = sadd.s32 %s596, %s597
        %s599 = smul.addr %s598, 8
        %s600 = scalar_lea.vmem %s4, %s599
        %s601 = smul.u32 4, %s28
        %p602 = scmp.lt.s32.totalorder %s26, 0
        %s603 = scalar_select %p602, %s26, 0
        %p604 = scmp.lt.s32.totalorder %s601, 7
        %s605 = scalar_select %p604, %s601, 7
        %s606 = smul.addr %s603, 8
        %s607 = sadd.s32 %s605, %s606
        %s608 = smul.addr %s607, 4
        %s609 = scalar_lea.vmem %s0, %s608
        %s610 = smul.u32 4, %s28
        %s611 = smul.u32 64, %s28
        %s612 = smul.u32 4, %s27
        %s613 = smul.u32 4, %s27
        %s614 = smul.u32 4, %s27
        %s615 = smul.u32 4, %s27
        %p616 = scmp.lt.s32.totalorder %s26, 0
        %s617 = scalar_select %p616, %s26, 0
        %p618 = scmp.lt.s32.totalorder %s615, 15
        %s619 = scalar_select %p618, %s615, 15
        %s620 = smul.addr %s617, 16
        %s621 = sadd.s32 %s619, %s620
        %s622 = smul.addr %s621, 8
        %s623 = scalar_lea.vmem %s4, %s622
        %s624 = smul.u32 4, %s27
        %p625 = scmp.eq.s32.totalorder %s28, 0
        // Predicated region
        $region68: #{instance_branch_forward.4} parent=54 // pred_check
          %p626 = pneg %p625
        $region69: #{instance_branch_forward.4} parent=54 // pred_check_branch
          %628 = sbr.rel (%p626) target = $region71
        $region70: #{instance_branch_forward.4} parent=54 // pred_region
          %629 = vst [vmem:[%s623] sm:$0xff] 0.0
          %630 = vst [vmem:[%s623 + $0x8] sm:$0xff] 0.0
          %631 = vst [vmem:[%s623 + $0x10] sm:$0xff] 0.0
          %632 = vst [vmem:[%s623 + $0x18] sm:$0xff] 0.0
        $region71: #{instance_branch_forward.4} parent=54 // pred_fallthru
          _
        %v633 = vld [vmem:[%s623] sm:$0xff]
        %v634 = vld [vmem:[%s623 + $0x8] sm:$0xff]
        %v635 = vld [vmem:[%s623 + $0x10] sm:$0xff]
        %v636 = vld [vmem:[%s623 + $0x18] sm:$0xff]
        %v637 = vld [vmem:[%s609] sm:$0xff]
        %v638 = vld [vmem:[%s609 + $0x8] sm:$0xff]
        %v639 = vld [vmem:[%s535] sm:$0xff]
        %v640 = vld [vmem:[%s535 + $0x8] sm:$0xff]
        %v641 = vld [vmem:[%s535 + $0x10] sm:$0xff]
        %v642 = vld [vmem:[%s535 + $0x18] sm:$0xff]
        %v643 = vld [vmem:[%s535 + $0x20] sm:$0xff]
        %v644 = vld [vmem:[%s535 + $0x28] sm:$0xff]
        %v645 = vld [vmem:[%s535 + $0x30] sm:$0xff]
        %v646 = vld [vmem:[%s535 + $0x38] sm:$0xff]
        %v647 = vld [vmem:[%s535 + $0x40] sm:$0xff]
        %v648 = vld [vmem:[%s535 + $0x48] sm:$0xff]
        %v649 = vld [vmem:[%s535 + $0x50] sm:$0xff]
        %v650 = vld [vmem:[%s535 + $0x58] sm:$0xff]
        %v651 = vld [vmem:[%s535 + $0x60] sm:$0xff]
        %v652 = vld [vmem:[%s535 + $0x68] sm:$0xff]
        %v653 = vld [vmem:[%s535 + $0x70] sm:$0xff]
        %v654 = vld [vmem:[%s535 + $0x78] sm:$0xff]
        %v655 = vld [vmem:[%s535 + $0x80] sm:$0xff]
        %v656 = vld [vmem:[%s535 + $0x88] sm:$0xff]
        %v657 = vld [vmem:[%s535 + $0x90] sm:$0xff]
        %v658 = vld [vmem:[%s535 + $0x98] sm:$0xff]
        %v659 = vld [vmem:[%s535 + $0xa0] sm:$0xff]
        %v660 = vld [vmem:[%s535 + $0xa8] sm:$0xff]
        %v661 = vld [vmem:[%s535 + $0xb0] sm:$0xff]
        %v662 = vld [vmem:[%s535 + $0xb8] sm:$0xff]
        %v663 = vld [vmem:[%s535 + $0xc0] sm:$0xff]
        %v664 = vld [vmem:[%s535 + $0xc8] sm:$0xff]
        %v665 = vld [vmem:[%s535 + $0xd0] sm:$0xff]
        %v666 = vld [vmem:[%s535 + $0xd8] sm:$0xff]
        %v667 = vld [vmem:[%s535 + $0xe0] sm:$0xff]
        %v668 = vld [vmem:[%s535 + $0xe8] sm:$0xff]
        %v669 = vld [vmem:[%s535 + $0xf0] sm:$0xff]
        %v670 = vld [vmem:[%s535 + $0xf8] sm:$0xff]
        %v671 = vld [vmem:[%s535 + $0x100] sm:$0xff]
        %v672 = vld [vmem:[%s535 + $0x108] sm:$0xff]
        %v673 = vld [vmem:[%s535 + $0x110] sm:$0xff]
        %v674 = vld [vmem:[%s535 + $0x118] sm:$0xff]
        %v675 = vld [vmem:[%s535 + $0x120] sm:$0xff]
        %v676 = vld [vmem:[%s535 + $0x128] sm:$0xff]
        %v677 = vld [vmem:[%s535 + $0x130] sm:$0xff]
        %v678 = vld [vmem:[%s535 + $0x138] sm:$0xff]
        %v679 = vld [vmem:[%s535 + $0x140] sm:$0xff]
        %v680 = vld [vmem:[%s535 + $0x148] sm:$0xff]
        %v681 = vld [vmem:[%s535 + $0x150] sm:$0xff]
        %v682 = vld [vmem:[%s535 + $0x158] sm:$0xff]
        %v683 = vld [vmem:[%s535 + $0x160] sm:$0xff]
        %v684 = vld [vmem:[%s535 + $0x168] sm:$0xff]
        %v685 = vld [vmem:[%s535 + $0x170] sm:$0xff]
        %v686 = vld [vmem:[%s535 + $0x178] sm:$0xff]
        %v687 = vld [vmem:[%s535 + $0x180] sm:$0xff]
        %v688 = vld [vmem:[%s535 + $0x188] sm:$0xff]
        %v689 = vld [vmem:[%s535 + $0x190] sm:$0xff]
        %v690 = vld [vmem:[%s535 + $0x198] sm:$0xff]
        %v691 = vld [vmem:[%s535 + $0x1a0] sm:$0xff]
        %v692 = vld [vmem:[%s535 + $0x1a8] sm:$0xff]
        %v693 = vld [vmem:[%s535 + $0x1b0] sm:$0xff]
        %v694 = vld [vmem:[%s535 + $0x1b8] sm:$0xff]
        %v695 = vld [vmem:[%s535 + $0x1c0] sm:$0xff]
        %v696 = vld [vmem:[%s535 + $0x1c8] sm:$0xff]
        %v697 = vld [vmem:[%s535 + $0x1d0] sm:$0xff]
        %v698 = vld [vmem:[%s535 + $0x1d8] sm:$0xff]
        %v699 = vld [vmem:[%s535 + $0x1e0] sm:$0xff]
        %v700 = vld [vmem:[%s535 + $0x1e8] sm:$0xff]
        %v701 = vld [vmem:[%s535 + $0x1f0] sm:$0xff]
        %v702 = vld [vmem:[%s535 + $0x1f8] sm:$0xff]
        %v703 = vld [vmem:[%s535 + $0x200] sm:$0xff]
        %v704 = vld [vmem:[%s535 + $0x208] sm:$0xff]
        %v705 = vld [vmem:[%s535 + $0x210] sm:$0xff]
        %v706 = vld [vmem:[%s535 + $0x218] sm:$0xff]
        %v707 = vld [vmem:[%s535 + $0x220] sm:$0xff]
        %v708 = vld [vmem:[%s535 + $0x228] sm:$0xff]
        %v709 = vld [vmem:[%s535 + $0x230] sm:$0xff]
        %v710 = vld [vmem:[%s535 + $0x238] sm:$0xff]
        %v711 = vld [vmem:[%s535 + $0x240] sm:$0xff]
        %v712 = vld [vmem:[%s535 + $0x248] sm:$0xff]
        %v713 = vld [vmem:[%s535 + $0x250] sm:$0xff]
        %v714 = vld [vmem:[%s535 + $0x258] sm:$0xff]
        %v715 = vld [vmem:[%s535 + $0x260] sm:$0xff]
        %v716 = vld [vmem:[%s535 + $0x268] sm:$0xff]
        %v717 = vld [vmem:[%s535 + $0x270] sm:$0xff]
        %v718 = vld [vmem:[%s535 + $0x278] sm:$0xff]
        %v719 = vld [vmem:[%s535 + $0x280] sm:$0xff]
        %v720 = vld [vmem:[%s535 + $0x288] sm:$0xff]
        %v721 = vld [vmem:[%s535 + $0x290] sm:$0xff]
        %v722 = vld [vmem:[%s535 + $0x298] sm:$0xff]
        %v723 = vld [vmem:[%s535 + $0x2a0] sm:$0xff]
        %v724 = vld [vmem:[%s535 + $0x2a8] sm:$0xff]
        %v725 = vld [vmem:[%s535 + $0x2b0] sm:$0xff]
        %v726 = vld [vmem:[%s535 + $0x2b8] sm:$0xff]
        %v727 = vld [vmem:[%s535 + $0x2c0] sm:$0xff]
        %v728 = vld [vmem:[%s535 + $0x2c8] sm:$0xff]
        %v729 = vld [vmem:[%s535 + $0x2d0] sm:$0xff]
        %v730 = vld [vmem:[%s535 + $0x2d8] sm:$0xff]
        %v731 = vld [vmem:[%s535 + $0x2e0] sm:$0xff]
        %v732 = vld [vmem:[%s535 + $0x2e8] sm:$0xff]
        %v733 = vld [vmem:[%s535 + $0x2f0] sm:$0xff]
        %v734 = vld [vmem:[%s535 + $0x2f8] sm:$0xff]
        %v735 = vld [vmem:[%s535 + $0x300] sm:$0xff]
        %v736 = vld [vmem:[%s535 + $0x308] sm:$0xff]
        %v737 = vld [vmem:[%s535 + $0x310] sm:$0xff]
        %v738 = vld [vmem:[%s535 + $0x318] sm:$0xff]
        %v739 = vld [vmem:[%s535 + $0x320] sm:$0xff]
        %v740 = vld [vmem:[%s535 + $0x328] sm:$0xff]
        %v741 = vld [vmem:[%s535 + $0x330] sm:$0xff]
        %v742 = vld [vmem:[%s535 + $0x338] sm:$0xff]
        %v743 = vld [vmem:[%s535 + $0x340] sm:$0xff]
        %v744 = vld [vmem:[%s535 + $0x348] sm:$0xff]
        %v745 = vld [vmem:[%s535 + $0x350] sm:$0xff]
        %v746 = vld [vmem:[%s535 + $0x358] sm:$0xff]
        %v747 = vld [vmem:[%s535 + $0x360] sm:$0xff]
        %v748 = vld [vmem:[%s535 + $0x368] sm:$0xff]
        %v749 = vld [vmem:[%s535 + $0x370] sm:$0xff]
        %v750 = vld [vmem:[%s535 + $0x378] sm:$0xff]
        %v751 = vld [vmem:[%s535 + $0x380] sm:$0xff]
        %v752 = vld [vmem:[%s535 + $0x388] sm:$0xff]
        %v753 = vld [vmem:[%s535 + $0x390] sm:$0xff]
        %v754 = vld [vmem:[%s535 + $0x398] sm:$0xff]
        %v755 = vld [vmem:[%s535 + $0x3a0] sm:$0xff]
        %v756 = vld [vmem:[%s535 + $0x3a8] sm:$0xff]
        %v757 = vld [vmem:[%s535 + $0x3b0] sm:$0xff]
        %v758 = vld [vmem:[%s535 + $0x3b8] sm:$0xff]
        %v759 = vld [vmem:[%s535 + $0x3c0] sm:$0xff]
        %v760 = vld [vmem:[%s535 + $0x3c8] sm:$0xff]
        %v761 = vld [vmem:[%s535 + $0x3d0] sm:$0xff]
        %v762 = vld [vmem:[%s535 + $0x3d8] sm:$0xff]
        %v763 = vld [vmem:[%s535 + $0x3e0] sm:$0xff]
        %v764 = vld [vmem:[%s535 + $0x3e8] sm:$0xff]
        %v765 = vld [vmem:[%s535 + $0x3f0] sm:$0xff]
        %v766 = vld [vmem:[%s535 + $0x3f8] sm:$0xff]
        %v769 = vunpack.c.l.b16 %v637
        %v770 = vunpack.c.h.b16 %v637
        %v771 = vunpack.c.l.b16 %v638
        %v772 = vunpack.c.h.b16 %v638
        %v773 = vpack.c.b16 %v769, %v769
        %v774 = vpack.c.b16 %v770, %v770
        %v775 = vpack.c.b16 %v771, %v771
        %v776 = vpack.c.b16 %v772, %v772
        %v909 = vunpack.c.l.b16 %v639
        %v910 = vunpack.c.h.b16 %v639
        %v911 = vunpack.c.l.b16 %v640
        %v912 = vunpack.c.h.b16 %v640
        %v913 = vunpack.c.l.b16 %v641
        %v914 = vunpack.c.h.b16 %v641
        %v915 = vunpack.c.l.b16 %v642
        %v916 = vunpack.c.h.b16 %v642
        %v917 = vunpack.c.l.b16 %v643
        %v918 = vunpack.c.h.b16 %v643
        %v919 = vunpack.c.l.b16 %v644
        %v920 = vunpack.c.h.b16 %v644
        %v921 = vunpack.c.l.b16 %v645
        %v922 = vunpack.c.h.b16 %v645
        %v923 = vunpack.c.l.b16 %v646
        %v924 = vunpack.c.h.b16 %v646
        %v925 = vunpack.c.l.b16 %v647
        %v926 = vunpack.c.h.b16 %v647
        %v927 = vunpack.c.l.b16 %v648
        %v928 = vunpack.c.h.b16 %v648
        %v929 = vunpack.c.l.b16 %v649
        %v930 = vunpack.c.h.b16 %v649
        %v931 = vunpack.c.l.b16 %v650
        %v932 = vunpack.c.h.b16 %v650
        %v933 = vunpack.c.l.b16 %v651
        %v934 = vunpack.c.h.b16 %v651
        %v935 = vunpack.c.l.b16 %v652
        %v936 = vunpack.c.h.b16 %v652
        %v937 = vunpack.c.l.b16 %v653
        %v938 = vunpack.c.h.b16 %v653
        %v939 = vunpack.c.l.b16 %v654
        %v940 = vunpack.c.h.b16 %v654
        %v941 = vunpack.c.l.b16 %v655
        %v942 = vunpack.c.h.b16 %v655
        %v943 = vunpack.c.l.b16 %v656
        %v944 = vunpack.c.h.b16 %v656
        %v945 = vunpack.c.l.b16 %v657
        %v946 = vunpack.c.h.b16 %v657
        %v947 = vunpack.c.l.b16 %v658
        %v948 = vunpack.c.h.b16 %v658
        %v949 = vunpack.c.l.b16 %v659
        %v950 = vunpack.c.h.b16 %v659
        %v951 = vunpack.c.l.b16 %v660
        %v952 = vunpack.c.h.b16 %v660
        %v953 = vunpack.c.l.b16 %v661
        %v954 = vunpack.c.h.b16 %v661
        %v955 = vunpack.c.l.b16 %v662
        %v956 = vunpack.c.h.b16 %v662
        %v957 = vunpack.c.l.b16 %v663
        %v958 = vunpack.c.h.b16 %v663
        %v959 = vunpack.c.l.b16 %v664
        %v960 = vunpack.c.h.b16 %v664
        %v961 = vunpack.c.l.b16 %v665
        %v962 = vunpack.c.h.b16 %v665
        %v963 = vunpack.c.l.b16 %v666
        %v964 = vunpack.c.h.b16 %v666
        %v965 = vunpack.c.l.b16 %v667
        %v966 = vunpack.c.h.b16 %v667
        %v967 = vunpack.c.l.b16 %v668
        %v968 = vunpack.c.h.b16 %v668
        %v969 = vunpack.c.l.b16 %v669
        %v970 = vunpack.c.h.b16 %v669
        %v971 = vunpack.c.l.b16 %v670
        %v972 = vunpack.c.h.b16 %v670
        %v973 = vunpack.c.l.b16 %v671
        %v974 = vunpack.c.h.b16 %v671
        %v975 = vunpack.c.l.b16 %v672
        %v976 = vunpack.c.h.b16 %v672
        %v977 = vunpack.c.l.b16 %v673
        %v978 = vunpack.c.h.b16 %v673
        %v979 = vunpack.c.l.b16 %v674
        %v980 = vunpack.c.h.b16 %v674
        %v981 = vunpack.c.l.b16 %v675
        %v982 = vunpack.c.h.b16 %v675
        %v983 = vunpack.c.l.b16 %v676
        %v984 = vunpack.c.h.b16 %v676
        %v985 = vunpack.c.l.b16 %v677
        %v986 = vunpack.c.h.b16 %v677
        %v987 = vunpack.c.l.b16 %v678
        %v988 = vunpack.c.h.b16 %v678
        %v989 = vunpack.c.l.b16 %v679
        %v990 = vunpack.c.h.b16 %v679
        %v991 = vunpack.c.l.b16 %v680
        %v992 = vunpack.c.h.b16 %v680
        %v993 = vunpack.c.l.b16 %v681
        %v994 = vunpack.c.h.b16 %v681
        %v995 = vunpack.c.l.b16 %v682
        %v996 = vunpack.c.h.b16 %v682
        %v997 = vunpack.c.l.b16 %v683
        %v998 = vunpack.c.h.b16 %v683
        %v999 = vunpack.c.l.b16 %v684
        %v1000 = vunpack.c.h.b16 %v684
        %v1001 = vunpack.c.l.b16 %v685
        %v1002 = vunpack.c.h.b16 %v685
        %v1003 = vunpack.c.l.b16 %v686
        %v1004 = vunpack.c.h.b16 %v686
        %v1005 = vunpack.c.l.b16 %v687
        %v1006 = vunpack.c.h.b16 %v687
        %v1007 = vunpack.c.l.b16 %v688
        %v1008 = vunpack.c.h.b16 %v688
        %v1009 = vunpack.c.l.b16 %v689
        %v1010 = vunpack.c.h.b16 %v689
        %v1011 = vunpack.c.l.b16 %v690
        %v1012 = vunpack.c.h.b16 %v690
        %v1013 = vunpack.c.l.b16 %v691
        %v1014 = vunpack.c.h.b16 %v691
        %v1015 = vunpack.c.l.b16 %v692
        %v1016 = vunpack.c.h.b16 %v692
        %v1017 = vunpack.c.l.b16 %v693
        %v1018 = vunpack.c.h.b16 %v693
        %v1019 = vunpack.c.l.b16 %v694
        %v1020 = vunpack.c.h.b16 %v694
        %v1021 = vunpack.c.l.b16 %v695
        %v1022 = vunpack.c.h.b16 %v695
        %v1023 = vunpack.c.l.b16 %v696
        %v1024 = vunpack.c.h.b16 %v696
        %v1025 = vunpack.c.l.b16 %v697
        %v1026 = vunpack.c.h.b16 %v697
        %v1027 = vunpack.c.l.b16 %v698
        %v1028 = vunpack.c.h.b16 %v698
        %v1029 = vunpack.c.l.b16 %v699
        %v1030 = vunpack.c.h.b16 %v699
        %v1031 = vunpack.c.l.b16 %v700
        %v1032 = vunpack.c.h.b16 %v700
        %v1033 = vunpack.c.l.b16 %v701
        %v1034 = vunpack.c.h.b16 %v701
        %v1035 = vunpack.c.l.b16 %v702
        %v1036 = vunpack.c.h.b16 %v702
        %v1037 = vunpack.c.l.b16 %v703
        %v1038 = vunpack.c.h.b16 %v703
        %v1039 = vunpack.c.l.b16 %v704
        %v1040 = vunpack.c.h.b16 %v704
        %v1041 = vunpack.c.l.b16 %v705
        %v1042 = vunpack.c.h.b16 %v705
        %v1043 = vunpack.c.l.b16 %v706
        %v1044 = vunpack.c.h.b16 %v706
        %v1045 = vunpack.c.l.b16 %v707
        %v1046 = vunpack.c.h.b16 %v707
        %v1047 = vunpack.c.l.b16 %v708
        %v1048 = vunpack.c.h.b16 %v708
        %v1049 = vunpack.c.l.b16 %v709
        %v1050 = vunpack.c.h.b16 %v709
        %v1051 = vunpack.c.l.b16 %v710
        %v1052 = vunpack.c.h.b16 %v710
        %v1053 = vunpack.c.l.b16 %v711
        %v1054 = vunpack.c.h.b16 %v711
        %v1055 = vunpack.c.l.b16 %v712
        %v1056 = vunpack.c.h.b16 %v712
        %v1057 = vunpack.c.l.b16 %v713
        %v1058 = vunpack.c.h.b16 %v713
        %v1059 = vunpack.c.l.b16 %v714
        %v1060 = vunpack.c.h.b16 %v714
        %v1061 = vunpack.c.l.b16 %v715
        %v1062 = vunpack.c.h.b16 %v715
        %v1063 = vunpack.c.l.b16 %v716
        %v1064 = vunpack.c.h.b16 %v716
        %v1065 = vunpack.c.l.b16 %v717
        %v1066 = vunpack.c.h.b16 %v717
        %v1067 = vunpack.c.l.b16 %v718
        %v1068 = vunpack.c.h.b16 %v718
        %v1069 = vunpack.c.l.b16 %v719
        %v1070 = vunpack.c.h.b16 %v719
        %v1071 = vunpack.c.l.b16 %v720
        %v1072 = vunpack.c.h.b16 %v720
        %v1073 = vunpack.c.l.b16 %v721
        %v1074 = vunpack.c.h.b16 %v721
        %v1075 = vunpack.c.l.b16 %v722
        %v1076 = vunpack.c.h.b16 %v722
        %v1077 = vunpack.c.l.b16 %v723
        %v1078 = vunpack.c.h.b16 %v723
        %v1079 = vunpack.c.l.b16 %v724
        %v1080 = vunpack.c.h.b16 %v724
        %v1081 = vunpack.c.l.b16 %v725
        %v1082 = vunpack.c.h.b16 %v725
        %v1083 = vunpack.c.l.b16 %v726
        %v1084 = vunpack.c.h.b16 %v726
        %v1085 = vunpack.c.l.b16 %v727
        %v1086 = vunpack.c.h.b16 %v727
        %v1087 = vunpack.c.l.b16 %v728
        %v1088 = vunpack.c.h.b16 %v728
        %v1089 = vunpack.c.l.b16 %v729
        %v1090 = vunpack.c.h.b16 %v729
        %v1091 = vunpack.c.l.b16 %v730
        %v1092 = vunpack.c.h.b16 %v730
        %v1093 = vunpack.c.l.b16 %v731
        %v1094 = vunpack.c.h.b16 %v731
        %v1095 = vunpack.c.l.b16 %v732
        %v1096 = vunpack.c.h.b16 %v732
        %v1097 = vunpack.c.l.b16 %v733
        %v1098 = vunpack.c.h.b16 %v733
        %v1099 = vunpack.c.l.b16 %v734
        %v1100 = vunpack.c.h.b16 %v734
        %v1101 = vunpack.c.l.b16 %v735
        %v1102 = vunpack.c.h.b16 %v735
        %v1103 = vunpack.c.l.b16 %v736
        %v1104 = vunpack.c.h.b16 %v736
        %v1105 = vunpack.c.l.b16 %v737
        %v1106 = vunpack.c.h.b16 %v737
        %v1107 = vunpack.c.l.b16 %v738
        %v1108 = vunpack.c.h.b16 %v738
        %v1109 = vunpack.c.l.b16 %v739
        %v1110 = vunpack.c.h.b16 %v739
        %v1111 = vunpack.c.l.b16 %v740
        %v1112 = vunpack.c.h.b16 %v740
        %v1113 = vunpack.c.l.b16 %v741
        %v1114 = vunpack.c.h.b16 %v741
        %v1115 = vunpack.c.l.b16 %v742
        %v1116 = vunpack.c.h.b16 %v742
        %v1117 = vunpack.c.l.b16 %v743
        %v1118 = vunpack.c.h.b16 %v743
        %v1119 = vunpack.c.l.b16 %v744
        %v1120 = vunpack.c.h.b16 %v744
        %v1121 = vunpack.c.l.b16 %v745
        %v1122 = vunpack.c.h.b16 %v745
        %v1123 = vunpack.c.l.b16 %v746
        %v1124 = vunpack.c.h.b16 %v746
        %v1125 = vunpack.c.l.b16 %v747
        %v1126 = vunpack.c.h.b16 %v747
        %v1127 = vunpack.c.l.b16 %v748
        %v1128 = vunpack.c.h.b16 %v748
        %v1129 = vunpack.c.l.b16 %v749
        %v1130 = vunpack.c.h.b16 %v749
        %v1131 = vunpack.c.l.b16 %v750
        %v1132 = vunpack.c.h.b16 %v750
        %v1133 = vunpack.c.l.b16 %v751
        %v1134 = vunpack.c.h.b16 %v751
        %v1135 = vunpack.c.l.b16 %v752
        %v1136 = vunpack.c.h.b16 %v752
        %v1137 = vunpack.c.l.b16 %v753
        %v1138 = vunpack.c.h.b16 %v753
        %v1139 = vunpack.c.l.b16 %v754
        %v1140 = vunpack.c.h.b16 %v754
        %v1141 = vunpack.c.l.b16 %v755
        %v1142 = vunpack.c.h.b16 %v755
        %v1143 = vunpack.c.l.b16 %v756
        %v1144 = vunpack.c.h.b16 %v756
        %v1145 = vunpack.c.l.b16 %v757
        %v1146 = vunpack.c.h.b16 %v757
        %v1147 = vunpack.c.l.b16 %v758
        %v1148 = vunpack.c.h.b16 %v758
        %v1149 = vunpack.c.l.b16 %v759
        %v1150 = vunpack.c.h.b16 %v759
        %v1151 = vunpack.c.l.b16 %v760
        %v1152 = vunpack.c.h.b16 %v760
        %v1153 = vunpack.c.l.b16 %v761
        %v1154 = vunpack.c.h.b16 %v761
        %v1155 = vunpack.c.l.b16 %v762
        %v1156 = vunpack.c.h.b16 %v762
        %v1157 = vunpack.c.l.b16 %v763
        %v1158 = vunpack.c.h.b16 %v763
        %v1159 = vunpack.c.l.b16 %v764
        %v1160 = vunpack.c.h.b16 %v764
        %v1161 = vunpack.c.l.b16 %v765
        %v1162 = vunpack.c.h.b16 %v765
        %v1163 = vunpack.c.l.b16 %v766
        %v1164 = vunpack.c.h.b16 %v766
        %v1165 = vpack.c.b16 %v913, %v909
        %v1166 = vpack.c.b16 %v914, %v910
        %v1167 = vpack.c.b16 %v915, %v911
        %v1168 = vpack.c.b16 %v916, %v912
        %v1169 = vpack.c.b16 %v921, %v917
        %v1170 = vpack.c.b16 %v922, %v918
        %v1171 = vpack.c.b16 %v923, %v919
        %v1172 = vpack.c.b16 %v924, %v920
        %v1173 = vpack.c.b16 %v929, %v925
        %v1174 = vpack.c.b16 %v930, %v926
        %v1175 = vpack.c.b16 %v931, %v927
        %v1176 = vpack.c.b16 %v932, %v928
        %v1177 = vpack.c.b16 %v937, %v933
        %v1178 = vpack.c.b16 %v938, %v934
        %v1179 = vpack.c.b16 %v939, %v935
        %v1180 = vpack.c.b16 %v940, %v936
        %v1181 = vpack.c.b16 %v945, %v941
        %v1182 = vpack.c.b16 %v946, %v942
        %v1183 = vpack.c.b16 %v947, %v943
        %v1184 = vpack.c.b16 %v948, %v944
        %v1185 = vpack.c.b16 %v953, %v949
        %v1186 = vpack.c.b16 %v954, %v950
        %v1187 = vpack.c.b16 %v955, %v951
        %v1188 = vpack.c.b16 %v956, %v952
        %v1189 = vpack.c.b16 %v961, %v957
        %v1190 = vpack.c.b16 %v962, %v958
        %v1191 = vpack.c.b16 %v963, %v959
        %v1192 = vpack.c.b16 %v964, %v960
        %v1193 = vpack.c.b16 %v969, %v965
        %v1194 = vpack.c.b16 %v970, %v966
        %v1195 = vpack.c.b16 %v971, %v967
        %v1196 = vpack.c.b16 %v972, %v968
        %v1197 = vpack.c.b16 %v977, %v973
        %v1198 = vpack.c.b16 %v978, %v974
        %v1199 = vpack.c.b16 %v979, %v975
        %v1200 = vpack.c.b16 %v980, %v976
        %v1201 = vpack.c.b16 %v985, %v981
        %v1202 = vpack.c.b16 %v986, %v982
        %v1203 = vpack.c.b16 %v987, %v983
        %v1204 = vpack.c.b16 %v988, %v984
        %v1205 = vpack.c.b16 %v993, %v989
        %v1206 = vpack.c.b16 %v994, %v990
        %v1207 = vpack.c.b16 %v995, %v991
        %v1208 = vpack.c.b16 %v996, %v992
        %v1209 = vpack.c.b16 %v1001, %v997
        %v1210 = vpack.c.b16 %v1002, %v998
        %v1211 = vpack.c.b16 %v1003, %v999
        %v1212 = vpack.c.b16 %v1004, %v1000
        %v1213 = vpack.c.b16 %v1009, %v1005
        %v1214 = vpack.c.b16 %v1010, %v1006
        %v1215 = vpack.c.b16 %v1011, %v1007
        %v1216 = vpack.c.b16 %v1012, %v1008
        %v1217 = vpack.c.b16 %v1017, %v1013
        %v1218 = vpack.c.b16 %v1018, %v1014
        %v1219 = vpack.c.b16 %v1019, %v1015
        %v1220 = vpack.c.b16 %v1020, %v1016
        %v1221 = vpack.c.b16 %v1025, %v1021
        %v1222 = vpack.c.b16 %v1026, %v1022
        %v1223 = vpack.c.b16 %v1027, %v1023
        %v1224 = vpack.c.b16 %v1028, %v1024
        %v1225 = vpack.c.b16 %v1033, %v1029
        %v1226 = vpack.c.b16 %v1034, %v1030
        %v1227 = vpack.c.b16 %v1035, %v1031
        %v1228 = vpack.c.b16 %v1036, %v1032
        %v1229 = vpack.c.b16 %v1041, %v1037
        %v1230 = vpack.c.b16 %v1042, %v1038
        %v1231 = vpack.c.b16 %v1043, %v1039
        %v1232 = vpack.c.b16 %v1044, %v1040
        %v1233 = vpack.c.b16 %v1049, %v1045
        %v1234 = vpack.c.b16 %v1050, %v1046
        %v1235 = vpack.c.b16 %v1051, %v1047
        %v1236 = vpack.c.b16 %v1052, %v1048
        %v1237 = vpack.c.b16 %v1057, %v1053
        %v1238 = vpack.c.b16 %v1058, %v1054
        %v1239 = vpack.c.b16 %v1059, %v1055
        %v1240 = vpack.c.b16 %v1060, %v1056
        %v1241 = vpack.c.b16 %v1065, %v1061
        %v1242 = vpack.c.b16 %v1066, %v1062
        %v1243 = vpack.c.b16 %v1067, %v1063
        %v1244 = vpack.c.b16 %v1068, %v1064
        %v1245 = vpack.c.b16 %v1073, %v1069
        %v1246 = vpack.c.b16 %v1074, %v1070
        %v1247 = vpack.c.b16 %v1075, %v1071
        %v1248 = vpack.c.b16 %v1076, %v1072
        %v1249 = vpack.c.b16 %v1081, %v1077
        %v1250 = vpack.c.b16 %v1082, %v1078
        %v1251 = vpack.c.b16 %v1083, %v1079
        %v1252 = vpack.c.b16 %v1084, %v1080
        %v1253 = vpack.c.b16 %v1089, %v1085
        %v1254 = vpack.c.b16 %v1090, %v1086
        %v1255 = vpack.c.b16 %v1091, %v1087
        %v1256 = vpack.c.b16 %v1092, %v1088
        %v1257 = vpack.c.b16 %v1097, %v1093
        %v1258 = vpack.c.b16 %v1098, %v1094
        %v1259 = vpack.c.b16 %v1099, %v1095
        %v1260 = vpack.c.b16 %v1100, %v1096
        %v1261 = vpack.c.b16 %v1105, %v1101
        %v1262 = vpack.c.b16 %v1106, %v1102
        %v1263 = vpack.c.b16 %v1107, %v1103
        %v1264 = vpack.c.b16 %v1108, %v1104
        %v1265 = vpack.c.b16 %v1113, %v1109
        %v1266 = vpack.c.b16 %v1114, %v1110
        %v1267 = vpack.c.b16 %v1115, %v1111
        %v1268 = vpack.c.b16 %v1116, %v1112
        %v1269 = vpack.c.b16 %v1121, %v1117
        %v1270 = vpack.c.b16 %v1122, %v1118
        %v1271 = vpack.c.b16 %v1123, %v1119
        %v1272 = vpack.c.b16 %v1124, %v1120
        %v1273 = vpack.c.b16 %v1129, %v1125
        %v1274 = vpack.c.b16 %v1130, %v1126
        %v1275 = vpack.c.b16 %v1131, %v1127
        %v1276 = vpack.c.b16 %v1132, %v1128
        %v1277 = vpack.c.b16 %v1137, %v1133
        %v1278 = vpack.c.b16 %v1138, %v1134
        %v1279 = vpack.c.b16 %v1139, %v1135
        %v1280 = vpack.c.b16 %v1140, %v1136
        %v1281 = vpack.c.b16 %v1145, %v1141
        %v1282 = vpack.c.b16 %v1146, %v1142
        %v1283 = vpack.c.b16 %v1147, %v1143
        %v1284 = vpack.c.b16 %v1148, %v1144
        %v1285 = vpack.c.b16 %v1153, %v1149
        %v1286 = vpack.c.b16 %v1154, %v1150
        %v1287 = vpack.c.b16 %v1155, %v1151
        %v1288 = vpack.c.b16 %v1156, %v1152
        %v1289 = vpack.c.b16 %v1161, %v1157
        %v1290 = vpack.c.b16 %v1162, %v1158
        %v1291 = vpack.c.b16 %v1163, %v1159
        %v1292 = vpack.c.b16 %v1164, %v1160
        %1421 = vmatpush.bf16.msra.mxu0 %v1193
        %1422 = vmatpush.bf16.msra.mxu0 %v1189
        %1423 = vmatpush.bf16.msra.mxu0 %v1185
        %1424 = vmatpush.bf16.msra.mxu0 %v1181
        %1425 = vmatpush.bf16.msra.mxu0 %v1177
        %1426 = vmatpush.bf16.msra.mxu0 %v1173
        %1427 = vmatpush.bf16.msra.mxu0 %v1169
        %1428 = vmatpush.bf16.msra.mxu0 %v1165
        %1429 = vmatmul.bf16.gmra.mxu0 %v773
        %v1430 = vpop.f32.mrf.mxu0
        %v1431 = vadd.f32 0.0, %v1430
        %v1432 = vpop.f32.mrf.mxu0
        %1433 = vdwg.mxu0
        %1434 = vmatpush.bf16.msra.mxu0 %v1225
        %1435 = vmatpush.bf16.msra.mxu0 %v1221
        %1436 = vmatpush.bf16.msra.mxu0 %v1217
        %1437 = vmatpush.bf16.msra.mxu0 %v1213
        %1438 = vmatpush.bf16.msra.mxu0 %v1209
        %1439 = vmatpush.bf16.msra.mxu0 %v1205
        %1440 = vmatpush.bf16.msra.mxu0 %v1201
        %1441 = vmatpush.bf16.msra.mxu0 %v1197
        %1442 = vmatmul.bf16.gmra.mxu0 %v774
        %v1443 = vpop.f32.mrf.mxu0
        %v1444 = vadd.f32 %v1431, %v1443
        %v1445 = vpop.f32.mrf.mxu0
        %1446 = vdwg.mxu0
        %1447 = vmatpush.bf16.msra.mxu0 %v1257
        %1448 = vmatpush.bf16.msra.mxu0 %v1253
        %1449 = vmatpush.bf16.msra.mxu0 %v1249
        %1450 = vmatpush.bf16.msra.mxu0 %v1245
        %1451 = vmatpush.bf16.msra.mxu0 %v1241
        %1452 = vmatpush.bf16.msra.mxu0 %v1237
        %1453 = vmatpush.bf16.msra.mxu0 %v1233
        %1454 = vmatpush.bf16.msra.mxu0 %v1229
        %1455 = vmatmul.bf16.gmra.mxu0 %v775
        %v1456 = vpop.f32.mrf.mxu0
        %v1457 = vadd.f32 %v1444, %v1456
        %v1458 = vpop.f32.mrf.mxu0
        %1459 = vdwg.mxu0
        %1460 = vmatpush.bf16.msra.mxu0 %v1289
        %1461 = vmatpush.bf16.msra.mxu0 %v1285
        %1462 = vmatpush.bf16.msra.mxu0 %v1281
        %1463 = vmatpush.bf16.msra.mxu0 %v1277
        %1464 = vmatpush.bf16.msra.mxu0 %v1273
        %1465 = vmatpush.bf16.msra.mxu0 %v1269
        %1466 = vmatpush.bf16.msra.mxu0 %v1265
        %1467 = vmatpush.bf16.msra.mxu0 %v1261
        %1468 = vmatmul.bf16.gmra.mxu0 %v776
        %v1469 = vpop.f32.mrf.mxu0
        %v1470 = vadd.f32 %v1457, %v1469
        %v1471 = vpop.f32.mrf.mxu0
        %1472 = vdwg.mxu0
        %1473 = vmatpush.bf16.msra.mxu0 %v1194
        %1474 = vmatpush.bf16.msra.mxu0 %v1190
        %1475 = vmatpush.bf16.msra.mxu0 %v1186
        %1476 = vmatpush.bf16.msra.mxu0 %v1182
        %1477 = vmatpush.bf16.msra.mxu0 %v1178
        %1478 = vmatpush.bf16.msra.mxu0 %v1174
        %1479 = vmatpush.bf16.msra.mxu0 %v1170
        %1480 = vmatpush.bf16.msra.mxu0 %v1166
        %1481 = vmatmul.bf16.gmra.mxu0 %v773
        %v1482 = vpop.f32.mrf.mxu0
        %v1483 = vadd.f32 0.0, %v1482
        %v1484 = vpop.f32.mrf.mxu0
        %1485 = vdwg.mxu0
        %1486 = vmatpush.bf16.msra.mxu0 %v1226
        %1487 = vmatpush.bf16.msra.mxu0 %v1222
        %1488 = vmatpush.bf16.msra.mxu0 %v1218
        %1489 = vmatpush.bf16.msra.mxu0 %v1214
        %1490 = vmatpush.bf16.msra.mxu0 %v1210
        %1491 = vmatpush.bf16.msra.mxu0 %v1206
        %1492 = vmatpush.bf16.msra.mxu0 %v1202
        %1493 = vmatpush.bf16.msra.mxu0 %v1198
        %1494 = vmatmul.bf16.gmra.mxu0 %v774
        %v1495 = vpop.f32.mrf.mxu0
        %v1496 = vadd.f32 %v1483, %v1495
        %v1497 = vpop.f32.mrf.mxu0
        %1498 = vdwg.mxu0
        %1499 = vmatpush.bf16.msra.mxu0 %v1258
        %1500 = vmatpush.bf16.msra.mxu0 %v1254
        %1501 = vmatpush.bf16.msra.mxu0 %v1250
        %1502 = vmatpush.bf16.msra.mxu0 %v1246
        %1503 = vmatpush.bf16.msra.mxu0 %v1242
        %1504 = vmatpush.bf16.msra.mxu0 %v1238
        %1505 = vmatpush.bf16.msra.mxu0 %v1234
        %1506 = vmatpush.bf16.msra.mxu0 %v1230
        %1507 = vmatmul.bf16.gmra.mxu0 %v775
        %v1508 = vpop.f32.mrf.mxu0
        %v1509 = vadd.f32 %v1496, %v1508
        %v1510 = vpop.f32.mrf.mxu0
        %1511 = vdwg.mxu0
        %1512 = vmatpush.bf16.msra.mxu0 %v1290
        %1513 = vmatpush.bf16.msra.mxu0 %v1286
        %1514 = vmatpush.bf16.msra.mxu0 %v1282
        %1515 = vmatpush.bf16.msra.mxu0 %v1278
        %1516 = vmatpush.bf16.msra.mxu0 %v1274
        %1517 = vmatpush.bf16.msra.mxu0 %v1270
        %1518 = vmatpush.bf16.msra.mxu0 %v1266
        %1519 = vmatpush.bf16.msra.mxu0 %v1262
        %1520 = vmatmul.bf16.gmra.mxu0 %v776
        %v1521 = vpop.f32.mrf.mxu0
        %v1522 = vadd.f32 %v1509, %v1521
        %v1523 = vpop.f32.mrf.mxu0
        %1524 = vdwg.mxu0
        %1525 = vmatpush.bf16.msra.mxu0 %v1195
        %1526 = vmatpush.bf16.msra.mxu0 %v1191
        %1527 = vmatpush.bf16.msra.mxu0 %v1187
        %1528 = vmatpush.bf16.msra.mxu0 %v1183
        %1529 = vmatpush.bf16.msra.mxu0 %v1179
        %1530 = vmatpush.bf16.msra.mxu0 %v1175
        %1531 = vmatpush.bf16.msra.mxu0 %v1171
        %1532 = vmatpush.bf16.msra.mxu0 %v1167
        %1533 = vmatmul.bf16.gmra.mxu0 %v773
        %v1534 = vpop.f32.mrf.mxu0
        %v1535 = vadd.f32 0.0, %v1534
        %v1536 = vpop.f32.mrf.mxu0
        %1537 = vdwg.mxu0
        %1538 = vmatpush.bf16.msra.mxu0 %v1227
        %1539 = vmatpush.bf16.msra.mxu0 %v1223
        %1540 = vmatpush.bf16.msra.mxu0 %v1219
        %1541 = vmatpush.bf16.msra.mxu0 %v1215
        %1542 = vmatpush.bf16.msra.mxu0 %v1211
        %1543 = vmatpush.bf16.msra.mxu0 %v1207
        %1544 = vmatpush.bf16.msra.mxu0 %v1203
        %1545 = vmatpush.bf16.msra.mxu0 %v1199
        %1546 = vmatmul.bf16.gmra.mxu0 %v774
        %v1547 = vpop.f32.mrf.mxu0
        %v1548 = vadd.f32 %v1535, %v1547
        %v1549 = vpop.f32.mrf.mxu0
        %1550 = vdwg.mxu0
        %1551 = vmatpush.bf16.msra.mxu0 %v1259
        %1552 = vmatpush.bf16.msra.mxu0 %v1255
        %1553 = vmatpush.bf16.msra.mxu0 %v1251
        %1554 = vmatpush.bf16.msra.mxu0 %v1247
        %1555 = vmatpush.bf16.msra.mxu0 %v1243
        %1556 = vmatpush.bf16.msra.mxu0 %v1239
        %1557 = vmatpush.bf16.msra.mxu0 %v1235
        %1558 = vmatpush.bf16.msra.mxu0 %v1231
        %1559 = vmatmul.bf16.gmra.mxu0 %v775
        %v1560 = vpop.f32.mrf.mxu0
        %v1561 = vadd.f32 %v1548, %v1560
        %v1562 = vpop.f32.mrf.mxu0
        %1563 = vdwg.mxu0
        %1564 = vmatpush.bf16.msra.mxu0 %v1291
        %1565 = vmatpush.bf16.msra.mxu0 %v1287
        %1566 = vmatpush.bf16.msra.mxu0 %v1283
        %1567 = vmatpush.bf16.msra.mxu0 %v1279
        %1568 = vmatpush.bf16.msra.mxu0 %v1275
        %1569 = vmatpush.bf16.msra.mxu0 %v1271
        %1570 = vmatpush.bf16.msra.mxu0 %v1267
        %1571 = vmatpush.bf16.msra.mxu0 %v1263
        %1572 = vmatmul.bf16.gmra.mxu0 %v776
        %v1573 = vpop.f32.mrf.mxu0
        %v1574 = vadd.f32 %v1561, %v1573
        %v1575 = vpop.f32.mrf.mxu0
        %1576 = vdwg.mxu0
        %1577 = vmatpush.bf16.msra.mxu0 %v1196
        %1578 = vmatpush.bf16.msra.mxu0 %v1192
        %1579 = vmatpush.bf16.msra.mxu0 %v1188
        %1580 = vmatpush.bf16.msra.mxu0 %v1184
        %1581 = vmatpush.bf16.msra.mxu0 %v1180
        %1582 = vmatpush.bf16.msra.mxu0 %v1176
        %1583 = vmatpush.bf16.msra.mxu0 %v1172
        %1584 = vmatpush.bf16.msra.mxu0 %v1168
        %1585 = vmatmul.bf16.gmra.mxu0 %v773
        %v1586 = vpop.f32.mrf.mxu0
        %v1587 = vadd.f32 0.0, %v1586
        %v1588 = vpop.f32.mrf.mxu0
        %1589 = vdwg.mxu0
        %1590 = vmatpush.bf16.msra.mxu0 %v1228
        %1591 = vmatpush.bf16.msra.mxu0 %v1224
        %1592 = vmatpush.bf16.msra.mxu0 %v1220
        %1593 = vmatpush.bf16.msra.mxu0 %v1216
        %1594 = vmatpush.bf16.msra.mxu0 %v1212
        %1595 = vmatpush.bf16.msra.mxu0 %v1208
        %1596 = vmatpush.bf16.msra.mxu0 %v1204
        %1597 = vmatpush.bf16.msra.mxu0 %v1200
        %1598 = vmatmul.bf16.gmra.mxu0 %v774
        %v1599 = vpop.f32.mrf.mxu0
        %v1600 = vadd.f32 %v1587, %v1599
        %v1601 = vpop.f32.mrf.mxu0
        %1602 = vdwg.mxu0
        %1603 = vmatpush.bf16.msra.mxu0 %v1260
        %1604 = vmatpush.bf16.msra.mxu0 %v1256
        %1605 = vmatpush.bf16.msra.mxu0 %v1252
        %1606 = vmatpush.bf16.msra.mxu0 %v1248
        %1607 = vmatpush.bf16.msra.mxu0 %v1244
        %1608 = vmatpush.bf16.msra.mxu0 %v1240
        %1609 = vmatpush.bf16.msra.mxu0 %v1236
        %1610 = vmatpush.bf16.msra.mxu0 %v1232
        %1611 = vmatmul.bf16.gmra.mxu0 %v775
        %v1612 = vpop.f32.mrf.mxu0
        %v1613 = vadd.f32 %v1600, %v1612
        %v1614 = vpop.f32.mrf.mxu0
        %1615 = vdwg.mxu0
        %1616 = vmatpush.bf16.msra.mxu0 %v1292
        %1617 = vmatpush.bf16.msra.mxu0 %v1288
        %1618 = vmatpush.bf16.msra.mxu0 %v1284
        %1619 = vmatpush.bf16.msra.mxu0 %v1280
        %1620 = vmatpush.bf16.msra.mxu0 %v1276
        %1621 = vmatpush.bf16.msra.mxu0 %v1272
        %1622 = vmatpush.bf16.msra.mxu0 %v1268
        %1623 = vmatpush.bf16.msra.mxu0 %v1264
        %1624 = vmatmul.bf16.gmra.mxu0 %v776
        %v1625 = vpop.f32.mrf.mxu0
        %v1626 = vadd.f32 %v1613, %v1625
        %v1627 = vpop.f32.mrf.mxu0
        %1628 = vdwg.mxu0
        %v1629 = vadd.f32 %v633, %v1470
        %v1630 = vadd.f32 %v634, %v1522
        %v1631 = vadd.f32 %v635, %v1574
        %v1632 = vadd.f32 %v636, %v1626
        %1633 = vst [vmem:[%s623] sm:$0xff] %v1629
        %1634 = vst [vmem:[%s623 + $0x8] sm:$0xff] %v1630
        %1635 = vst [vmem:[%s623 + $0x10] sm:$0xff] %v1631
        %1636 = vst [vmem:[%s623 + $0x18] sm:$0xff] %v1632
        %p1637 = scmp.eq.s32.totalorder %s28, 1
        // Predicated region
        $region72: #{instance_branch_forward.4} parent=54 // pred_check
          %p1638 = pneg %p1637
        $region73: #{instance_branch_forward.4} parent=54 // pred_check_branch
          %1640 = sbr.rel (%p1638) target = $region75
        $region74: #{instance_branch_forward.4} parent=54 // pred_region
          %v1641 = vld [vmem:[%s623] sm:$0xff]
          %v1642 = vld [vmem:[%s623 + $0x8] sm:$0xff]
          %v1643 = vld [vmem:[%s623 + $0x10] sm:$0xff]
          %v1644 = vld [vmem:[%s623 + $0x18] sm:$0xff]
          %v1645 = vld [vmem:[%s543] sm:$0xf]
          %v1647 = vperm.slane %v1645, 0
          %v1648 = vperm.slane %v1645, 1
          %v1649 = vperm.slane %v1645, 2
          %v1650 = vperm.slane %v1645, 3
          %v1655 = vmul.f32 %v1641, %v1647
          %v1656 = vmul.f32 %v1642, %v1648
          %v1657 = vmul.f32 %v1643, %v1649
          %v1658 = vmul.f32 %v1644, %v1650
          %v1659 = vld [vmem:[%s553] sm:$0xf]
          %v1661 = vperm.slane %v1659, 0
          %v1662 = vperm.slane %v1659, 1
          %v1663 = vperm.slane %v1659, 2
          %v1664 = vperm.slane %v1659, 3
          %v1669 = vadd.f32 %v1655, %v1661
          %v1670 = vadd.f32 %v1656, %v1662
          %v1671 = vadd.f32 %v1657, %v1663
          %v1672 = vadd.f32 %v1658, %v1664
          %v1673 = vmax.f32 %v1669, 0.0
          %v1674 = vmax.f32 %v1670, 0.0
          %v1675 = vmax.f32 %v1671, 0.0
          %v1676 = vmax.f32 %v1672, 0.0
          %1677 = vst [vmem:[%s623] sm:$0xff] %v1673
          %1678 = vst [vmem:[%s623 + $0x8] sm:$0xff] %v1674
          %1679 = vst [vmem:[%s623 + $0x10] sm:$0xff] %v1675
          %1680 = vst [vmem:[%s623 + $0x18] sm:$0xff] %v1676
        $region75: #{instance_branch_forward.4} parent=54 // pred_fallthru
          _
        %s1681 = smul.u32 4, %s27
        %p1682 = scmp.lt.s32.totalorder %s26, 0
        %s1683 = scalar_select %p1682, %s26, 0
        %p1684 = scmp.lt.s32.totalorder %s1681, 15
        %s1685 = scalar_select %p1684, %s1681, 15
        %s1686 = smul.addr %s1683, 16
        %s1687 = sadd.s32 %s1685, %s1686
        %s1688 = smul.addr %s1687, 8
        %s1689 = scalar_lea.vmem %s4, %s1688
        // Predicated region
        $region76: #{instance_branch_forward.4} parent=54 // pred_check
          %p1690 = pneg %p168
        $region77: #{instance_branch_forward.4} parent=54 // pred_check_branch
          %1692 = sbr.rel (%p1690) target = $region79
        $region78: #{instance_branch_forward.4} parent=54 // pred_region
          %s1693 = smul.u32 4, %s27
        $region79: #{instance_branch_forward.4} parent=54 // pred_fallthru
          _
      $region55: #{instance_branch_forward.4} parent=5 // pred_fallthru
        _
      %p1694 = scmp.le.s32.totalorder 2, %s16
      // Predicated region
      $region80: #{instance_branch_forward.4} parent=5 // pred_check
        %p1695 = pneg %p1694
      $region81: #{instance_branch_forward.4} parent=5 // pred_check_branch
        %1697 = sbr.rel (%p1695) target = $region83
      $region82: #{instance_branch_forward.4} parent=5 // pred_region
        %s1698 = ssub.s32 %s16, 2
        // Predicated region
        $region84: #{instance_branch_forward.4} parent=82 // pred_check
          %p1699 = pneg %p174
        $region85: #{instance_branch_forward.4} parent=82 // pred_check_branch
          %1701 = sbr.rel (%p1699) target = $region87
        $region86: #{instance_branch_forward.4} parent=82 // pred_region
          %s1702 = smul.u32 4, %s30
          %p1703 = scmp.lt.s32.totalorder %s29, 0
          %s1704 = scalar_select %p1703, %s29, 0
          %p1705 = scmp.lt.s32.totalorder %s1702, 15
          %s1706 = scalar_select %p1705, %s1702, 15
          %s1707 = smul.addr %s1704, 16
          %s1708 = sadd.s32 %s1706, %s1707
          %s1709 = smul.addr %s1708, 8
          %s1710 = scalar_lea.vmem %s4, %s1709
        $region87: #{instance_branch_forward.4} parent=82 // pred_fallthru
          _
      $region83: #{instance_branch_forward.4} parent=5 // pred_fallthru
        _
    $region6: #{instance_branch_forward.4} parent=1 // loop_footer
      %s20 = sadd.s32 1, %s16
    $region7: #{instance_branch_forward.4} parent=1 // loop_footer_branch
      %15 = sbr.rel target = $region3
    $region8: #{instance_branch_forward.4} parent=1 // loop_exit
      _
    %1711 = vsyncpa [#allocation4], 1
    %s1712 = scalar_lea.sflag [#allocation4], 1
    %1713 = vsyncpa %s1712, 1
    %1714 = vsyncpa [#allocation6], 1
    %s1715 = scalar_lea.sflag [#allocation6], 1
    %1716 = vsyncpa %s1715, 1

// kernel: instance_branch_forward.5
$region0: #{instance_branch_forward.5}
  #allocation0 [shape = 'u32[]', space=smem, size = 0x4, offset = 0x4, fixed_abs, tag = 'smem constant byte address 0x4 - core index']
  #allocation1 [shape = 'u32[72,128]{1,0:T(1,128)}', space=vmem, size = 0x9000, scoped, tag = 'internal scratch']
  %s0 = inlined_call_operand.vmem [shape: bf16[8,2048], index: 0, kind: input, shape index: {}]
  %s1 = inlined_call_operand.vmem [shape: bf16[2048,7168], index: 1, kind: input, shape index: {}]
  %s2 = inlined_call_operand.vmem [shape: f32[1,7168], index: 2, kind: input, shape index: {}]
  %s3 = inlined_call_operand.vmem [shape: f32[1,7168], index: 3, kind: input, shape index: {}]
  %s4 = inlined_call_operand.vmem [shape: f32[8,7168], index: 4, kind: output, shape index: {}]
  %s5 = sld [smem:[#allocation0]]
  $region80: #{instance_branch_forward.5} parent=0
    _
  %s7 = ssub.s32 1, %s5
  %s8 = scalar_select 0, %s7, %s5
  $region1: #{instance_branch_forward.5} parent=0
    #allocation2 [shape = 'u8[1048576]{0}', space=vmem, size = 0x100000, scoped, tag = 'input window, operand 1']
    loop: start=0, step=1, limit=58
    $region2: #{instance_branch_forward.5} parent=1 // loop_pre_header
      _
    $region3: #{instance_branch_forward.5} parent=1 // loop_header
      %s10 = sphi 0, %s14
      %p11 = scmp.ge.s32.totalorder %s10, 58
      %s17 = sphi 0, %s36
      %s18 = sphi 0, %s32
      %s19 = sphi 0, %s28
      %s20 = sphi 0, %s17
      %s21 = sphi 0, %s18
      %s22 = sphi 0, %s19
      %s23 = sphi 0, %s20
      %s24 = sphi 0, %s21
      %s25 = sphi 0, %s22
      %s41 = sphi 0, %s43
      %s44 = sphi 0, %s41
      %s45 = sphi 0, %s44
      %s61 = sphi 0, %s45
      %s69 = sphi 0, %s71
      %s72 = sphi 0, %s69
      %s73 = sphi 0, %s72
      %s89 = sphi 0, %s73
      %s95 = sphi 0, %s97
      %s98 = sphi 0, %s95
      %s99 = sphi 0, %s98
      %s115 = sphi 0, %s99
      %s121 = sphi 0, %s123
      %s124 = sphi 0, %s121
      %s125 = sphi 0, %s124
      %s141 = sphi 0, %s125
      %s149 = sphi 0, %s151
      %s152 = sphi 0, %s149
      %s153 = sphi 0, %s152
      %s169 = sphi 0, %s153
    $region4: #{instance_branch_forward.5} parent=1 // loop_header_branch
      %13 = sbr.rel (%p11) target = $region8
    $region5: #{instance_branch_forward.5} parent=1 // loop_body
      %s15 = ssub.s32 %s10, 1
      %s16 = ssub.s32 %s10, 2
      %s26 = sadd.s32 1, %s19
      %p27 = scmp.ge.s32.totalorder %s26, 4
      %s28 = scalar_select %p27, 0, %s26
      %s29 = sadd.s32 1, %s18
      %s30 = scalar_select %p27, %s29, %s18
      %p31 = scmp.ge.s32.totalorder %s30, 14
      %s32 = scalar_select %p31, 0, %s30
      %s33 = sadd.s32 1, %s17
      %s34 = scalar_select %p31, %s33, %s17
      %p35 = scmp.ge.s32.totalorder %s34, 1
      %s36 = scalar_select %p35, 0, %s34
      %s37 = ssub.s32 %s17, %s36
      %s38 = ssub.s32 %s19, %s28
      %s39 = sor.u32 %s37, %s38
      %p40 = scmp.eq.s32.totalorder %s39, 0
      %s42 = sadd.s32 %s41, 1
      %s43 = scalar_select %p40, %s41, %s42
      %p46 = pneg %p40
      %p47 = scmp.eq.s32.totalorder %s10, 55
      %p48 = por %p46, %p47
      %p49 = scmp.ne.s32.totalorder %s41, %s44
      %p50 = scmp.eq.s32.totalorder %s10, 0
      %p51 = por %p49, %p50
      %p52 = scmp.ne.s32.totalorder %s41, %s44
      %p53 = scmp.eq.s32.totalorder %s15, 55
      %p54 = por %p52, %p53
      %p55 = scmp.ne.s32.totalorder %s44, %s45
      %p56 = scmp.eq.s32.totalorder %s15, 0
      %p57 = por %p55, %p56
      %p58 = scmp.ne.s32.totalorder %s44, %s45
      %p59 = scmp.eq.s32.totalorder %s16, 55
      %p60 = por %p58, %p59
      %p62 = scmp.ne.s32.totalorder %s45, %s61
      %p63 = scmp.eq.s32.totalorder %s16, 0
      %p64 = por %p62, %p63
      %s65 = ssub.s32 %s19, %s28
      %s66 = ssub.s32 %s18, %s32
      %s67 = sor.u32 %s65, %s66
      %p68 = scmp.eq.s32.totalorder %s67, 0
      %s70 = sadd.s32 %s69, 1
      %s71 = scalar_select %p68, %s69, %s70
      %p74 = pneg %p68
      %p75 = scmp.eq.s32.totalorder %s10, 55
      %p76 = por %p74, %p75
      %p77 = scmp.ne.s32.totalorder %s69, %s72
      %p78 = scmp.eq.s32.totalorder %s10, 0
      %p79 = por %p77, %p78
      %p80 = scmp.ne.s32.totalorder %s69, %s72
      %p81 = scmp.eq.s32.totalorder %s15, 55
      %p82 = por %p80, %p81
      %p83 = scmp.ne.s32.totalorder %s72, %s73
      %p84 = scmp.eq.s32.totalorder %s15, 0
      %p85 = por %p83, %p84
      %p86 = scmp.ne.s32.totalorder %s72, %s73
      %p87 = scmp.eq.s32.totalorder %s16, 55
      %p88 = por %p86, %p87
      %p90 = scmp.ne.s32.totalorder %s73, %s89
      %p91 = scmp.eq.s32.totalorder %s16, 0
      %p92 = por %p90, %p91
      %s93 = ssub.s32 %s18, %s32
      %p94 = scmp.eq.s32.totalorder %s93, 0
      %s96 = sadd.s32 %s95, 1
      %s97 = scalar_select %p94, %s95, %s96
      %p100 = pneg %p94
      %p101 = scmp.eq.s32.totalorder %s10, 55
      %p102 = por %p100, %p101
      %p103 = scmp.ne.s32.totalorder %s95, %s98
      %p104 = scmp.eq.s32.totalorder %s10, 0
      %p105 = por %p103, %p104
      %p106 = scmp.ne.s32.totalorder %s95, %s98
      %p107 = scmp.eq.s32.totalorder %s15, 55
      %p108 = por %p106, %p107
      %p109 = scmp.ne.s32.totalorder %s98, %s99
      %p110 = scmp.eq.s32.totalorder %s15, 0
      %p111 = por %p109, %p110
      %p112 = scmp.ne.s32.totalorder %s98, %s99
      %p113 = scmp.eq.s32.totalorder %s16, 55
      %p114 = por %p112, %p113
      %p116 = scmp.ne.s32.totalorder %s99, %s115
      %p117 = scmp.eq.s32.totalorder %s16, 0
      %p118 = por %p116, %p117
      %s119 = ssub.s32 %s18, %s32
      %p120 = scmp.eq.s32.totalorder %s119, 0
      %s122 = sadd.s32 %s121, 1
      %s123 = scalar_select %p120, %s121, %s122
      %p126 = pneg %p120
      %p127 = scmp.eq.s32.totalorder %s10, 55
      %p128 = por %p126, %p127
      %p129 = scmp.ne.s32.totalorder %s121, %s124
      %p130 = scmp.eq.s32.totalorder %s10, 0
      %p131 = por %p129, %p130
      %p132 = scmp.ne.s32.totalorder %s121, %s124
      %p133 = scmp.eq.s32.totalorder %s15, 55
      %p134 = por %p132, %p133
      %p135 = scmp.ne.s32.totalorder %s124, %s125
      %p136 = scmp.eq.s32.totalorder %s15, 0
      %p137 = por %p135, %p136
      %p138 = scmp.ne.s32.totalorder %s124, %s125
      %p139 = scmp.eq.s32.totalorder %s16, 55
      %p140 = por %p138, %p139
      %p142 = scmp.ne.s32.totalorder %s125, %s141
      %p143 = scmp.eq.s32.totalorder %s16, 0
      %p144 = por %p142, %p143
      %s145 = ssub.s32 %s17, %s36
      %s146 = ssub.s32 %s18, %s32
      %s147 = sor.u32 %s145, %s146
      %p148 = scmp.eq.s32.totalorder %s147, 0
      %s150 = sadd.s32 %s149, 1
      %s151 = scalar_select %p148, %s149, %s150
      %p154 = pneg %p148
      %p155 = scmp.eq.s32.totalorder %s10, 55
      %p156 = por %p154, %p155
      %p157 = scmp.ne.s32.totalorder %s149, %s152
      %p158 = scmp.eq.s32.totalorder %s10, 0
      %p159 = por %p157, %p158
      %p160 = scmp.ne.s32.totalorder %s149, %s152
      %p161 = scmp.eq.s32.totalorder %s15, 55
      %p162 = por %p160, %p161
      %p163 = scmp.ne.s32.totalorder %s152, %s153
      %p164 = scmp.eq.s32.totalorder %s15, 0
      %p165 = por %p163, %p164
      %p166 = scmp.ne.s32.totalorder %s152, %s153
      %p167 = scmp.eq.s32.totalorder %s16, 55
      %p168 = por %p166, %p167
      %p170 = scmp.ne.s32.totalorder %s153, %s169
      %p171 = scmp.eq.s32.totalorder %s16, 0
      %p172 = por %p170, %p171
      %p173 = scmp.le.s32.totalorder 1, %s10
      %p174 = scmp.lt.s32.totalorder %s10, 57
      %p175 = pnand %p173, %p174
      %p176 = pneg %p175
      // Predicated region
      $region9: #{instance_branch_forward.5} parent=5 // pred_check
        _
      $region10: #{instance_branch_forward.5} parent=5 // pred_check_branch
        %178 = sbr.rel (%p175) target = $region12
      $region11: #{instance_branch_forward.5} parent=5 // pred_region
        %s179 = ssub.s32 %s10, 1
      $region12: #{instance_branch_forward.5} parent=5 // pred_fallthru
        _
      %p180 = scmp.lt.s32.totalorder %s10, 56
      // Predicated region
      $region13: #{instance_branch_forward.5} parent=5 // pred_check
        %p181 = pneg %p180
      $region14: #{instance_branch_forward.5} parent=5 // pred_check_branch
        %183 = sbr.rel (%p181) target = $region16
      $region15: #{instance_branch_forward.5} parent=5 // pred_region
        // Predicated region
        $region17: #{instance_branch_forward.5} parent=15 // pred_check
          %p184 = pneg %p51
        $region18: #{instance_branch_forward.5} parent=15 // pred_check_branch
          %186 = sbr.rel (%p184) target = $region20
        $region19: #{instance_branch_forward.5} parent=15 // pred_region
          %s187 = smul.u32 4, %s19
          %p188 = scmp.lt.s32.totalorder %s17, 0
          %s189 = scalar_select %p188, %s17, 0
          %p190 = scmp.lt.s32.totalorder %s187, 15
          %s191 = scalar_select %p190, %s187, 15
          %s192 = smul.addr %s189, 16
          %s193 = sadd.s32 %s191, %s192
          %s194 = smul.addr %s193, 4
          %s195 = scalar_lea.vmem %s0, %s194
          %s196 = smul.u32 4, %s19
        $region20: #{instance_branch_forward.5} parent=15 // pred_fallthru
          _
        // Predicated region
        $region21: #{instance_branch_forward.5} parent=15 // pred_check
          %p197 = pneg %p79
        $region22: #{instance_branch_forward.5} parent=15 // pred_check_branch
          %199 = sbr.rel (%p197) target = $region24
        $region23: #{instance_branch_forward.5} parent=15 // pred_region
          %s200 = sand.u32 %s69, 1
          %s201 = sand.u32 %s69, 1
          %s202 = smul.addr %s201, 1024
          %s203 = scalar_lea.vmem [#allocation2], %s202
          %s204 = smul.u32 64, %s19
          %s205 = smul.u32 4, %s18
          %s206 = smul.addr %s204, 56
          %s207 = sadd.s32 %s205, %s206
          %s208 = smul.addr %s207, 4
          %s209 = scalar_lea.vmem %s1, %s208
          // Predicated region
          $region25: #{instance_branch_forward.5} parent=23 // pred_check
            _
          $region26: #{instance_branch_forward.5} parent=23 // pred_check_branch
            %211 = sbr.rel (0) target = $region28
          $region27: #{instance_branch_forward.5} parent=23 // pred_region
            // Predicated region
            $region29: #{instance_branch_forward.5} parent=27 // pred_check
              _
            $region30: #{instance_branch_forward.5} parent=27 // pred_check_branch
              %213 = sbr.rel (0) target = $region32
            $region31: #{instance_branch_forward.5} parent=27 // pred_region
              loop: start=0, step=1, limit=1
              $region33: #{instance_branch_forward.5} parent=31 // loop_pre_header
                _
              $region34: #{instance_branch_forward.5} parent=31 // loop_header
                %s215 = sphi 0, %s219
                %p216 = scmp.ge.s32.totalorder %s215, 1
                %s220 = sphi %s209, %s209
                %s221 = sphi %s203, %s203
              $region35: #{instance_branch_forward.5} parent=31 // loop_header_branch
                %218 = sbr.rel (%p216) target = $region39
              $region36: #{instance_branch_forward.5} parent=31 // loop_body
                %v222 = vld [vmem:[%s220] sm:$0xff]
                %223 = vst [vmem:[%s221] sm:$0xff] %v222
                %v224 = vld [vmem:[%s220 + $0x8] sm:$0xff]
                %225 = vst [vmem:[%s221 + $0x8] sm:$0xff] %v224
                %v226 = vld [vmem:[%s220 + $0xe0] sm:$0xff]
                %227 = vst [vmem:[%s221 + $0x10] sm:$0xff] %v226
                %v228 = vld [vmem:[%s220 + $0xe8] sm:$0xff]
                %229 = vst [vmem:[%s221 + $0x18] sm:$0xff] %v228
                %v230 = vld [vmem:[%s220 + $0x1c0] sm:$0xff]
                %231 = vst [vmem:[%s221 + $0x20] sm:$0xff] %v230
                %v232 = vld [vmem:[%s220 + $0x1c8] sm:$0xff]
                %233 = vst [vmem:[%s221 + $0x28] sm:$0xff] %v232
                %v234 = vld [vmem:[%s220 + $0x2a0] sm:$0xff]
                %235 = vst [vmem:[%s221 + $0x30] sm:$0xff] %v234
                %v236 = vld [vmem:[%s220 + $0x2a8] sm:$0xff]
                %237 = vst [vmem:[%s221 + $0x38] sm:$0xff] %v236
                %v238 = vld [vmem:[%s220 + $0x380] sm:$0xff]
                %239 = vst [vmem:[%s221 + $0x40] sm:$0xff] %v238
                %v240 = vld [vmem:[%s220 + $0x388] sm:$0xff]
                %241 = vst [vmem:[%s221 + $0x48] sm:$0xff] %v240
                %v242 = vld [vmem:[%s220 + $0x460] sm:$0xff]
                %243 = vst [vmem:[%s221 + $0x50] sm:$0xff] %v242
                %v244 = vld [vmem:[%s220 + $0x468] sm:$0xff]
                %245 = vst [vmem:[%s221 + $0x58] sm:$0xff] %v244
                %v246 = vld [vmem:[%s220 + $0x540] sm:$0xff]
                %247 = vst [vmem:[%s221 + $0x60] sm:$0xff] %v246
                %v248 = vld [vmem:[%s220 + $0x548] sm:$0xff]
                %249 = vst [vmem:[%s221 + $0x68] sm:$0xff] %v248
                %v250 = vld [vmem:[%s220 + $0x620] sm:$0xff]
                %251 = vst [vmem:[%s221 + $0x70] sm:$0xff] %v250
                %v252 = vld [vmem:[%s220 + $0x628] sm:$0xff]
                %253 = vst [vmem:[%s221 + $0x78] sm:$0xff] %v252
                %v254 = vld [vmem:[%s220 + $0x700] sm:$0xff]
                %255 = vst [vmem:[%s221 + $0x80] sm:$0xff] %v254
                %v256 = vld [vmem:[%s220 + $0x708] sm:$0xff]
                %257 = vst [vmem:[%s221 + $0x88] sm:$0xff] %v256
                %v258 = vld [vmem:[%s220 + $0x7e0] sm:$0xff]
                %259 = vst [vmem:[%s221 + $0x90] sm:$0xff] %v258
                %v260 = vld [vmem:[%s220 + $0x7e8] sm:$0xff]
                %261 = vst [vmem:[%s221 + $0x98] sm:$0xff] %v260
                %v262 = vld [vmem:[%s220 + $0x8c0] sm:$0xff]
                %263 = vst [vmem:[%s221 + $0xa0] sm:$0xff] %v262
                %v264 = vld [vmem:[%s220 + $0x8c8] sm:$0xff]
                %265 = vst [vmem:[%s221 + $0xa8] sm:$0xff] %v264
                %v266 = vld [vmem:[%s220 + $0x9a0] sm:$0xff]
                %267 = vst [vmem:[%s221 + $0xb0] sm:$0xff] %v266
                %v268 = vld [vmem:[%s220 + $0x9a8] sm:$0xff]
                %269 = vst [vmem:[%s221 + $0xb8] sm:$0xff] %v268
                %v270 = vld [vmem:[%s220 + $0xa80] sm:$0xff]
                %271 = vst [vmem:[%s221 + $0xc0] sm:$0xff] %v270
                %v272 = vld [vmem:[%s220 + $0xa88] sm:$0xff]
                %273 = vst [vmem:[%s221 + $0xc8] sm:$0xff] %v272
                %v274 = vld [vmem:[%s220 + $0xb60] sm:$0xff]
                %275 = vst [vmem:[%s221 + $0xd0] sm:$0xff] %v274
                %v276 = vld [vmem:[%s220 + $0xb68] sm:$0xff]
                %277 = vst [vmem:[%s221 + $0xd8] sm:$0xff] %v276
                %v278 = vld [vmem:[%s220 + $0xc40] sm:$0xff]
                %279 = vst [vmem:[%s221 + $0xe0] sm:$0xff] %v278
                %v280 = vld [vmem:[%s220 + $0xc48] sm:$0xff]
                %281 = vst [vmem:[%s221 + $0xe8] sm:$0xff] %v280
                %v282 = vld [vmem:[%s220 + $0xd20] sm:$0xff]
                %283 = vst [vmem:[%s221 + $0xf0] sm:$0xff] %v282
                %v284 = vld [vmem:[%s220 + $0xd28] sm:$0xff]
                %285 = vst [vmem:[%s221 + $0xf8] sm:$0xff] %v284
                %v286 = vld [vmem:[%s220 + $0xe00] sm:$0xff]
                %287 = vst [vmem:[%s221 + $0x100] sm:$0xff] %v286
                %v288 = vld [vmem:[%s220 + $0xe08] sm:$0xff]
                %289 = vst [vmem:[%s221 + $0x108] sm:$0xff] %v288
                %v290 = vld [vmem:[%s220 + $0xee0] sm:$0xff]
                %291 = vst [vmem:[%s221 + $0x110] sm:$0xff] %v290
                %v292 = vld [vmem:[%s220 + $0xee8] sm:$0xff]
                %293 = vst [vmem:[%s221 + $0x118] sm:$0xff] %v292
                %v294 = vld [vmem:[%s220 + $0xfc0] sm:$0xff]
                %295 = vst [vmem:[%s221 + $0x120] sm:$0xff] %v294
                %v296 = vld [vmem:[%s220 + $0xfc8] sm:$0xff]
                %297 = vst [vmem:[%s221 + $0x128] sm:$0xff] %v296
                %v298 = vld [vmem:[%s220 + $0x10a0] sm:$0xff]
                %299 = vst [vmem:[%s221 + $0x130] sm:$0xff] %v298
                %v300 = vld [vmem:[%s220 + $0x10a8] sm:$0xff]
                %301 = vst [vmem:[%s221 + $0x138] sm:$0xff] %v300
                %v302 = vld [vmem:[%s220 + $0x1180] sm:$0xff]
                %303 = vst [vmem:[%s221 + $0x140] sm:$0xff] %v302
                %v304 = vld [vmem:[%s220 + $0x1188] sm:$0xff]
                %305 = vst [vmem:[%s221 + $0x148] sm:$0xff] %v304
                %v306 = vld [vmem:[%s220 + $0x1260] sm:$0xff]
                %307 = vst [vmem:[%s221 + $0x150] sm:$0xff] %v306
                %v308 = vld [vmem:[%s220 + $0x1268] sm:$0xff]
                %309 = vst [vmem:[%s221 + $0x158] sm:$0xff] %v308
                %v310 = vld [vmem:[%s220 + $0x1340] sm:$0xff]
                %311 = vst [vmem:[%s221 + $0x160] sm:$0xff] %v310
                %v312 = vld [vmem:[%s220 + $0x1348] sm:$0xff]
                %313 = vst [vmem:[%s221 + $0x168] sm:$0xff] %v312
                %v314 = vld [vmem:[%s220 + $0x1420] sm:$0xff]
                %315 = vst [vmem:[%s221 + $0x170] sm:$0xff] %v314
                %v316 = vld [vmem:[%s220 + $0x1428] sm:$0xff]
                %317 = vst [vmem:[%s221 + $0x178] sm:$0xff] %v316
                %v318 = vld [vmem:[%s220 + $0x1500] sm:$0xff]
                %319 = vst [vmem:[%s221 + $0x180] sm:$0xff] %v318
                %v320 = vld [vmem:[%s220 + $0x1508] sm:$0xff]
                %321 = vst [vmem:[%s221 + $0x188] sm:$0xff] %v320
                %v322 = vld [vmem:[%s220 + $0x15e0] sm:$0xff]
                %323 = vst [vmem:[%s221 + $0x190] sm:$0xff] %v322
                %v324 = vld [vmem:[%s220 + $0x15e8] sm:$0xff]
                %325 = vst [vmem:[%s221 + $0x198] sm:$0xff] %v324
                %v326 = vld [vmem:[%s220 + $0x16c0] sm:$0xff]
                %327 = vst [vmem:[%s221 + $0x1a0] sm:$0xff] %v326
                %v328 = vld [vmem:[%s220 + $0x16c8] sm:$0xff]
                %329 = vst [vmem:[%s221 + $0x1a8] sm:$0xff] %v328
                %v330 = vld [vmem:[%s220 + $0x17a0] sm:$0xff]
                %331 = vst [vmem:[%s221 + $0x1b0] sm:$0xff] %v330
                %v332 = vld [vmem:[%s220 + $0x17a8] sm:$0xff]
                %333 = vst [vmem:[%s221 + $0x1b8] sm:$0xff] %v332
                %v334 = vld [vmem:[%s220 + $0x1880] sm:$0xff]
                %335 = vst [vmem:[%s221 + $0x1c0] sm:$0xff] %v334
                %v336 = vld [vmem:[%s220 + $0x1888] sm:$0xff]
                %337 = vst [vmem:[%s221 + $0x1c8] sm:$0xff] %v336
                %v338 = vld [vmem:[%s220 + $0x1960] sm:$0xff]
                %339 = vst [vmem:[%s221 + $0x1d0] sm:$0xff] %v338
                %v340 = vld [vmem:[%s220 + $0x1968] sm:$0xff]
                %341 = vst [vmem:[%s221 + $0x1d8] sm:$0xff] %v340
                %v342 = vld [vmem:[%s220 + $0x1a40] sm:$0xff]
                %343 = vst [vmem:[%s221 + $0x1e0] sm:$0xff] %v342
                %v344 = vld [vmem:[%s220 + $0x1a48] sm:$0xff]
                %345 = vst [vmem:[%s221 + $0x1e8] sm:$0xff] %v344
                %v346 = vld [vmem:[%s220 + $0x1b20] sm:$0xff]
                %347 = vst [vmem:[%s221 + $0x1f0] sm:$0xff] %v346
                %v348 = vld [vmem:[%s220 + $0x1b28] sm:$0xff]
                %349 = vst [vmem:[%s221 + $0x1f8] sm:$0xff] %v348
                %v350 = vld [vmem:[%s220 + $0x1c00] sm:$0xff]
                %351 = vst [vmem:[%s221 + $0x200] sm:$0xff] %v350
                %v352 = vld [vmem:[%s220 + $0x1c08] sm:$0xff]
                %353 = vst [vmem:[%s221 + $0x208] sm:$0xff] %v352
                %v354 = vld [vmem:[%s220 + $0x1ce0] sm:$0xff]
                %355 = vst [vmem:[%s221 + $0x210] sm:$0xff] %v354
                %v356 = vld [vmem:[%s220 + $0x1ce8] sm:$0xff]
                %357 = vst [vmem:[%s221 + $0x218] sm:$0xff] %v356
                %v358 = vld [vmem:[%s220 + $0x1dc0] sm:$0xff]
                %359 = vst [vmem:[%s221 + $0x220] sm:$0xff] %v358
                %v360 = vld [vmem:[%s220 + $0x1dc8] sm:$0xff]
                %361 = vst [vmem:[%s221 + $0x228] sm:$0xff] %v360
                %v362 = vld [vmem:[%s220 + $0x1ea0] sm:$0xff]
                %363 = vst [vmem:[%s221 + $0x230] sm:$0xff] %v362
                %v364 = vld [vmem:[%s220 + $0x1ea8] sm:$0xff]
                %365 = vst [vmem:[%s221 + $0x238] sm:$0xff] %v364
                %v366 = vld [vmem:[%s220 + $0x1f80] sm:$0xff]
                %367 = vst [vmem:[%s221 + $0x240] sm:$0xff] %v366
                %v368 = vld [vmem:[%s220 + $0x1f88] sm:$0xff]
                %369 = vst [vmem:[%s221 + $0x248] sm:$0xff] %v368
                %v370 = vld [vmem:[%s220 + $0x2060] sm:$0xff]
                %371 = vst [vmem:[%s221 + $0x250] sm:$0xff] %v370
                %v372 = vld [vmem:[%s220 + $0x2068] sm:$0xff]
                %373 = vst [vmem:[%s221 + $0x258] sm:$0xff] %v372
                %v374 = vld [vmem:[%s220 + $0x2140] sm:$0xff]
                %375 = vst [vmem:[%s221 + $0x260] sm:$0xff] %v374
                %v376 = vld [vmem:[%s220 + $0x2148] sm:$0xff]
                %377 = vst [vmem:[%s221 + $0x268] sm:$0xff] %v376
                %v378 = vld [vmem:[%s220 + $0x2220] sm:$0xff]
                %379 = vst [vmem:[%s221 + $0x270] sm:$0xff] %v378
                %v380 = vld [vmem:[%s220 + $0x2228] sm:$0xff]
                %381 = vst [vmem:[%s221 + $0x278] sm:$0xff] %v380
                %v382 = vld [vmem:[%s220 + $0x2300] sm:$0xff]
                %383 = vst [vmem:[%s221 + $0x280] sm:$0xff] %v382
                %v384 = vld [vmem:[%s220 + $0x2308] sm:$0xff]
                %385 = vst [vmem:[%s221 + $0x288] sm:$0xff] %v384
                %v386 = vld [vmem:[%s220 + $0x23e0] sm:$0xff]
                %387 = vst [vmem:[%s221 + $0x290] sm:$0xff] %v386
                %v388 = vld [vmem:[%s220 + $0x23e8] sm:$0xff]
                %389 = vst [vmem:[%s221 + $0x298] sm:$0xff] %v388
                %v390 = vld [vmem:[%s220 + $0x24c0] sm:$0xff]
                %391 = vst [vmem:[%s221 + $0x2a0] sm:$0xff] %v390
                %v392 = vld [vmem:[%s220 + $0x24c8] sm:$0xff]
                %393 = vst [vmem:[%s221 + $0x2a8] sm:$0xff] %v392
                %v394 = vld [vmem:[%s220 + $0x25a0] sm:$0xff]
                %395 = vst [vmem:[%s221 + $0x2b0] sm:$0xff] %v394
                %v396 = vld [vmem:[%s220 + $0x25a8] sm:$0xff]
                %397 = vst [vmem:[%s221 + $0x2b8] sm:$0xff] %v396
                %v398 = vld [vmem:[%s220 + $0x2680] sm:$0xff]
                %399 = vst [vmem:[%s221 + $0x2c0] sm:$0xff] %v398
                %v400 = vld [vmem:[%s220 + $0x2688] sm:$0xff]
                %401 = vst [vmem:[%s221 + $0x2c8] sm:$0xff] %v400
                %v402 = vld [vmem:[%s220 + $0x2760] sm:$0xff]
                %403 = vst [vmem:[%s221 + $0x2d0] sm:$0xff] %v402
                %v404 = vld [vmem:[%s220 + $0x2768] sm:$0xff]
                %405 = vst [vmem:[%s221 + $0x2d8] sm:$0xff] %v404
                %v406 = vld [vmem:[%s220 + $0x2840] sm:$0xff]
                %407 = vst [vmem:[%s221 + $0x2e0] sm:$0xff] %v406
                %v408 = vld [vmem:[%s220 + $0x2848] sm:$0xff]
                %409 = vst [vmem:[%s221 + $0x2e8] sm:$0xff] %v408
                %v410 = vld [vmem:[%s220 + $0x2920] sm:$0xff]
                %411 = vst [vmem:[%s221 + $0x2f0] sm:$0xff] %v410
                %v412 = vld [vmem:[%s220 + $0x2928] sm:$0xff]
                %413 = vst [vmem:[%s221 + $0x2f8] sm:$0xff] %v412
                %v414 = vld [vmem:[%s220 + $0x2a00] sm:$0xff]
                %415 = vst [vmem:[%s221 + $0x300] sm:$0xff] %v414
                %v416 = vld [vmem:[%s220 + $0x2a08] sm:$0xff]
                %417 = vst [vmem:[%s221 + $0x308] sm:$0xff] %v416
                %v418 = vld [vmem:[%s220 + $0x2ae0] sm:$0xff]
                %419 = vst [vmem:[%s221 + $0x310] sm:$0xff] %v418
                %v420 = vld [vmem:[%s220 + $0x2ae8] sm:$0xff]
                %421 = vst [vmem:[%s221 + $0x318] sm:$0xff] %v420
                %v422 = vld [vmem:[%s220 + $0x2bc0] sm:$0xff]
                %423 = vst [vmem:[%s221 + $0x320] sm:$0xff] %v422
                %v424 = vld [vmem:[%s220 + $0x2bc8] sm:$0xff]
                %425 = vst [vmem:[%s221 + $0x328] sm:$0xff] %v424
                %v426 = vld [vmem:[%s220 + $0x2ca0] sm:$0xff]
                %427 = vst [vmem:[%s221 + $0x330] sm:$0xff] %v426
                %v428 = vld [vmem:[%s220 + $0x2ca8] sm:$0xff]
                %429 = vst [vmem:[%s221 + $0x338] sm:$0xff] %v428
                %v430 = vld [vmem:[%s220 + $0x2d80] sm:$0xff]
                %431 = vst [vmem:[%s221 + $0x340] sm:$0xff] %v430
                %v432 = vld [vmem:[%s220 + $0x2d88] sm:$0xff]
                %433 = vst [vmem:[%s221 + $0x348] sm:$0xff] %v432
                %v434 = vld [vmem:[%s220 + $0x2e60] sm:$0xff]
                %435 = vst [vmem:[%s221 + $0x350] sm:$0xff] %v434
                %v436 = vld [vmem:[%s220 + $0x2e68] sm:$0xff]
                %437 = vst [vmem:[%s221 + $0x358] sm:$0xff] %v436
                %v438 = vld [vmem:[%s220 + $0x2f40] sm:$0xff]
                %439 = vst [vmem:[%s221 + $0x360] sm:$0xff] %v438
                %v440 = vld [vmem:[%s220 + $0x2f48] sm:$0xff]
                %441 = vst [vmem:[%s221 + $0x368] sm:$0xff] %v440
                %v442 = vld [vmem:[%s220 + $0x3020] sm:$0xff]
                %443 = vst [vmem:[%s221 + $0x370] sm:$0xff] %v442
                %v444 = vld [vmem:[%s220 + $0x3028] sm:$0xff]
                %445 = vst [vmem:[%s221 + $0x378] sm:$0xff] %v444
                %v446 = vld [vmem:[%s220 + $0x3100] sm:$0xff]
                %447 = vst [vmem:[%s221 + $0x380] sm:$0xff] %v446
                %v448 = vld [vmem:[%s220 + $0x3108] sm:$0xff]
                %449 = vst [vmem:[%s221 + $0x388] sm:$0xff] %v448
                %v450 = vld [vmem:[%s220 + $0x31e0] sm:$0xff]
                %451 = vst [vmem:[%s221 + $0x390] sm:$0xff] %v450
                %v452 = vld [vmem:[%s220 + $0x31e8] sm:$0xff]
                %453 = vst [vmem:[%s221 + $0x398] sm:$0xff] %v452
                %v454 = vld [vmem:[%s220 + $0x32c0] sm:$0xff]
                %455 = vst [vmem:[%s221 + $0x3a0] sm:$0xff] %v454
                %v456 = vld [vmem:[%s220 + $0x32c8] sm:$0xff]
                %457 = vst [vmem:[%s221 + $0x3a8] sm:$0xff] %v456
                %v458 = vld [vmem:[%s220 + $0x33a0] sm:$0xff]
                %459 = vst [vmem:[%s221 + $0x3b0] sm:$0xff] %v458
                %v460 = vld [vmem:[%s220 + $0x33a8] sm:$0xff]
                %461 = vst [vmem:[%s221 + $0x3b8] sm:$0xff] %v460
                %v462 = vld [vmem:[%s220 + $0x3480] sm:$0xff]
                %463 = vst [vmem:[%s221 + $0x3c0] sm:$0xff] %v462
                %v464 = vld [vmem:[%s220 + $0x3488] sm:$0xff]
                %465 = vst [vmem:[%s221 + $0x3c8] sm:$0xff] %v464
                %v466 = vld [vmem:[%s220 + $0x3560] sm:$0xff]
                %467 = vst [vmem:[%s221 + $0x3d0] sm:$0xff] %v466
                %v468 = vld [vmem:[%s220 + $0x3568] sm:$0xff]
                %469 = vst [vmem:[%s221 + $0x3d8] sm:$0xff] %v468
                %v470 = vld [vmem:[%s220 + $0x3640] sm:$0xff]
                %471 = vst [vmem:[%s221 + $0x3e0] sm:$0xff] %v470
                %v472 = vld [vmem:[%s220 + $0x3648] sm:$0xff]
                %473 = vst [vmem:[%s221 + $0x3e8] sm:$0xff] %v472
                %v474 = vld [vmem:[%s220 + $0x3720] sm:$0xff]
                %475 = vst [vmem:[%s221 + $0x3f0] sm:$0xff] %v474
                %v476 = vld [vmem:[%s220 + $0x3728] sm:$0xff]
                %477 = vst [vmem:[%s221 + $0x3f8] sm:$0xff] %v476
              $region37: #{instance_branch_forward.5} parent=31 // loop_footer
                %s219 = sadd.s32 1, %s215
              $region38: #{instance_branch_forward.5} parent=31 // loop_footer_branch
                %214 = sbr.rel target = $region34
              $region39: #{instance_branch_forward.5} parent=31 // loop_exit
                _
            $region32: #{instance_branch_forward.5} parent=27 // pred_fallthru
              _
            // Predicated region
            $region40: #{instance_branch_forward.5} parent=27 // pred_check
              _
            $region41: #{instance_branch_forward.5} parent=27 // pred_check_branch
              %479 = sbr.rel target = $region43
            $region42: #{instance_branch_forward.5} parent=27 // pred_region
              _
            $region43: #{instance_branch_forward.5} parent=27 // pred_fallthru
              _
          $region28: #{instance_branch_forward.5} parent=23 // pred_fallthru
            _
          %480 = vnop
        $region24: #{instance_branch_forward.5} parent=15 // pred_fallthru
          _
        // Predicated region
        $region44: #{instance_branch_forward.5} parent=15 // pred_check
          %p481 = pneg %p105
        $region45: #{instance_branch_forward.5} parent=15 // pred_check_branch
          %483 = sbr.rel (%p481) target = $region47
        $region46: #{instance_branch_forward.5} parent=15 // pred_region
          %s484 = smul.u32 4, %s18
          %p485 = scmp.lt.s32.totalorder %s484, 55
          %s486 = scalar_select %p485, %s484, 55
          %s487 = scalar_lea.vmem %s2, %s486
          %s488 = smul.u32 4, %s18
        $region47: #{instance_branch_forward.5} parent=15 // pred_fallthru
          _
        // Predicated region
        $region48: #{instance_branch_forward.5} parent=15 // pred_check
          %p489 = pneg %p131
        $region49: #{instance_branch_forward.5} parent=15 // pred_check_branch
          %491 = sbr.rel (%p489) target = $region51
        $region50: #{instance_branch_forward.5} parent=15 // pred_region
          %s492 = smul.u32 4, %s18
          %p493 = scmp.lt.s32.totalorder %s492, 55
          %s494 = scalar_select %p493, %s492, 55
          %s495 = scalar_lea.vmem %s3, %s494
          %s496 = smul.u32 4, %s18
        $region51: #{instance_branch_forward.5} parent=15 // pred_fallthru
          _
      $region16: #{instance_branch_forward.5} parent=5 // pred_fallthru
        _
      %p497 = scmp.le.s32.totalorder 1, %s10
      %p498 = scmp.lt.s32.totalorder %s10, 57
      %p499 = pnand %p497, %p498
      %p500 = pneg %p499
      // Predicated region
      $region52: #{instance_branch_forward.5} parent=5 // pred_check
        _
      $region53: #{instance_branch_forward.5} parent=5 // pred_check_branch
        %502 = sbr.rel (%p499) target = $region55
      $region54: #{instance_branch_forward.5} parent=5 // pred_region
        %s503 = ssub.s32 %s10, 1
        %s504 = sand.u32 %s72, 1
        %s505 = sand.u32 %s72, 1
        %s506 = smul.addr %s505, 1024
        %s507 = scalar_lea.vmem [#allocation2], %s506
        // Predicated region
        $region56: #{instance_branch_forward.5} parent=54 // pred_check
          %p508 = pneg %p85
        $region57: #{instance_branch_forward.5} parent=54 // pred_check_branch
          %510 = sbr.rel (%p508) target = $region59
        $region58: #{instance_branch_forward.5} parent=54 // pred_region
          _
        $region59: #{instance_branch_forward.5} parent=54 // pred_fallthru
          _
        %s511 = smul.u32 4, %s22
        %p512 = scmp.lt.s32.totalorder %s20, 0
        %s513 = scalar_select %p512, %s20, 0
        %p514 = scmp.lt.s32.totalorder %s511, 15
        %s515 = scalar_select %p514, %s511, 15
        %s516 = smul.addr %s513, 16
        %s517 = sadd.s32 %s515, %s516
        %s518 = smul.addr %s517, 4
        %s519 = scalar_lea.vmem %s0, %s518
        %p520 = pneg %p57
        %p521 = pneg %p54
        %s522 = sand.u32 %s72, 1
        %s523 = sand.u32 %s72, 1
        %s524 = smul.addr %s523, 1024
        %s525 = scalar_lea.vmem [#allocation2], %s524
        %p526 = pneg %p85
        %p527 = pneg %p82
        %s528 = smul.u32 4, %s21
        %p529 = scmp.lt.s32.totalorder %s528, 55
        %s530 = scalar_select %p529, %s528, 55
        %s531 = scalar_lea.vmem %s2, %s530
        %p532 = pneg %p111
        %p533 = pneg %p108
        %s534 = smul.u32 4, %s21
        %p535 = scmp.lt.s32.totalorder %s534, 55
        %s536 = scalar_select %p535, %s534, 55
        %s537 = scalar_lea.vmem %s3, %s536
        %p538 = pneg %p137
        %p539 = pneg %p134
        %p540 = pneg %p165
        %p541 = pneg %p162
        %s542 = smul.u32 4, %s21
        %p543 = scmp.lt.s32.totalorder %s20, 0
        %s544 = scalar_select %p543, %s20, 0
        %p545 = scmp.lt.s32.totalorder %s542, 55
        %s546 = scalar_select %p545, %s542, 55
        %s547 = smul.addr %s544, 56
        %s548 = sadd.s32 %s546, %s547
        %s549 = smul.addr %s548, 8
        %s550 = scalar_lea.vmem %s4, %s549
        %s551 = smul.u32 4, %s22
        %p552 = scmp.lt.s32.totalorder %s20, 0
        %s553 = scalar_select %p552, %s20, 0
        %p554 = scmp.lt.s32.totalorder %s551, 15
        %s555 = scalar_select %p554, %s551, 15
        %s556 = smul.addr %s553, 16
        %s557 = sadd.s32 %s555, %s556
        %s558 = smul.addr %s557, 4
        %s559 = scalar_lea.vmem %s0, %s558
        %s560 = smul.u32 4, %s22
        %s561 = smul.u32 64, %s22
        %s562 = smul.u32 4, %s21
        %s563 = smul.u32 4, %s21
        %p564 = scmp.lt.s32.totalorder %s563, 55
        %s565 = scalar_select %p564, %s563, 55
        %s566 = scalar_lea.vmem %s2, %s565
        %s567 = smul.u32 4, %s21
        %s568 = smul.u32 4, %s21
        %p569 = scmp.lt.s32.totalorder %s568, 55
        %s570 = scalar_select %p569, %s568, 55
        %s571 = scalar_lea.vmem %s3, %s570
        %s572 = smul.u32 4, %s21
        %s573 = smul.u32 4, %s21
        %p574 = scmp.lt.s32.totalorder %s20, 0
        %s575 = scalar_select %p574, %s20, 0
        %p576 = scmp.lt.s32.totalorder %s573, 55
        %s577 = scalar_select %p576, %s573, 55
        %s578 = smul.addr %s575, 56
        %s579 = sadd.s32 %s577, %s578
        %s580 = smul.addr %s579, 8
        %s581 = scalar_lea.vmem %s4, %s580
        %s582 = smul.u32 4, %s21
        %p583 = scmp.eq.s32.totalorder %s22, 0
        // Predicated region
        $region60: #{instance_branch_forward.5} parent=54 // pred_check
          %p584 = pneg %p583
        $region61: #{instance_branch_forward.5} parent=54 // pred_check_branch
          %586 = sbr.rel (%p584) target = $region63
        $region62: #{instance_branch_forward.5} parent=54 // pred_region
          %587 = vst [vmem:[%s581] sm:$0xff] 0.0
          %588 = vst [vmem:[%s581 + $0x8] sm:$0xff] 0.0
          %589 = vst [vmem:[%s581 + $0x10] sm:$0xff] 0.0
          %590 = vst [vmem:[%s581 + $0x18] sm:$0xff] 0.0
        $region63: #{instance_branch_forward.5} parent=54 // pred_fallthru
          _
        %v591 = vld [vmem:[%s581] sm:$0xff]
        %v592 = vld [vmem:[%s581 + $0x8] sm:$0xff]
        %v593 = vld [vmem:[%s581 + $0x10] sm:$0xff]
        %v594 = vld [vmem:[%s581 + $0x18] sm:$0xff]
        %v595 = vld [vmem:[%s559] sm:$0xff]
        %v596 = vld [vmem:[%s559 + $0x8] sm:$0xff]
        %v597 = vld [vmem:[%s507] sm:$0xff]
        %v598 = vld [vmem:[%s507 + $0x8] sm:$0xff]
        %v599 = vld [vmem:[%s507 + $0x10] sm:$0xff]
        %v600 = vld [vmem:[%s507 + $0x18] sm:$0xff]
        %v601 = vld [vmem:[%s507 + $0x20] sm:$0xff]
        %v602 = vld [vmem:[%s507 + $0x28] sm:$0xff]
        %v603 = vld [vmem:[%s507 + $0x30] sm:$0xff]
        %v604 = vld [vmem:[%s507 + $0x38] sm:$0xff]
        %v605 = vld [vmem:[%s507 + $0x40] sm:$0xff]
        %v606 = vld [vmem:[%s507 + $0x48] sm:$0xff]
        %v607 = vld [vmem:[%s507 + $0x50] sm:$0xff]
        %v608 = vld [vmem:[%s507 + $0x58] sm:$0xff]
        %v609 = vld [vmem:[%s507 + $0x60] sm:$0xff]
        %v610 = vld [vmem:[%s507 + $0x68] sm:$0xff]
        %v611 = vld [vmem:[%s507 + $0x70] sm:$0xff]
        %v612 = vld [vmem:[%s507 + $0x78] sm:$0xff]
        %v613 = vld [vmem:[%s507 + $0x80] sm:$0xff]
        %v614 = vld [vmem:[%s507 + $0x88] sm:$0xff]
        %v615 = vld [vmem:[%s507 + $0x90] sm:$0xff]
        %v616 = vld [vmem:[%s507 + $0x98] sm:$0xff]
        %v617 = vld [vmem:[%s507 + $0xa0] sm:$0xff]
        %v618 = vld [vmem:[%s507 + $0xa8] sm:$0xff]
        %v619 = vld [vmem:[%s507 + $0xb0] sm:$0xff]
        %v620 = vld [vmem:[%s507 + $0xb8] sm:$0xff]
        %v621 = vld [vmem:[%s507 + $0xc0] sm:$0xff]
        %v622 = vld [vmem:[%s507 + $0xc8] sm:$0xff]
        %v623 = vld [vmem:[%s507 + $0xd0] sm:$0xff]
        %v624 = vld [vmem:[%s507 + $0xd8] sm:$0xff]
        %v625 = vld [vmem:[%s507 + $0xe0] sm:$0xff]
        %v626 = vld [vmem:[%s507 + $0xe8] sm:$0xff]
        %v627 = vld [vmem:[%s507 + $0xf0] sm:$0xff]
        %v628 = vld [vmem:[%s507 + $0xf8] sm:$0xff]
        %v629 = vld [vmem:[%s507 + $0x100] sm:$0xff]
        %v630 = vld [vmem:[%s507 + $0x108] sm:$0xff]
        %v631 = vld [vmem:[%s507 + $0x110] sm:$0xff]
        %v632 = vld [vmem:[%s507 + $0x118] sm:$0xff]
        %v633 = vld [vmem:[%s507 + $0x120] sm:$0xff]
        %v634 = vld [vmem:[%s507 + $0x128] sm:$0xff]
        %v635 = vld [vmem:[%s507 + $0x130] sm:$0xff]
        %v636 = vld [vmem:[%s507 + $0x138] sm:$0xff]
        %v637 = vld [vmem:[%s507 + $0x140] sm:$0xff]
        %v638 = vld [vmem:[%s507 + $0x148] sm:$0xff]
        %v639 = vld [vmem:[%s507 + $0x150] sm:$0xff]
        %v640 = vld [vmem:[%s507 + $0x158] sm:$0xff]
        %v641 = vld [vmem:[%s507 + $0x160] sm:$0xff]
        %v642 = vld [vmem:[%s507 + $0x168] sm:$0xff]
        %v643 = vld [vmem:[%s507 + $0x170] sm:$0xff]
        %v644 = vld [vmem:[%s507 + $0x178] sm:$0xff]
        %v645 = vld [vmem:[%s507 + $0x180] sm:$0xff]
        %v646 = vld [vmem:[%s507 + $0x188] sm:$0xff]
        %v647 = vld [vmem:[%s507 + $0x190] sm:$0xff]
        %v648 = vld [vmem:[%s507 + $0x198] sm:$0xff]
        %v649 = vld [vmem:[%s507 + $0x1a0] sm:$0xff]
        %v650 = vld [vmem:[%s507 + $0x1a8] sm:$0xff]
        %v651 = vld [vmem:[%s507 + $0x1b0] sm:$0xff]
        %v652 = vld [vmem:[%s507 + $0x1b8] sm:$0xff]
        %v653 = vld [vmem:[%s507 + $0x1c0] sm:$0xff]
        %v654 = vld [vmem:[%s507 + $0x1c8] sm:$0xff]
        %v655 = vld [vmem:[%s507 + $0x1d0] sm:$0xff]
        %v656 = vld [vmem:[%s507 + $0x1d8] sm:$0xff]
        %v657 = vld [vmem:[%s507 + $0x1e0] sm:$0xff]
        %v658 = vld [vmem:[%s507 + $0x1e8] sm:$0xff]
        %v659 = vld [vmem:[%s507 + $0x1f0] sm:$0xff]
        %v660 = vld [vmem:[%s507 + $0x1f8] sm:$0xff]
        %v661 = vld [vmem:[%s507 + $0x200] sm:$0xff]
        %v662 = vld [vmem:[%s507 + $0x208] sm:$0xff]
        %v663 = vld [vmem:[%s507 + $0x210] sm:$0xff]
        %v664 = vld [vmem:[%s507 + $0x218] sm:$0xff]
        %v665 = vld [vmem:[%s507 + $0x220] sm:$0xff]
        %v666 = vld [vmem:[%s507 + $0x228] sm:$0xff]
        %v667 = vld [vmem:[%s507 + $0x230] sm:$0xff]
        %v668 = vld [vmem:[%s507 + $0x238] sm:$0xff]
        %v669 = vld [vmem:[%s507 + $0x240] sm:$0xff]
        %v670 = vld [vmem:[%s507 + $0x248] sm:$0xff]
        %v671 = vld [vmem:[%s507 + $0x250] sm:$0xff]
        %v672 = vld [vmem:[%s507 + $0x258] sm:$0xff]
        %v673 = vld [vmem:[%s507 + $0x260] sm:$0xff]
        %v674 = vld [vmem:[%s507 + $0x268] sm:$0xff]
        %v675 = vld [vmem:[%s507 + $0x270] sm:$0xff]
        %v676 = vld [vmem:[%s507 + $0x278] sm:$0xff]
        %v677 = vld [vmem:[%s507 + $0x280] sm:$0xff]
        %v678 = vld [vmem:[%s507 + $0x288] sm:$0xff]
        %v679 = vld [vmem:[%s507 + $0x290] sm:$0xff]
        %v680 = vld [vmem:[%s507 + $0x298] sm:$0xff]
        %v681 = vld [vmem:[%s507 + $0x2a0] sm:$0xff]
        %v682 = vld [vmem:[%s507 + $0x2a8] sm:$0xff]
        %v683 = vld [vmem:[%s507 + $0x2b0] sm:$0xff]
        %v684 = vld [vmem:[%s507 + $0x2b8] sm:$0xff]
        %v685 = vld [vmem:[%s507 + $0x2c0] sm:$0xff]
        %v686 = vld [vmem:[%s507 + $0x2c8] sm:$0xff]
        %v687 = vld [vmem:[%s507 + $0x2d0] sm:$0xff]
        %v688 = vld [vmem:[%s507 + $0x2d8] sm:$0xff]
        %v689 = vld [vmem:[%s507 + $0x2e0] sm:$0xff]
        %v690 = vld [vmem:[%s507 + $0x2e8] sm:$0xff]
        %v691 = vld [vmem:[%s507 + $0x2f0] sm:$0xff]
        %v692 = vld [vmem:[%s507 + $0x2f8] sm:$0xff]
        %v693 = vld [vmem:[%s507 + $0x300] sm:$0xff]
        %v694 = vld [vmem:[%s507 + $0x308] sm:$0xff]
        %v695 = vld [vmem:[%s507 + $0x310] sm:$0xff]
        %v696 = vld [vmem:[%s507 + $0x318] sm:$0xff]
        %v697 = vld [vmem:[%s507 + $0x320] sm:$0xff]
        %v698 = vld [vmem:[%s507 + $0x328] sm:$0xff]
        %v699 = vld [vmem:[%s507 + $0x330] sm:$0xff]
        %v700 = vld [vmem:[%s507 + $0x338] sm:$0xff]
        %v701 = vld [vmem:[%s507 + $0x340] sm:$0xff]
        %v702 = vld [vmem:[%s507 + $0x348] sm:$0xff]
        %v703 = vld [vmem:[%s507 + $0x350] sm:$0xff]
        %v704 = vld [vmem:[%s507 + $0x358] sm:$0xff]
        %v705 = vld [vmem:[%s507 + $0x360] sm:$0xff]
        %v706 = vld [vmem:[%s507 + $0x368] sm:$0xff]
        %v707 = vld [vmem:[%s507 + $0x370] sm:$0xff]
        %v708 = vld [vmem:[%s507 + $0x378] sm:$0xff]
        %v709 = vld [vmem:[%s507 + $0x380] sm:$0xff]
        %v710 = vld [vmem:[%s507 + $0x388] sm:$0xff]
        %v711 = vld [vmem:[%s507 + $0x390] sm:$0xff]
        %v712 = vld [vmem:[%s507 + $0x398] sm:$0xff]
        %v713 = vld [vmem:[%s507 + $0x3a0] sm:$0xff]
        %v714 = vld [vmem:[%s507 + $0x3a8] sm:$0xff]
        %v715 = vld [vmem:[%s507 + $0x3b0] sm:$0xff]
        %v716 = vld [vmem:[%s507 + $0x3b8] sm:$0xff]
        %v717 = vld [vmem:[%s507 + $0x3c0] sm:$0xff]
        %v718 = vld [vmem:[%s507 + $0x3c8] sm:$0xff]
        %v719 = vld [vmem:[%s507 + $0x3d0] sm:$0xff]
        %v720 = vld [vmem:[%s507 + $0x3d8] sm:$0xff]
        %v721 = vld [vmem:[%s507 + $0x3e0] sm:$0xff]
        %v722 = vld [vmem:[%s507 + $0x3e8] sm:$0xff]
        %v723 = vld [vmem:[%s507 + $0x3f0] sm:$0xff]
        %v724 = vld [vmem:[%s507 + $0x3f8] sm:$0xff]
        %v727 = vunpack.c.l.b16 %v595
        %v728 = vunpack.c.h.b16 %v595
        %v729 = vunpack.c.l.b16 %v596
        %v730 = vunpack.c.h.b16 %v596
        %v731 = vpack.c.b16 %v727, %v727
        %v732 = vpack.c.b16 %v728, %v728
        %v733 = vpack.c.b16 %v729, %v729
        %v734 = vpack.c.b16 %v730, %v730
        %v867 = vunpack.c.l.b16 %v597
        %v868 = vunpack.c.h.b16 %v597
        %v869 = vunpack.c.l.b16 %v598
        %v870 = vunpack.c.h.b16 %v598
        %v871 = vunpack.c.l.b16 %v599
        %v872 = vunpack.c.h.b16 %v599
        %v873 = vunpack.c.l.b16 %v600
        %v874 = vunpack.c.h.b16 %v600
        %v875 = vunpack.c.l.b16 %v601
        %v876 = vunpack.c.h.b16 %v601
        %v877 = vunpack.c.l.b16 %v602
        %v878 = vunpack.c.h.b16 %v602
        %v879 = vunpack.c.l.b16 %v603
        %v880 = vunpack.c.h.b16 %v603
        %v881 = vunpack.c.l.b16 %v604
        %v882 = vunpack.c.h.b16 %v604
        %v883 = vunpack.c.l.b16 %v605
        %v884 = vunpack.c.h.b16 %v605
        %v885 = vunpack.c.l.b16 %v606
        %v886 = vunpack.c.h.b16 %v606
        %v887 = vunpack.c.l.b16 %v607
        %v888 = vunpack.c.h.b16 %v607
        %v889 = vunpack.c.l.b16 %v608
        %v890 = vunpack.c.h.b16 %v608
        %v891 = vunpack.c.l.b16 %v609
        %v892 = vunpack.c.h.b16 %v609
        %v893 = vunpack.c.l.b16 %v610
        %v894 = vunpack.c.h.b16 %v610
        %v895 = vunpack.c.l.b16 %v611
        %v896 = vunpack.c.h.b16 %v611
        %v897 = vunpack.c.l.b16 %v612
        %v898 = vunpack.c.h.b16 %v612
        %v899 = vunpack.c.l.b16 %v613
        %v900 = vunpack.c.h.b16 %v613
        %v901 = vunpack.c.l.b16 %v614
        %v902 = vunpack.c.h.b16 %v614
        %v903 = vunpack.c.l.b16 %v615
        %v904 = vunpack.c.h.b16 %v615
        %v905 = vunpack.c.l.b16 %v616
        %v906 = vunpack.c.h.b16 %v616
        %v907 = vunpack.c.l.b16 %v617
        %v908 = vunpack.c.h.b16 %v617
        %v909 = vunpack.c.l.b16 %v618
        %v910 = vunpack.c.h.b16 %v618
        %v911 = vunpack.c.l.b16 %v619
        %v912 = vunpack.c.h.b16 %v619
        %v913 = vunpack.c.l.b16 %v620
        %v914 = vunpack.c.h.b16 %v620
        %v915 = vunpack.c.l.b16 %v621
        %v916 = vunpack.c.h.b16 %v621
        %v917 = vunpack.c.l.b16 %v622
        %v918 = vunpack.c.h.b16 %v622
        %v919 = vunpack.c.l.b16 %v623
        %v920 = vunpack.c.h.b16 %v623
        %v921 = vunpack.c.l.b16 %v624
        %v922 = vunpack.c.h.b16 %v624
        %v923 = vunpack.c.l.b16 %v625
        %v924 = vunpack.c.h.b16 %v625
        %v925 = vunpack.c.l.b16 %v626
        %v926 = vunpack.c.h.b16 %v626
        %v927 = vunpack.c.l.b16 %v627
        %v928 = vunpack.c.h.b16 %v627
        %v929 = vunpack.c.l.b16 %v628
        %v930 = vunpack.c.h.b16 %v628
        %v931 = vunpack.c.l.b16 %v629
        %v932 = vunpack.c.h.b16 %v629
        %v933 = vunpack.c.l.b16 %v630
        %v934 = vunpack.c.h.b16 %v630
        %v935 = vunpack.c.l.b16 %v631
        %v936 = vunpack.c.h.b16 %v631
        %v937 = vunpack.c.l.b16 %v632
        %v938 = vunpack.c.h.b16 %v632
        %v939 = vunpack.c.l.b16 %v633
        %v940 = vunpack.c.h.b16 %v633
        %v941 = vunpack.c.l.b16 %v634
        %v942 = vunpack.c.h.b16 %v634
        %v943 = vunpack.c.l.b16 %v635
        %v944 = vunpack.c.h.b16 %v635
        %v945 = vunpack.c.l.b16 %v636
        %v946 = vunpack.c.h.b16 %v636
        %v947 = vunpack.c.l.b16 %v637
        %v948 = vunpack.c.h.b16 %v637
        %v949 = vunpack.c.l.b16 %v638
        %v950 = vunpack.c.h.b16 %v638
        %v951 = vunpack.c.l.b16 %v639
        %v952 = vunpack.c.h.b16 %v639
        %v953 = vunpack.c.l.b16 %v640
        %v954 = vunpack.c.h.b16 %v640
        %v955 = vunpack.c.l.b16 %v641
        %v956 = vunpack.c.h.b16 %v641
        %v957 = vunpack.c.l.b16 %v642
        %v958 = vunpack.c.h.b16 %v642
        %v959 = vunpack.c.l.b16 %v643
        %v960 = vunpack.c.h.b16 %v643
        %v961 = vunpack.c.l.b16 %v644
        %v962 = vunpack.c.h.b16 %v644
        %v963 = vunpack.c.l.b16 %v645
        %v964 = vunpack.c.h.b16 %v645
        %v965 = vunpack.c.l.b16 %v646
        %v966 = vunpack.c.h.b16 %v646
        %v967 = vunpack.c.l.b16 %v647
        %v968 = vunpack.c.h.b16 %v647
        %v969 = vunpack.c.l.b16 %v648
        %v970 = vunpack.c.h.b16 %v648
        %v971 = vunpack.c.l.b16 %v649
        %v972 = vunpack.c.h.b16 %v649
        %v973 = vunpack.c.l.b16 %v650
        %v974 = vunpack.c.h.b16 %v650
        %v975 = vunpack.c.l.b16 %v651
        %v976 = vunpack.c.h.b16 %v651
        %v977 = vunpack.c.l.b16 %v652
        %v978 = vunpack.c.h.b16 %v652
        %v979 = vunpack.c.l.b16 %v653
        %v980 = vunpack.c.h.b16 %v653
        %v981 = vunpack.c.l.b16 %v654
        %v982 = vunpack.c.h.b16 %v654
        %v983 = vunpack.c.l.b16 %v655
        %v984 = vunpack.c.h.b16 %v655
        %v985 = vunpack.c.l.b16 %v656
        %v986 = vunpack.c.h.b16 %v656
        %v987 = vunpack.c.l.b16 %v657
        %v988 = vunpack.c.h.b16 %v657
        %v989 = vunpack.c.l.b16 %v658
        %v990 = vunpack.c.h.b16 %v658
        %v991 = vunpack.c.l.b16 %v659
        %v992 = vunpack.c.h.b16 %v659
        %v993 = vunpack.c.l.b16 %v660
        %v994 = vunpack.c.h.b16 %v660
        %v995 = vunpack.c.l.b16 %v661
        %v996 = vunpack.c.h.b16 %v661
        %v997 = vunpack.c.l.b16 %v662
        %v998 = vunpack.c.h.b16 %v662
        %v999 = vunpack.c.l.b16 %v663
        %v1000 = vunpack.c.h.b16 %v663
        %v1001 = vunpack.c.l.b16 %v664
        %v1002 = vunpack.c.h.b16 %v664
        %v1003 = vunpack.c.l.b16 %v665
        %v1004 = vunpack.c.h.b16 %v665
        %v1005 = vunpack.c.l.b16 %v666
        %v1006 = vunpack.c.h.b16 %v666
        %v1007 = vunpack.c.l.b16 %v667
        %v1008 = vunpack.c.h.b16 %v667
        %v1009 = vunpack.c.l.b16 %v668
        %v1010 = vunpack.c.h.b16 %v668
        %v1011 = vunpack.c.l.b16 %v669
        %v1012 = vunpack.c.h.b16 %v669
        %v1013 = vunpack.c.l.b16 %v670
        %v1014 = vunpack.c.h.b16 %v670
        %v1015 = vunpack.c.l.b16 %v671
        %v1016 = vunpack.c.h.b16 %v671
        %v1017 = vunpack.c.l.b16 %v672
        %v1018 = vunpack.c.h.b16 %v672
        %v1019 = vunpack.c.l.b16 %v673
        %v1020 = vunpack.c.h.b16 %v673
        %v1021 = vunpack.c.l.b16 %v674
        %v1022 = vunpack.c.h.b16 %v674
        %v1023 = vunpack.c.l.b16 %v675
        %v1024 = vunpack.c.h.b16 %v675
        %v1025 = vunpack.c.l.b16 %v676
        %v1026 = vunpack.c.h.b16 %v676
        %v1027 = vunpack.c.l.b16 %v677
        %v1028 = vunpack.c.h.b16 %v677
        %v1029 = vunpack.c.l.b16 %v678
        %v1030 = vunpack.c.h.b16 %v678
        %v1031 = vunpack.c.l.b16 %v679
        %v1032 = vunpack.c.h.b16 %v679
        %v1033 = vunpack.c.l.b16 %v680
        %v1034 = vunpack.c.h.b16 %v680
        %v1035 = vunpack.c.l.b16 %v681
        %v1036 = vunpack.c.h.b16 %v681
        %v1037 = vunpack.c.l.b16 %v682
        %v1038 = vunpack.c.h.b16 %v682
        %v1039 = vunpack.c.l.b16 %v683
        %v1040 = vunpack.c.h.b16 %v683
        %v1041 = vunpack.c.l.b16 %v684
        %v1042 = vunpack.c.h.b16 %v684
        %v1043 = vunpack.c.l.b16 %v685
        %v1044 = vunpack.c.h.b16 %v685
        %v1045 = vunpack.c.l.b16 %v686
        %v1046 = vunpack.c.h.b16 %v686
        %v1047 = vunpack.c.l.b16 %v687
        %v1048 = vunpack.c.h.b16 %v687
        %v1049 = vunpack.c.l.b16 %v688
        %v1050 = vunpack.c.h.b16 %v688
        %v1051 = vunpack.c.l.b16 %v689
        %v1052 = vunpack.c.h.b16 %v689
        %v1053 = vunpack.c.l.b16 %v690
        %v1054 = vunpack.c.h.b16 %v690
        %v1055 = vunpack.c.l.b16 %v691
        %v1056 = vunpack.c.h.b16 %v691
        %v1057 = vunpack.c.l.b16 %v692
        %v1058 = vunpack.c.h.b16 %v692
        %v1059 = vunpack.c.l.b16 %v693
        %v1060 = vunpack.c.h.b16 %v693
        %v1061 = vunpack.c.l.b16 %v694
        %v1062 = vunpack.c.h.b16 %v694
        %v1063 = vunpack.c.l.b16 %v695
        %v1064 = vunpack.c.h.b16 %v695
        %v1065 = vunpack.c.l.b16 %v696
        %v1066 = vunpack.c.h.b16 %v696
        %v1067 = vunpack.c.l.b16 %v697
        %v1068 = vunpack.c.h.b16 %v697
        %v1069 = vunpack.c.l.b16 %v698
        %v1070 = vunpack.c.h.b16 %v698
        %v1071 = vunpack.c.l.b16 %v699
        %v1072 = vunpack.c.h.b16 %v699
        %v1073 = vunpack.c.l.b16 %v700
        %v1074 = vunpack.c.h.b16 %v700
        %v1075 = vunpack.c.l.b16 %v701
        %v1076 = vunpack.c.h.b16 %v701
        %v1077 = vunpack.c.l.b16 %v702
        %v1078 = vunpack.c.h.b16 %v702
        %v1079 = vunpack.c.l.b16 %v703
        %v1080 = vunpack.c.h.b16 %v703
        %v1081 = vunpack.c.l.b16 %v704
        %v1082 = vunpack.c.h.b16 %v704
        %v1083 = vunpack.c.l.b16 %v705
        %v1084 = vunpack.c.h.b16 %v705
        %v1085 = vunpack.c.l.b16 %v706
        %v1086 = vunpack.c.h.b16 %v706
        %v1087 = vunpack.c.l.b16 %v707
        %v1088 = vunpack.c.h.b16 %v707
        %v1089 = vunpack.c.l.b16 %v708
        %v1090 = vunpack.c.h.b16 %v708
        %v1091 = vunpack.c.l.b16 %v709
        %v1092 = vunpack.c.h.b16 %v709
        %v1093 = vunpack.c.l.b16 %v710
        %v1094 = vunpack.c.h.b16 %v710
        %v1095 = vunpack.c.l.b16 %v711
        %v1096 = vunpack.c.h.b16 %v711
        %v1097 = vunpack.c.l.b16 %v712
        %v1098 = vunpack.c.h.b16 %v712
        %v1099 = vunpack.c.l.b16 %v713
        %v1100 = vunpack.c.h.b16 %v713
        %v1101 = vunpack.c.l.b16 %v714
        %v1102 = vunpack.c.h.b16 %v714
        %v1103 = vunpack.c.l.b16 %v715
        %v1104 = vunpack.c.h.b16 %v715
        %v1105 = vunpack.c.l.b16 %v716
        %v1106 = vunpack.c.h.b16 %v716
        %v1107 = vunpack.c.l.b16 %v717
        %v1108 = vunpack.c.h.b16 %v717
        %v1109 = vunpack.c.l.b16 %v718
        %v1110 = vunpack.c.h.b16 %v718
        %v1111 = vunpack.c.l.b16 %v719
        %v1112 = vunpack.c.h.b16 %v719
        %v1113 = vunpack.c.l.b16 %v720
        %v1114 = vunpack.c.h.b16 %v720
        %v1115 = vunpack.c.l.b16 %v721
        %v1116 = vunpack.c.h.b16 %v721
        %v1117 = vunpack.c.l.b16 %v722
        %v1118 = vunpack.c.h.b16 %v722
        %v1119 = vunpack.c.l.b16 %v723
        %v1120 = vunpack.c.h.b16 %v723
        %v1121 = vunpack.c.l.b16 %v724
        %v1122 = vunpack.c.h.b16 %v724
        %v1123 = vpack.c.b16 %v871, %v867
        %v1124 = vpack.c.b16 %v872, %v868
        %v1125 = vpack.c.b16 %v873, %v869
        %v1126 = vpack.c.b16 %v874, %v870
        %v1127 = vpack.c.b16 %v879, %v875
        %v1128 = vpack.c.b16 %v880, %v876
        %v1129 = vpack.c.b16 %v881, %v877
        %v1130 = vpack.c.b16 %v882, %v878
        %v1131 = vpack.c.b16 %v887, %v883
        %v1132 = vpack.c.b16 %v888, %v884
        %v1133 = vpack.c.b16 %v889, %v885
        %v1134 = vpack.c.b16 %v890, %v886
        %v1135 = vpack.c.b16 %v895, %v891
        %v1136 = vpack.c.b16 %v896, %v892
        %v1137 = vpack.c.b16 %v897, %v893
        %v1138 = vpack.c.b16 %v898, %v894
        %v1139 = vpack.c.b16 %v903, %v899
        %v1140 = vpack.c.b16 %v904, %v900
        %v1141 = vpack.c.b16 %v905, %v901
        %v1142 = vpack.c.b16 %v906, %v902
        %v1143 = vpack.c.b16 %v911, %v907
        %v1144 = vpack.c.b16 %v912, %v908
        %v1145 = vpack.c.b16 %v913, %v909
        %v1146 = vpack.c.b16 %v914, %v910
        %v1147 = vpack.c.b16 %v919, %v915
        %v1148 = vpack.c.b16 %v920, %v916
        %v1149 = vpack.c.b16 %v921, %v917
        %v1150 = vpack.c.b16 %v922, %v918
        %v1151 = vpack.c.b16 %v927, %v923
        %v1152 = vpack.c.b16 %v928, %v924
        %v1153 = vpack.c.b16 %v929, %v925
        %v1154 = vpack.c.b16 %v930, %v926
        %v1155 = vpack.c.b16 %v935, %v931
        %v1156 = vpack.c.b16 %v936, %v932
        %v1157 = vpack.c.b16 %v937, %v933
        %v1158 = vpack.c.b16 %v938, %v934
        %v1159 = vpack.c.b16 %v943, %v939
        %v1160 = vpack.c.b16 %v944, %v940
        %v1161 = vpack.c.b16 %v945, %v941
        %v1162 = vpack.c.b16 %v946, %v942
        %v1163 = vpack.c.b16 %v951, %v947
        %v1164 = vpack.c.b16 %v952, %v948
        %v1165 = vpack.c.b16 %v953, %v949
        %v1166 = vpack.c.b16 %v954, %v950
        %v1167 = vpack.c.b16 %v959, %v955
        %v1168 = vpack.c.b16 %v960, %v956
        %v1169 = vpack.c.b16 %v961, %v957
        %v1170 = vpack.c.b16 %v962, %v958
        %v1171 = vpack.c.b16 %v967, %v963
        %v1172 = vpack.c.b16 %v968, %v964
        %v1173 = vpack.c.b16 %v969, %v965
        %v1174 = vpack.c.b16 %v970, %v966
        %v1175 = vpack.c.b16 %v975, %v971
        %v1176 = vpack.c.b16 %v976, %v972
        %v1177 = vpack.c.b16 %v977, %v973
        %v1178 = vpack.c.b16 %v978, %v974
        %v1179 = vpack.c.b16 %v983, %v979
        %v1180 = vpack.c.b16 %v984, %v980
        %v1181 = vpack.c.b16 %v985, %v981
        %v1182 = vpack.c.b16 %v986, %v982
        %v1183 = vpack.c.b16 %v991, %v987
        %v1184 = vpack.c.b16 %v992, %v988
        %v1185 = vpack.c.b16 %v993, %v989
        %v1186 = vpack.c.b16 %v994, %v990
        %v1187 = vpack.c.b16 %v999, %v995
        %v1188 = vpack.c.b16 %v1000, %v996
        %v1189 = vpack.c.b16 %v1001, %v997
        %v1190 = vpack.c.b16 %v1002, %v998
        %v1191 = vpack.c.b16 %v1007, %v1003
        %v1192 = vpack.c.b16 %v1008, %v1004
        %v1193 = vpack.c.b16 %v1009, %v1005
        %v1194 = vpack.c.b16 %v1010, %v1006
        %v1195 = vpack.c.b16 %v1015, %v1011
        %v1196 = vpack.c.b16 %v1016, %v1012
        %v1197 = vpack.c.b16 %v1017, %v1013
        %v1198 = vpack.c.b16 %v1018, %v1014
        %v1199 = vpack.c.b16 %v1023, %v1019
        %v1200 = vpack.c.b16 %v1024, %v1020
        %v1201 = vpack.c.b16 %v1025, %v1021
        %v1202 = vpack.c.b16 %v1026, %v1022
        %v1203 = vpack.c.b16 %v1031, %v1027
        %v1204 = vpack.c.b16 %v1032, %v1028
        %v1205 = vpack.c.b16 %v1033, %v1029
        %v1206 = vpack.c.b16 %v1034, %v1030
        %v1207 = vpack.c.b16 %v1039, %v1035
        %v1208 = vpack.c.b16 %v1040, %v1036
        %v1209 = vpack.c.b16 %v1041, %v1037
        %v1210 = vpack.c.b16 %v1042, %v1038
        %v1211 = vpack.c.b16 %v1047, %v1043
        %v1212 = vpack.c.b16 %v1048, %v1044
        %v1213 = vpack.c.b16 %v1049, %v1045
        %v1214 = vpack.c.b16 %v1050, %v1046
        %v1215 = vpack.c.b16 %v1055, %v1051
        %v1216 = vpack.c.b16 %v1056, %v1052
        %v1217 = vpack.c.b16 %v1057, %v1053
        %v1218 = vpack.c.b16 %v1058, %v1054
        %v1219 = vpack.c.b16 %v1063, %v1059
        %v1220 = vpack.c.b16 %v1064, %v1060
        %v1221 = vpack.c.b16 %v1065, %v1061
        %v1222 = vpack.c.b16 %v1066, %v1062
        %v1223 = vpack.c.b16 %v1071, %v1067
        %v1224 = vpack.c.b16 %v1072, %v1068
        %v1225 = vpack.c.b16 %v1073, %v1069
        %v1226 = vpack.c.b16 %v1074, %v1070
        %v1227 = vpack.c.b16 %v1079, %v1075
        %v1228 = vpack.c.b16 %v1080, %v1076
        %v1229 = vpack.c.b16 %v1081, %v1077
        %v1230 = vpack.c.b16 %v1082, %v1078
        %v1231 = vpack.c.b16 %v1087, %v1083
        %v1232 = vpack.c.b16 %v1088, %v1084
        %v1233 = vpack.c.b16 %v1089, %v1085
        %v1234 = vpack.c.b16 %v1090, %v1086
        %v1235 = vpack.c.b16 %v1095, %v1091
        %v1236 = vpack.c.b16 %v1096, %v1092
        %v1237 = vpack.c.b16 %v1097, %v1093
        %v1238 = vpack.c.b16 %v1098, %v1094
        %v1239 = vpack.c.b16 %v1103, %v1099
        %v1240 = vpack.c.b16 %v1104, %v1100
        %v1241 = vpack.c.b16 %v1105, %v1101
        %v1242 = vpack.c.b16 %v1106, %v1102
        %v1243 = vpack.c.b16 %v1111, %v1107
        %v1244 = vpack.c.b16 %v1112, %v1108
        %v1245 = vpack.c.b16 %v1113, %v1109
        %v1246 = vpack.c.b16 %v1114, %v1110
        %v1247 = vpack.c.b16 %v1119, %v1115
        %v1248 = vpack.c.b16 %v1120, %v1116
        %v1249 = vpack.c.b16 %v1121, %v1117
        %v1250 = vpack.c.b16 %v1122, %v1118
        %1379 = vmatpush.bf16.msra.mxu0 %v1151
        %1380 = vmatpush.bf16.msra.mxu0 %v1147
        %1381 = vmatpush.bf16.msra.mxu0 %v1143
        %1382 = vmatpush.bf16.msra.mxu0 %v1139
        %1383 = vmatpush.bf16.msra.mxu0 %v1135
        %1384 = vmatpush.bf16.msra.mxu0 %v1131
        %1385 = vmatpush.bf16.msra.mxu0 %v1127
        %1386 = vmatpush.bf16.msra.mxu0 %v1123
        %1387 = vmatmul.bf16.gmra.mxu0 %v731
        %v1388 = vpop.f32.mrf.mxu0
        %v1389 = vadd.f32 0.0, %v1388
        %v1390 = vpop.f32.mrf.mxu0
        %1391 = vdwg.mxu0
        %1392 = vmatpush.bf16.msra.mxu0 %v1183
        %1393 = vmatpush.bf16.msra.mxu0 %v1179
        %1394 = vmatpush.bf16.msra.mxu0 %v1175
        %1395 = vmatpush.bf16.msra.mxu0 %v1171
        %1396 = vmatpush.bf16.msra.mxu0 %v1167
        %1397 = vmatpush.bf16.msra.mxu0 %v1163
        %1398 = vmatpush.bf16.msra.mxu0 %v1159
        %1399 = vmatpush.bf16.msra.mxu0 %v1155
        %1400 = vmatmul.bf16.gmra.mxu0 %v732
        %v1401 = vpop.f32.mrf.mxu0
        %v1402 = vadd.f32 %v1389, %v1401
        %v1403 = vpop.f32.mrf.mxu0
        %1404 = vdwg.mxu0
        %1405 = vmatpush.bf16.msra.mxu0 %v1215
        %1406 = vmatpush.bf16.msra.mxu0 %v1211
        %1407 = vmatpush.bf16.msra.mxu0 %v1207
        %1408 = vmatpush.bf16.msra.mxu0 %v1203
        %1409 = vmatpush.bf16.msra.mxu0 %v1199
        %1410 = vmatpush.bf16.msra.mxu0 %v1195
        %1411 = vmatpush.bf16.msra.mxu0 %v1191
        %1412 = vmatpush.bf16.msra.mxu0 %v1187
        %1413 = vmatmul.bf16.gmra.mxu0 %v733
        %v1414 = vpop.f32.mrf.mxu0
        %v1415 = vadd.f32 %v1402, %v1414
        %v1416 = vpop.f32.mrf.mxu0
        %1417 = vdwg.mxu0
        %1418 = vmatpush.bf16.msra.mxu0 %v1247
        %1419 = vmatpush.bf16.msra.mxu0 %v1243
        %1420 = vmatpush.bf16.msra.mxu0 %v1239
        %1421 = vmatpush.bf16.msra.mxu0 %v1235
        %1422 = vmatpush.bf16.msra.mxu0 %v1231
        %1423 = vmatpush.bf16.msra.mxu0 %v1227
        %1424 = vmatpush.bf16.msra.mxu0 %v1223
        %1425 = vmatpush.bf16.msra.mxu0 %v1219
        %1426 = vmatmul.bf16.gmra.mxu0 %v734
        %v1427 = vpop.f32.mrf.mxu0
        %v1428 = vadd.f32 %v1415, %v1427
        %v1429 = vpop.f32.mrf.mxu0
        %1430 = vdwg.mxu0
        %1431 = vmatpush.bf16.msra.mxu0 %v1152
        %1432 = vmatpush.bf16.msra.mxu0 %v1148
        %1433 = vmatpush.bf16.msra.mxu0 %v1144
        %1434 = vmatpush.bf16.msra.mxu0 %v1140
        %1435 = vmatpush.bf16.msra.mxu0 %v1136
        %1436 = vmatpush.bf16.msra.mxu0 %v1132
        %1437 = vmatpush.bf16.msra.mxu0 %v1128
        %1438 = vmatpush.bf16.msra.mxu0 %v1124
        %1439 = vmatmul.bf16.gmra.mxu0 %v731
        %v1440 = vpop.f32.mrf.mxu0
        %v1441 = vadd.f32 0.0, %v1440
        %v1442 = vpop.f32.mrf.mxu0
        %1443 = vdwg.mxu0
        %1444 = vmatpush.bf16.msra.mxu0 %v1184
        %1445 = vmatpush.bf16.msra.mxu0 %v1180
        %1446 = vmatpush.bf16.msra.mxu0 %v1176
        %1447 = vmatpush.bf16.msra.mxu0 %v1172
        %1448 = vmatpush.bf16.msra.mxu0 %v1168
        %1449 = vmatpush.bf16.msra.mxu0 %v1164
        %1450 = vmatpush.bf16.msra.mxu0 %v1160
        %1451 = vmatpush.bf16.msra.mxu0 %v1156
        %1452 = vmatmul.bf16.gmra.mxu0 %v732
        %v1453 = vpop.f32.mrf.mxu0
        %v1454 = vadd.f32 %v1441, %v1453
        %v1455 = vpop.f32.mrf.mxu0
        %1456 = vdwg.mxu0
        %1457 = vmatpush.bf16.msra.mxu0 %v1216
        %1458 = vmatpush.bf16.msra.mxu0 %v1212
        %1459 = vmatpush.bf16.msra.mxu0 %v1208
        %1460 = vmatpush.bf16.msra.mxu0 %v1204
        %1461 = vmatpush.bf16.msra.mxu0 %v1200
        %1462 = vmatpush.bf16.msra.mxu0 %v1196
        %1463 = vmatpush.bf16.msra.mxu0 %v1192
        %1464 = vmatpush.bf16.msra.mxu0 %v1188
        %1465 = vmatmul.bf16.gmra.mxu0 %v733
        %v1466 = vpop.f32.mrf.mxu0
        %v1467 = vadd.f32 %v1454, %v1466
        %v1468 = vpop.f32.mrf.mxu0
        %1469 = vdwg.mxu0
        %1470 = vmatpush.bf16.msra.mxu0 %v1248
        %1471 = vmatpush.bf16.msra.mxu0 %v1244
        %1472 = vmatpush.bf16.msra.mxu0 %v1240
        %1473 = vmatpush.bf16.msra.mxu0 %v1236
        %1474 = vmatpush.bf16.msra.mxu0 %v1232
        %1475 = vmatpush.bf16.msra.mxu0 %v1228
        %1476 = vmatpush.bf16.msra.mxu0 %v1224
        %1477 = vmatpush.bf16.msra.mxu0 %v1220
        %1478 = vmatmul.bf16.gmra.mxu0 %v734
        %v1479 = vpop.f32.mrf.mxu0
        %v1480 = vadd.f32 %v1467, %v1479
        %v1481 = vpop.f32.mrf.mxu0
        %1482 = vdwg.mxu0
        %1483 = vmatpush.bf16.msra.mxu0 %v1153
        %1484 = vmatpush.bf16.msra.mxu0 %v1149
        %1485 = vmatpush.bf16.msra.mxu0 %v1145
        %1486 = vmatpush.bf16.msra.mxu0 %v1141
        %1487 = vmatpush.bf16.msra.mxu0 %v1137
        %1488 = vmatpush.bf16.msra.mxu0 %v1133
        %1489 = vmatpush.bf16.msra.mxu0 %v1129
        %1490 = vmatpush.bf16.msra.mxu0 %v1125
        %1491 = vmatmul.bf16.gmra.mxu0 %v731
        %v1492 = vpop.f32.mrf.mxu0
        %v1493 = vadd.f32 0.0, %v1492
        %v1494 = vpop.f32.mrf.mxu0
        %1495 = vdwg.mxu0
        %1496 = vmatpush.bf16.msra.mxu0 %v1185
        %1497 = vmatpush.bf16.msra.mxu0 %v1181
        %1498 = vmatpush.bf16.msra.mxu0 %v1177
        %1499 = vmatpush.bf16.msra.mxu0 %v1173
        %1500 = vmatpush.bf16.msra.mxu0 %v1169
        %1501 = vmatpush.bf16.msra.mxu0 %v1165
        %1502 = vmatpush.bf16.msra.mxu0 %v1161
        %1503 = vmatpush.bf16.msra.mxu0 %v1157
        %1504 = vmatmul.bf16.gmra.mxu0 %v732
        %v1505 = vpop.f32.mrf.mxu0
        %v1506 = vadd.f32 %v1493, %v1505
        %v1507 = vpop.f32.mrf.mxu0
        %1508 = vdwg.mxu0
        %1509 = vmatpush.bf16.msra.mxu0 %v1217
        %1510 = vmatpush.bf16.msra.mxu0 %v1213
        %1511 = vmatpush.bf16.msra.mxu0 %v1209
        %1512 = vmatpush.bf16.msra.mxu0 %v1205
        %1513 = vmatpush.bf16.msra.mxu0 %v1201
        %1514 = vmatpush.bf16.msra.mxu0 %v1197
        %1515 = vmatpush.bf16.msra.mxu0 %v1193
        %1516 = vmatpush.bf16.msra.mxu0 %v1189
        %1517 = vmatmul.bf16.gmra.mxu0 %v733
        %v1518 = vpop.f32.mrf.mxu0
        %v1519 = vadd.f32 %v1506, %v1518
        %v1520 = vpop.f32.mrf.mxu0
        %1521 = vdwg.mxu0
        %1522 = vmatpush.bf16.msra.mxu0 %v1249
        %1523 = vmatpush.bf16.msra.mxu0 %v1245
        %1524 = vmatpush.bf16.msra.mxu0 %v1241
        %1525 = vmatpush.bf16.msra.mxu0 %v1237
        %1526 = vmatpush.bf16.msra.mxu0 %v1233
        %1527 = vmatpush.bf16.msra.mxu0 %v1229
        %1528 = vmatpush.bf16.msra.mxu0 %v1225
        %1529 = vmatpush.bf16.msra.mxu0 %v1221
        %1530 = vmatmul.bf16.gmra.mxu0 %v734
        %v1531 = vpop.f32.mrf.mxu0
        %v1532 = vadd.f32 %v1519, %v1531
        %v1533 = vpop.f32.mrf.mxu0
        %1534 = vdwg.mxu0
        %1535 = vmatpush.bf16.msra.mxu0 %v1154
        %1536 = vmatpush.bf16.msra.mxu0 %v1150
        %1537 = vmatpush.bf16.msra.mxu0 %v1146
        %1538 = vmatpush.bf16.msra.mxu0 %v1142
        %1539 = vmatpush.bf16.msra.mxu0 %v1138
        %1540 = vmatpush.bf16.msra.mxu0 %v1134
        %1541 = vmatpush.bf16.msra.mxu0 %v1130
        %1542 = vmatpush.bf16.msra.mxu0 %v1126
        %1543 = vmatmul.bf16.gmra.mxu0 %v731
        %v1544 = vpop.f32.mrf.mxu0
        %v1545 = vadd.f32 0.0, %v1544
        %v1546 = vpop.f32.mrf.mxu0
        %1547 = vdwg.mxu0
        %1548 = vmatpush.bf16.msra.mxu0 %v1186
        %1549 = vmatpush.bf16.msra.mxu0 %v1182
        %1550 = vmatpush.bf16.msra.mxu0 %v1178
        %1551 = vmatpush.bf16.msra.mxu0 %v1174
        %1552 = vmatpush.bf16.msra.mxu0 %v1170
        %1553 = vmatpush.bf16.msra.mxu0 %v1166
        %1554 = vmatpush.bf16.msra.mxu0 %v1162
        %1555 = vmatpush.bf16.msra.mxu0 %v1158
        %1556 = vmatmul.bf16.gmra.mxu0 %v732
        %v1557 = vpop.f32.mrf.mxu0
        %v1558 = vadd.f32 %v1545, %v1557
        %v1559 = vpop.f32.mrf.mxu0
        %1560 = vdwg.mxu0
        %1561 = vmatpush.bf16.msra.mxu0 %v1218
        %1562 = vmatpush.bf16.msra.mxu0 %v1214
        %1563 = vmatpush.bf16.msra.mxu0 %v1210
        %1564 = vmatpush.bf16.msra.mxu0 %v1206
        %1565 = vmatpush.bf16.msra.mxu0 %v1202
        %1566 = vmatpush.bf16.msra.mxu0 %v1198
        %1567 = vmatpush.bf16.msra.mxu0 %v1194
        %1568 = vmatpush.bf16.msra.mxu0 %v1190
        %1569 = vmatmul.bf16.gmra.mxu0 %v733
        %v1570 = vpop.f32.mrf.mxu0
        %v1571 = vadd.f32 %v1558, %v1570
        %v1572 = vpop.f32.mrf.mxu0
        %1573 = vdwg.mxu0
        %1574 = vmatpush.bf16.msra.mxu0 %v1250
        %1575 = vmatpush.bf16.msra.mxu0 %v1246
        %1576 = vmatpush.bf16.msra.mxu0 %v1242
        %1577 = vmatpush.bf16.msra.mxu0 %v1238
        %1578 = vmatpush.bf16.msra.mxu0 %v1234
        %1579 = vmatpush.bf16.msra.mxu0 %v1230
        %1580 = vmatpush.bf16.msra.mxu0 %v1226
        %1581 = vmatpush.bf16.msra.mxu0 %v1222
        %1582 = vmatmul.bf16.gmra.mxu0 %v734
        %v1583 = vpop.f32.mrf.mxu0
        %v1584 = vadd.f32 %v1571, %v1583
        %v1585 = vpop.f32.mrf.mxu0
        %1586 = vdwg.mxu0
        %v1587 = vadd.f32 %v591, %v1428
        %v1588 = vadd.f32 %v592, %v1480
        %v1589 = vadd.f32 %v593, %v1532
        %v1590 = vadd.f32 %v594, %v1584
        %1591 = vst [vmem:[%s581] sm:$0xff] %v1587
        %1592 = vst [vmem:[%s581 + $0x8] sm:$0xff] %v1588
        %1593 = vst [vmem:[%s581 + $0x10] sm:$0xff] %v1589
        %1594 = vst [vmem:[%s581 + $0x18] sm:$0xff] %v1590
        %p1595 = scmp.eq.s32.totalorder %s22, 3
        // Predicated region
        $region64: #{instance_branch_forward.5} parent=54 // pred_check
          %p1596 = pneg %p1595
        $region65: #{instance_branch_forward.5} parent=54 // pred_check_branch
          %1598 = sbr.rel (%p1596) target = $region67
        $region66: #{instance_branch_forward.5} parent=54 // pred_region
          %v1599 = vld [vmem:[%s581] sm:$0xff]
          %v1600 = vld [vmem:[%s581 + $0x8] sm:$0xff]
          %v1601 = vld [vmem:[%s581 + $0x10] sm:$0xff]
          %v1602 = vld [vmem:[%s581 + $0x18] sm:$0xff]
          %v1603 = vld [vmem:[%s566] sm:$0xf]
          %v1605 = vperm.slane %v1603, 0
          %v1606 = vperm.slane %v1603, 1
          %v1607 = vperm.slane %v1603, 2
          %v1608 = vperm.slane %v1603, 3
          %v1613 = vmul.f32 %v1599, %v1605
          %v1614 = vmul.f32 %v1600, %v1606
          %v1615 = vmul.f32 %v1601, %v1607
          %v1616 = vmul.f32 %v1602, %v1608
          %v1617 = vld [vmem:[%s571] sm:$0xf]
          %v1619 = vperm.slane %v1617, 0
          %v1620 = vperm.slane %v1617, 1
          %v1621 = vperm.slane %v1617, 2
          %v1622 = vperm.slane %v1617, 3
          %v1627 = vadd.f32 %v1613, %v1619
          %v1628 = vadd.f32 %v1614, %v1620
          %v1629 = vadd.f32 %v1615, %v1621
          %v1630 = vadd.f32 %v1616, %v1622
          %1631 = vst [vmem:[%s581] sm:$0xff] %v1627
          %1632 = vst [vmem:[%s581 + $0x8] sm:$0xff] %v1628
          %1633 = vst [vmem:[%s581 + $0x10] sm:$0xff] %v1629
          %1634 = vst [vmem:[%s581 + $0x18] sm:$0xff] %v1630
        $region67: #{instance_branch_forward.5} parent=54 // pred_fallthru
          _
        %s1635 = smul.u32 4, %s21
        %p1636 = scmp.lt.s32.totalorder %s20, 0
        %s1637 = scalar_select %p1636, %s20, 0
        %p1638 = scmp.lt.s32.totalorder %s1635, 55
        %s1639 = scalar_select %p1638, %s1635, 55
        %s1640 = smul.addr %s1637, 56
        %s1641 = sadd.s32 %s1639, %s1640
        %s1642 = smul.addr %s1641, 8
        %s1643 = scalar_lea.vmem %s4, %s1642
        // Predicated region
        $region68: #{instance_branch_forward.5} parent=54 // pred_check
          %p1644 = pneg %p162
        $region69: #{instance_branch_forward.5} parent=54 // pred_check_branch
          %1646 = sbr.rel (%p1644) target = $region71
        $region70: #{instance_branch_forward.5} parent=54 // pred_region
          %s1647 = smul.u32 4, %s21
        $region71: #{instance_branch_forward.5} parent=54 // pred_fallthru
          _
      $region55: #{instance_branch_forward.5} parent=5 // pred_fallthru
        _
      %p1648 = scmp.le.s32.totalorder 2, %s10
      // Predicated region
      $region72: #{instance_branch_forward.5} parent=5 // pred_check
        %p1649 = pneg %p1648
      $region73: #{instance_branch_forward.5} parent=5 // pred_check_branch
        %1651 = sbr.rel (%p1649) target = $region75
      $region74: #{instance_branch_forward.5} parent=5 // pred_region
        %s1652 = ssub.s32 %s10, 2
        // Predicated region
        $region76: #{instance_branch_forward.5} parent=74 // pred_check
          %p1653 = pneg %p168
        $region77: #{instance_branch_forward.5} parent=74 // pred_check_branch
          %1655 = sbr.rel (%p1653) target = $region79
        $region78: #{instance_branch_forward.5} parent=74 // pred_region
          %s1656 = smul.u32 4, %s24
          %p1657 = scmp.lt.s32.totalorder %s23, 0
          %s1658 = scalar_select %p1657, %s23, 0
          %p1659 = scmp.lt.s32.totalorder %s1656, 55
          %s1660 = scalar_select %p1659, %s1656, 55
          %s1661 = smul.addr %s1658, 56
          %s1662 = sadd.s32 %s1660, %s1661
          %s1663 = smul.addr %s1662, 8
          %s1664 = scalar_lea.vmem %s4, %s1663
        $region79: #{instance_branch_forward.5} parent=74 // pred_fallthru
          _
      $region75: #{instance_branch_forward.5} parent=5 // pred_fallthru
        _
    $region6: #{instance_branch_forward.5} parent=1 // loop_footer
      %s14 = sadd.s32 1, %s10
    $region7: #{instance_branch_forward.5} parent=1 // loop_footer_branch
      %9 = sbr.rel target = $region3
    $region8: #{instance_branch_forward.5} parent=1 // loop_exit
      _

// kernel: instance_branch_forward.6
$region0: #{instance_branch_forward.6}
  #allocation0 [shape = 'u32[]', space=smem, size = 0x4, offset = 0x4, fixed_abs, tag = 'smem constant byte address 0x4 - core index']
  #allocation1 [shape = 'u32[72,128]{1,0:T(1,128)}', space=vmem, size = 0x9000, scoped, tag = 'internal scratch']
  %s0 = inlined_call_operand.vmem [shape: bf16[8,2048], index: 0, kind: input, shape index: {}]
  %s1 = inlined_call_operand.vmem [shape: bf16[2048,256], index: 1, kind: input, shape index: {}]
  %s2 = inlined_call_operand.vmem [shape: f32[1,256], index: 2, kind: input, shape index: {}]
  %s3 = inlined_call_operand.vmem [shape: f32[1,256], index: 3, kind: input, shape index: {}]
  %s4 = inlined_call_operand.vmem [shape: f32[8,256], index: 4, kind: output, shape index: {}]
  %s5 = sld [smem:[#allocation0]]
  $region57: #{instance_branch_forward.6} parent=0
    _
  %s7 = ssub.s32 1, %s5
  %s8 = scalar_select 0, %s7, %s5
  loop: start=0, step=1, limit=6
  $region2: #{instance_branch_forward.6} parent=0 // loop_pre_header
    _
  $region3: #{instance_branch_forward.6} parent=0 // loop_header
    %s10 = sphi 0, %s14
    %p11 = scmp.ge.s32.totalorder %s10, 6
    %s17 = sphi 0, %s36
    %s18 = sphi 0, %s32
    %s19 = sphi 0, %s28
    %s20 = sphi 0, %s17
    %s21 = sphi 0, %s18
    %s22 = sphi 0, %s19
    %s23 = sphi 0, %s20
    %s24 = sphi 0, %s21
    %s25 = sphi 0, %s22
    %s41 = sphi 0, %s43
    %s44 = sphi 0, %s41
    %s45 = sphi 0, %s44
    %s61 = sphi 0, %s45
    %s69 = sphi 0, %s71
    %s72 = sphi 0, %s69
    %s73 = sphi 0, %s72
    %s89 = sphi 0, %s73
    %s95 = sphi 0, %s97
    %s98 = sphi 0, %s95
    %s99 = sphi 0, %s98
    %s115 = sphi 0, %s99
    %s121 = sphi 0, %s123
    %s124 = sphi 0, %s121
    %s125 = sphi 0, %s124
    %s141 = sphi 0, %s125
    %s149 = sphi 0, %s151
    %s152 = sphi 0, %s149
    %s153 = sphi 0, %s152
    %s169 = sphi 0, %s153
  $region4: #{instance_branch_forward.6} parent=0 // loop_header_branch
    %13 = sbr.rel (%p11) target = $region8
  $region5: #{instance_branch_forward.6} parent=0 // loop_body
    %s15 = ssub.s32 %s10, 1
    %s16 = ssub.s32 %s10, 2
    %s26 = sadd.s32 1, %s19
    %p27 = scmp.ge.s32.totalorder %s26, 4
    %s28 = scalar_select %p27, 0, %s26
    %s29 = sadd.s32 1, %s18
    %s30 = scalar_select %p27, %s29, %s18
    %p31 = scmp.ge.s32.totalorder %s30, 1
    %s32 = scalar_select %p31, 0, %s30
    %s33 = sadd.s32 1, %s17
    %s34 = scalar_select %p31, %s33, %s17
    %p35 = scmp.ge.s32.totalorder %s34, 1
    %s36 = scalar_select %p35, 0, %s34
    %s37 = ssub.s32 %s17, %s36
    %s38 = ssub.s32 %s19, %s28
    %s39 = sor.u32 %s37, %s38
    %p40 = scmp.eq.s32.totalorder %s39, 0
    %s42 = sadd.s32 %s41, 1
    %s43 = scalar_select %p40, %s41, %s42
    %p46 = pneg %p40
    %p47 = scmp.eq.s32.totalorder %s10, 3
    %p48 = por %p46, %p47
    %p49 = scmp.ne.s32.totalorder %s41, %s44
    %p50 = scmp.eq.s32.totalorder %s10, 0
    %p51 = por %p49, %p50
    %p52 = scmp.ne.s32.totalorder %s41, %s44
    %p53 = scmp.eq.s32.totalorder %s15, 3
    %p54 = por %p52, %p53
    %p55 = scmp.ne.s32.totalorder %s44, %s45
    %p56 = scmp.eq.s32.totalorder %s15, 0
    %p57 = por %p55, %p56
    %p58 = scmp.ne.s32.totalorder %s44, %s45
    %p59 = scmp.eq.s32.totalorder %s16, 3
    %p60 = por %p58, %p59
    %p62 = scmp.ne.s32.totalorder %s45, %s61
    %p63 = scmp.eq.s32.totalorder %s16, 0
    %p64 = por %p62, %p63
    %s65 = ssub.s32 %s19, %s28
    %s66 = ssub.s32 %s18, %s32
    %s67 = sor.u32 %s65, %s66
    %p68 = scmp.eq.s32.totalorder %s67, 0
    %s70 = sadd.s32 %s69, 1
    %s71 = scalar_select %p68, %s69, %s70
    %p74 = pneg %p68
    %p75 = scmp.eq.s32.totalorder %s10, 3
    %p76 = por %p74, %p75
    %p77 = scmp.ne.s32.totalorder %s69, %s72
    %p78 = scmp.eq.s32.totalorder %s10, 0
    %p79 = por %p77, %p78
    %p80 = scmp.ne.s32.totalorder %s69, %s72
    %p81 = scmp.eq.s32.totalorder %s15, 3
    %p82 = por %p80, %p81
    %p83 = scmp.ne.s32.totalorder %s72, %s73
    %p84 = scmp.eq.s32.totalorder %s15, 0
    %p85 = por %p83, %p84
    %p86 = scmp.ne.s32.totalorder %s72, %s73
    %p87 = scmp.eq.s32.totalorder %s16, 3
    %p88 = por %p86, %p87
    %p90 = scmp.ne.s32.totalorder %s73, %s89
    %p91 = scmp.eq.s32.totalorder %s16, 0
    %p92 = por %p90, %p91
    %s93 = ssub.s32 %s18, %s32
    %p94 = scmp.eq.s32.totalorder %s93, 0
    %s96 = sadd.s32 %s95, 1
    %s97 = scalar_select %p94, %s95, %s96
    %p100 = pneg %p94
    %p101 = scmp.eq.s32.totalorder %s10, 3
    %p102 = por %p100, %p101
    %p103 = scmp.ne.s32.totalorder %s95, %s98
    %p104 = scmp.eq.s32.totalorder %s10, 0
    %p105 = por %p103, %p104
    %p106 = scmp.ne.s32.totalorder %s95, %s98
    %p107 = scmp.eq.s32.totalorder %s15, 3
    %p108 = por %p106, %p107
    %p109 = scmp.ne.s32.totalorder %s98, %s99
    %p110 = scmp.eq.s32.totalorder %s15, 0
    %p111 = por %p109, %p110
    %p112 = scmp.ne.s32.totalorder %s98, %s99
    %p113 = scmp.eq.s32.totalorder %s16, 3
    %p114 = por %p112, %p113
    %p116 = scmp.ne.s32.totalorder %s99, %s115
    %p117 = scmp.eq.s32.totalorder %s16, 0
    %p118 = por %p116, %p117
    %s119 = ssub.s32 %s18, %s32
    %p120 = scmp.eq.s32.totalorder %s119, 0
    %s122 = sadd.s32 %s121, 1
    %s123 = scalar_select %p120, %s121, %s122
    %p126 = pneg %p120
    %p127 = scmp.eq.s32.totalorder %s10, 3
    %p128 = por %p126, %p127
    %p129 = scmp.ne.s32.totalorder %s121, %s124
    %p130 = scmp.eq.s32.totalorder %s10, 0
    %p131 = por %p129, %p130
    %p132 = scmp.ne.s32.totalorder %s121, %s124
    %p133 = scmp.eq.s32.totalorder %s15, 3
    %p134 = por %p132, %p133
    %p135 = scmp.ne.s32.totalorder %s124, %s125
    %p136 = scmp.eq.s32.totalorder %s15, 0
    %p137 = por %p135, %p136
    %p138 = scmp.ne.s32.totalorder %s124, %s125
    %p139 = scmp.eq.s32.totalorder %s16, 3
    %p140 = por %p138, %p139
    %p142 = scmp.ne.s32.totalorder %s125, %s141
    %p143 = scmp.eq.s32.totalorder %s16, 0
    %p144 = por %p142, %p143
    %s145 = ssub.s32 %s17, %s36
    %s146 = ssub.s32 %s18, %s32
    %s147 = sor.u32 %s145, %s146
    %p148 = scmp.eq.s32.totalorder %s147, 0
    %s150 = sadd.s32 %s149, 1
    %s151 = scalar_select %p148, %s149, %s150
    %p154 = pneg %p148
    %p155 = scmp.eq.s32.totalorder %s10, 3
    %p156 = por %p154, %p155
    %p157 = scmp.ne.s32.totalorder %s149, %s152
    %p158 = scmp.eq.s32.totalorder %s10, 0
    %p159 = por %p157, %p158
    %p160 = scmp.ne.s32.totalorder %s149, %s152
    %p161 = scmp.eq.s32.totalorder %s15, 3
    %p162 = por %p160, %p161
    %p163 = scmp.ne.s32.totalorder %s152, %s153
    %p164 = scmp.eq.s32.totalorder %s15, 0
    %p165 = por %p163, %p164
    %p166 = scmp.ne.s32.totalorder %s152, %s153
    %p167 = scmp.eq.s32.totalorder %s16, 3
    %p168 = por %p166, %p167
    %p170 = scmp.ne.s32.totalorder %s153, %s169
    %p171 = scmp.eq.s32.totalorder %s16, 0
    %p172 = por %p170, %p171
    %p173 = scmp.le.s32.totalorder 1, %s10
    %p174 = scmp.lt.s32.totalorder %s10, 5
    %p175 = pnand %p173, %p174
    %p176 = pneg %p175
    // Predicated region
    $region9: #{instance_branch_forward.6} parent=5 // pred_check
      _
    $region10: #{instance_branch_forward.6} parent=5 // pred_check_branch
      %178 = sbr.rel (%p175) target = $region12
    $region11: #{instance_branch_forward.6} parent=5 // pred_region
      %s179 = ssub.s32 %s10, 1
      // Predicated region
      $region13: #{instance_branch_forward.6} parent=11 // pred_check
        %p180 = pneg %p111
      $region14: #{instance_branch_forward.6} parent=11 // pred_check_branch
        %182 = sbr.rel (%p180) target = $region16
      $region15: #{instance_branch_forward.6} parent=11 // pred_region
        %s183 = smul.u32 2, %s21
        %p184 = scmp.lt.s32.totalorder %s183, 1
        %s185 = scalar_select %p184, %s183, 1
        %s186 = scalar_lea.vmem %s2, %s185
        %s187 = smul.u32 2, %s21
      $region16: #{instance_branch_forward.6} parent=11 // pred_fallthru
        _
      // Predicated region
      $region17: #{instance_branch_forward.6} parent=11 // pred_check
        %p188 = pneg %p137
      $region18: #{instance_branch_forward.6} parent=11 // pred_check_branch
        %190 = sbr.rel (%p188) target = $region20
      $region19: #{instance_branch_forward.6} parent=11 // pred_region
        %s191 = smul.u32 2, %s21
        %p192 = scmp.lt.s32.totalorder %s191, 1
        %s193 = scalar_select %p192, %s191, 1
        %s194 = scalar_lea.vmem %s3, %s193
        %s195 = smul.u32 2, %s21
      $region20: #{instance_branch_forward.6} parent=11 // pred_fallthru
        _
    $region12: #{instance_branch_forward.6} parent=5 // pred_fallthru
      _
    %p196 = scmp.lt.s32.totalorder %s10, 4
    // Predicated region
    $region21: #{instance_branch_forward.6} parent=5 // pred_check
      %p197 = pneg %p196
    $region22: #{instance_branch_forward.6} parent=5 // pred_check_branch
      %199 = sbr.rel (%p197) target = $region24
    $region23: #{instance_branch_forward.6} parent=5 // pred_region
      // Predicated region
      $region25: #{instance_branch_forward.6} parent=23 // pred_check
        %p200 = pneg %p51
      $region26: #{instance_branch_forward.6} parent=23 // pred_check_branch
        %202 = sbr.rel (%p200) target = $region28
      $region27: #{instance_branch_forward.6} parent=23 // pred_region
        %s203 = smul.u32 4, %s19
        %p204 = scmp.lt.s32.totalorder %s17, 0
        %s205 = scalar_select %p204, %s17, 0
        %p206 = scmp.lt.s32.totalorder %s203, 15
        %s207 = scalar_select %p206, %s203, 15
        %s208 = smul.addr %s205, 16
        %s209 = sadd.s32 %s207, %s208
        %s210 = smul.addr %s209, 4
        %s211 = scalar_lea.vmem %s0, %s210
        %s212 = smul.u32 4, %s19
      $region28: #{instance_branch_forward.6} parent=23 // pred_fallthru
        _
      // Predicated region
      $region29: #{instance_branch_forward.6} parent=23 // pred_check
        %p213 = pneg %p79
      $region30: #{instance_branch_forward.6} parent=23 // pred_check_branch
        %215 = sbr.rel (%p213) target = $region32
      $region31: #{instance_branch_forward.6} parent=23 // pred_region
        %s216 = smul.u32 64, %s19
        %s217 = smul.u32 2, %s18
        %p218 = scmp.lt.s32.totalorder %s216, 255
        %s219 = scalar_select %p218, %s216, 255
        %p220 = scmp.lt.s32.totalorder %s217, 1
        %s221 = scalar_select %p220, %s217, 1
        %s222 = smul.addr %s219, 2
        %s223 = sadd.s32 %s221, %s222
        %s224 = smul.addr %s223, 4
        %s225 = scalar_lea.vmem %s1, %s224
        %s226 = smul.u32 64, %s19
        %s227 = smul.u32 2, %s18
      $region32: #{instance_branch_forward.6} parent=23 // pred_fallthru
        _
    $region24: #{instance_branch_forward.6} parent=5 // pred_fallthru
      _
    %p228 = scmp.le.s32.totalorder 1, %s10
    %p229 = scmp.lt.s32.totalorder %s10, 5
    %p230 = pnand %p228, %p229
    %p231 = pneg %p230
    // Predicated region
    $region33: #{instance_branch_forward.6} parent=5 // pred_check
      _
    $region34: #{instance_branch_forward.6} parent=5 // pred_check_branch
      %233 = sbr.rel (%p230) target = $region36
    $region35: #{instance_branch_forward.6} parent=5 // pred_region
      %s234 = ssub.s32 %s10, 1
      %s235 = smul.u32 4, %s22
      %p236 = scmp.lt.s32.totalorder %s20, 0
      %s237 = scalar_select %p236, %s20, 0
      %p238 = scmp.lt.s32.totalorder %s235, 15
      %s239 = scalar_select %p238, %s235, 15
      %s240 = smul.addr %s237, 16
      %s241 = sadd.s32 %s239, %s240
      %s242 = smul.addr %s241, 4
      %s243 = scalar_lea.vmem %s0, %s242
      %p244 = pneg %p57
      %p245 = pneg %p54
      %s246 = smul.u32 64, %s22
      %s247 = smul.u32 2, %s21
      %p248 = scmp.lt.s32.totalorder %s246, 255
      %s249 = scalar_select %p248, %s246, 255
      %p250 = scmp.lt.s32.totalorder %s247, 1
      %s251 = scalar_select %p250, %s247, 1
      %s252 = smul.addr %s249, 2
      %s253 = sadd.s32 %s251, %s252
      %s254 = smul.addr %s253, 4
      %s255 = scalar_lea.vmem %s1, %s254
      %p256 = pneg %p85
      %p257 = pneg %p82
      %s258 = smul.u32 2, %s21
      %p259 = scmp.lt.s32.totalorder %s258, 1
      %s260 = scalar_select %p259, %s258, 1
      %s261 = scalar_lea.vmem %s2, %s260
      %p262 = pneg %p111
      %p263 = pneg %p108
      %s264 = smul.u32 2, %s21
      %p265 = scmp.lt.s32.totalorder %s264, 1
      %s266 = scalar_select %p265, %s264, 1
      %s267 = scalar_lea.vmem %s3, %s266
      %p268 = pneg %p137
      %p269 = pneg %p134
      %p270 = pneg %p165
      %p271 = pneg %p162
      %s272 = smul.u32 2, %s21
      %p273 = scmp.lt.s32.totalorder %s20, 0
      %s274 = scalar_select %p273, %s20, 0
      %p275 = scmp.lt.s32.totalorder %s272, 1
      %s276 = scalar_select %p275, %s272, 1
      %s277 = smul.addr %s274, 2
      %s278 = sadd.s32 %s276, %s277
      %s279 = smul.addr %s278, 8
      %s280 = scalar_lea.vmem %s4, %s279
      %s281 = smul.u32 4, %s22
      %p282 = scmp.lt.s32.totalorder %s20, 0
      %s283 = scalar_select %p282, %s20, 0
      %p284 = scmp.lt.s32.totalorder %s281, 15
      %s285 = scalar_select %p284, %s281, 15
      %s286 = smul.addr %s283, 16
      %s287 = sadd.s32 %s285, %s286
      %s288 = smul.addr %s287, 4
      %s289 = scalar_lea.vmem %s0, %s288
      %s290 = smul.u32 4, %s22
      %s291 = smul.u32 64, %s22
      %s292 = smul.u32 2, %s21
      %p293 = scmp.lt.s32.totalorder %s291, 255
      %s294 = scalar_select %p293, %s291, 255
      %p295 = scmp.lt.s32.totalorder %s292, 1
      %s296 = scalar_select %p295, %s292, 1
      %s297 = smul.addr %s294, 2
      %s298 = sadd.s32 %s296, %s297
      %s299 = smul.addr %s298, 4
      %s300 = scalar_lea.vmem %s1, %s299
      %s301 = smul.u32 64, %s22
      %s302 = smul.u32 2, %s21
      %s303 = smul.u32 2, %s21
      %p304 = scmp.lt.s32.totalorder %s303, 1
      %s305 = scalar_select %p304, %s303, 1
      %s306 = scalar_lea.vmem %s2, %s305
      %s307 = smul.u32 2, %s21
      %s308 = smul.u32 2, %s21
      %p309 = scmp.lt.s32.totalorder %s308, 1
      %s310 = scalar_select %p309, %s308, 1
      %s311 = scalar_lea.vmem %s3, %s310
      %s312 = smul.u32 2, %s21
      %s313 = smul.u32 2, %s21
      %p314 = scmp.lt.s32.totalorder %s20, 0
      %s315 = scalar_select %p314, %s20, 0
      %p316 = scmp.lt.s32.totalorder %s313, 1
      %s317 = scalar_select %p316, %s313, 1
      %s318 = smul.addr %s315, 2
      %s319 = sadd.s32 %s317, %s318
      %s320 = smul.addr %s319, 8
      %s321 = scalar_lea.vmem %s4, %s320
      %s322 = smul.u32 2, %s21
      %p323 = scmp.eq.s32.totalorder %s22, 0
      // Predicated region
      $region37: #{instance_branch_forward.6} parent=35 // pred_check
        %p324 = pneg %p323
      $region38: #{instance_branch_forward.6} parent=35 // pred_check_branch
        %326 = sbr.rel (%p324) target = $region40
      $region39: #{instance_branch_forward.6} parent=35 // pred_region
        %327 = vst [vmem:[%s321] sm:$0xff] 0.0
        %328 = vst [vmem:[%s321 + $0x8] sm:$0xff] 0.0
      $region40: #{instance_branch_forward.6} parent=35 // pred_fallthru
        _
      %v329 = vld [vmem:[%s321] sm:$0xff]
      %v330 = vld [vmem:[%s321 + $0x8] sm:$0xff]
      %v331 = vld [vmem:[%s289] sm:$0xff]
      %v332 = vld [vmem:[%s289 + $0x8] sm:$0xff]
      %v333 = vld [vmem:[%s300] sm:$0xff]
      %v334 = vld [vmem:[%s300 + $0x8] sm:$0xff]
      %v335 = vld [vmem:[%s300 + $0x10] sm:$0xff]
      %v336 = vld [vmem:[%s300 + $0x18] sm:$0xff]
      %v337 = vld [vmem:[%s300 + $0x20] sm:$0xff]
      %v338 = vld [vmem:[%s300 + $0x28] sm:$0xff]
      %v339 = vld [vmem:[%s300 + $0x30] sm:$0xff]
      %v340 = vld [vmem:[%s300 + $0x38] sm:$0xff]
      %v341 = vld [vmem:[%s300 + $0x40] sm:$0xff]
      %v342 = vld [vmem:[%s300 + $0x48] sm:$0xff]
      %v343 = vld [vmem:[%s300 + $0x50] sm:$0xff]
      %v344 = vld [vmem:[%s300 + $0x58] sm:$0xff]
      %v345 = vld [vmem:[%s300 + $0x60] sm:$0xff]
      %v346 = vld [vmem:[%s300 + $0x68] sm:$0xff]
      %v347 = vld [vmem:[%s300 + $0x70] sm:$0xff]
      %v348 = vld [vmem:[%s300 + $0x78] sm:$0xff]
      %v349 = vld [vmem:[%s300 + $0x80] sm:$0xff]
      %v350 = vld [vmem:[%s300 + $0x88] sm:$0xff]
      %v351 = vld [vmem:[%s300 + $0x90] sm:$0xff]
      %v352 = vld [vmem:[%s300 + $0x98] sm:$0xff]
      %v353 = vld [vmem:[%s300 + $0xa0] sm:$0xff]
      %v354 = vld [vmem:[%s300 + $0xa8] sm:$0xff]
      %v355 = vld [vmem:[%s300 + $0xb0] sm:$0xff]
      %v356 = vld [vmem:[%s300 + $0xb8] sm:$0xff]
      %v357 = vld [vmem:[%s300 + $0xc0] sm:$0xff]
      %v358 = vld [vmem:[%s300 + $0xc8] sm:$0xff]
      %v359 = vld [vmem:[%s300 + $0xd0] sm:$0xff]
      %v360 = vld [vmem:[%s300 + $0xd8] sm:$0xff]
      %v361 = vld [vmem:[%s300 + $0xe0] sm:$0xff]
      %v362 = vld [vmem:[%s300 + $0xe8] sm:$0xff]
      %v363 = vld [vmem:[%s300 + $0xf0] sm:$0xff]
      %v364 = vld [vmem:[%s300 + $0xf8] sm:$0xff]
      %v365 = vld [vmem:[%s300 + $0x100] sm:$0xff]
      %v366 = vld [vmem:[%s300 + $0x108] sm:$0xff]
      %v367 = vld [vmem:[%s300 + $0x110] sm:$0xff]
      %v368 = vld [vmem:[%s300 + $0x118] sm:$0xff]
      %v369 = vld [vmem:[%s300 + $0x120] sm:$0xff]
      %v370 = vld [vmem:[%s300 + $0x128] sm:$0xff]
      %v371 = vld [vmem:[%s300 + $0x130] sm:$0xff]
      %v372 = vld [vmem:[%s300 + $0x138] sm:$0xff]
      %v373 = vld [vmem:[%s300 + $0x140] sm:$0xff]
      %v374 = vld [vmem:[%s300 + $0x148] sm:$0xff]
      %v375 = vld [vmem:[%s300 + $0x150] sm:$0xff]
      %v376 = vld [vmem:[%s300 + $0x158] sm:$0xff]
      %v377 = vld [vmem:[%s300 + $0x160] sm:$0xff]
      %v378 = vld [vmem:[%s300 + $0x168] sm:$0xff]
      %v379 = vld [vmem:[%s300 + $0x170] sm:$0xff]
      %v380 = vld [vmem:[%s300 + $0x178] sm:$0xff]
      %v381 = vld [vmem:[%s300 + $0x180] sm:$0xff]
      %v382 = vld [vmem:[%s300 + $0x188] sm:$0xff]
      %v383 = vld [vmem:[%s300 + $0x190] sm:$0xff]
      %v384 = vld [vmem:[%s300 + $0x198] sm:$0xff]
      %v385 = vld [vmem:[%s300 + $0x1a0] sm:$0xff]
      %v386 = vld [vmem:[%s300 + $0x1a8] sm:$0xff]
      %v387 = vld [vmem:[%s300 + $0x1b0] sm:$0xff]
      %v388 = vld [vmem:[%s300 + $0x1b8] sm:$0xff]
      %v389 = vld [vmem:[%s300 + $0x1c0] sm:$0xff]
      %v390 = vld [vmem:[%s300 + $0x1c8] sm:$0xff]
      %v391 = vld [vmem:[%s300 + $0x1d0] sm:$0xff]
      %v392 = vld [vmem:[%s300 + $0x1d8] sm:$0xff]
      %v393 = vld [vmem:[%s300 + $0x1e0] sm:$0xff]
      %v394 = vld [vmem:[%s300 + $0x1e8] sm:$0xff]
      %v395 = vld [vmem:[%s300 + $0x1f0] sm:$0xff]
      %v396 = vld [vmem:[%s300 + $0x1f8] sm:$0xff]
      %v399 = vunpack.c.l.b16 %v331
      %v400 = vunpack.c.h.b16 %v331
      %v401 = vunpack.c.l.b16 %v332
      %v402 = vunpack.c.h.b16 %v332
      %v403 = vpack.c.b16 %v399, %v399
      %v404 = vpack.c.b16 %v400, %v400
      %v405 = vpack.c.b16 %v401, %v401
      %v406 = vpack.c.b16 %v402, %v402
      %v475 = vunpack.c.l.b16 %v333
      %v476 = vunpack.c.h.b16 %v333
      %v477 = vunpack.c.l.b16 %v334
      %v478 = vunpack.c.h.b16 %v334
      %v479 = vunpack.c.l.b16 %v335
      %v480 = vunpack.c.h.b16 %v335
      %v481 = vunpack.c.l.b16 %v336
      %v482 = vunpack.c.h.b16 %v336
      %v483 = vunpack.c.l.b16 %v337
      %v484 = vunpack.c.h.b16 %v337
      %v485 = vunpack.c.l.b16 %v338
      %v486 = vunpack.c.h.b16 %v338
      %v487 = vunpack.c.l.b16 %v339
      %v488 = vunpack.c.h.b16 %v339
      %v489 = vunpack.c.l.b16 %v340
      %v490 = vunpack.c.h.b16 %v340
      %v491 = vunpack.c.l.b16 %v341
      %v492 = vunpack.c.h.b16 %v341
      %v493 = vunpack.c.l.b16 %v342
      %v494 = vunpack.c.h.b16 %v342
      %v495 = vunpack.c.l.b16 %v343
      %v496 = vunpack.c.h.b16 %v343
      %v497 = vunpack.c.l.b16 %v344
      %v498 = vunpack.c.h.b16 %v344
      %v499 = vunpack.c.l.b16 %v345
      %v500 = vunpack.c.h.b16 %v345
      %v501 = vunpack.c.l.b16 %v346
      %v502 = vunpack.c.h.b16 %v346
      %v503 = vunpack.c.l.b16 %v347
      %v504 = vunpack.c.h.b16 %v347
      %v505 = vunpack.c.l.b16 %v348
      %v506 = vunpack.c.h.b16 %v348
      %v507 = vunpack.c.l.b16 %v349
      %v508 = vunpack.c.h.b16 %v349
      %v509 = vunpack.c.l.b16 %v350
      %v510 = vunpack.c.h.b16 %v350
      %v511 = vunpack.c.l.b16 %v351
      %v512 = vunpack.c.h.b16 %v351
      %v513 = vunpack.c.l.b16 %v352
      %v514 = vunpack.c.h.b16 %v352
      %v515 = vunpack.c.l.b16 %v353
      %v516 = vunpack.c.h.b16 %v353
      %v517 = vunpack.c.l.b16 %v354
      %v518 = vunpack.c.h.b16 %v354
      %v519 = vunpack.c.l.b16 %v355
      %v520 = vunpack.c.h.b16 %v355
      %v521 = vunpack.c.l.b16 %v356
      %v522 = vunpack.c.h.b16 %v356
      %v523 = vunpack.c.l.b16 %v357
      %v524 = vunpack.c.h.b16 %v357
      %v525 = vunpack.c.l.b16 %v358
      %v526 = vunpack.c.h.b16 %v358
      %v527 = vunpack.c.l.b16 %v359
      %v528 = vunpack.c.h.b16 %v359
      %v529 = vunpack.c.l.b16 %v360
      %v530 = vunpack.c.h.b16 %v360
      %v531 = vunpack.c.l.b16 %v361
      %v532 = vunpack.c.h.b16 %v361
      %v533 = vunpack.c.l.b16 %v362
      %v534 = vunpack.c.h.b16 %v362
      %v535 = vunpack.c.l.b16 %v363
      %v536 = vunpack.c.h.b16 %v363
      %v537 = vunpack.c.l.b16 %v364
      %v538 = vunpack.c.h.b16 %v364
      %v539 = vunpack.c.l.b16 %v365
      %v540 = vunpack.c.h.b16 %v365
      %v541 = vunpack.c.l.b16 %v366
      %v542 = vunpack.c.h.b16 %v366
      %v543 = vunpack.c.l.b16 %v367
      %v544 = vunpack.c.h.b16 %v367
      %v545 = vunpack.c.l.b16 %v368
      %v546 = vunpack.c.h.b16 %v368
      %v547 = vunpack.c.l.b16 %v369
      %v548 = vunpack.c.h.b16 %v369
      %v549 = vunpack.c.l.b16 %v370
      %v550 = vunpack.c.h.b16 %v370
      %v551 = vunpack.c.l.b16 %v371
      %v552 = vunpack.c.h.b16 %v371
      %v553 = vunpack.c.l.b16 %v372
      %v554 = vunpack.c.h.b16 %v372
      %v555 = vunpack.c.l.b16 %v373
      %v556 = vunpack.c.h.b16 %v373
      %v557 = vunpack.c.l.b16 %v374
      %v558 = vunpack.c.h.b16 %v374
      %v559 = vunpack.c.l.b16 %v375
      %v560 = vunpack.c.h.b16 %v375
      %v561 = vunpack.c.l.b16 %v376
      %v562 = vunpack.c.h.b16 %v376
      %v563 = vunpack.c.l.b16 %v377
      %v564 = vunpack.c.h.b16 %v377
      %v565 = vunpack.c.l.b16 %v378
      %v566 = vunpack.c.h.b16 %v378
      %v567 = vunpack.c.l.b16 %v379
      %v568 = vunpack.c.h.b16 %v379
      %v569 = vunpack.c.l.b16 %v380
      %v570 = vunpack.c.h.b16 %v380
      %v571 = vunpack.c.l.b16 %v381
      %v572 = vunpack.c.h.b16 %v381
      %v573 = vunpack.c.l.b16 %v382
      %v574 = vunpack.c.h.b16 %v382
      %v575 = vunpack.c.l.b16 %v383
      %v576 = vunpack.c.h.b16 %v383
      %v577 = vunpack.c.l.b16 %v384
      %v578 = vunpack.c.h.b16 %v384
      %v579 = vunpack.c.l.b16 %v385
      %v580 = vunpack.c.h.b16 %v385
      %v581 = vunpack.c.l.b16 %v386
      %v582 = vunpack.c.h.b16 %v386
      %v583 = vunpack.c.l.b16 %v387
      %v584 = vunpack.c.h.b16 %v387
      %v585 = vunpack.c.l.b16 %v388
      %v586 = vunpack.c.h.b16 %v388
      %v587 = vunpack.c.l.b16 %v389
      %v588 = vunpack.c.h.b16 %v389
      %v589 = vunpack.c.l.b16 %v390
      %v590 = vunpack.c.h.b16 %v390
      %v591 = vunpack.c.l.b16 %v391
      %v592 = vunpack.c.h.b16 %v391
      %v593 = vunpack.c.l.b16 %v392
      %v594 = vunpack.c.h.b16 %v392
      %v595 = vunpack.c.l.b16 %v393
      %v596 = vunpack.c.h.b16 %v393
      %v597 = vunpack.c.l.b16 %v394
      %v598 = vunpack.c.h.b16 %v394
      %v599 = vunpack.c.l.b16 %v395
      %v600 = vunpack.c.h.b16 %v395
      %v601 = vunpack.c.l.b16 %v396
      %v602 = vunpack.c.h.b16 %v396
      %v603 = vpack.c.b16 %v477, %v475
      %v604 = vpack.c.b16 %v478, %v476
      %v605 = vpack.c.b16 %v481, %v479
      %v606 = vpack.c.b16 %v482, %v480
      %v607 = vpack.c.b16 %v485, %v483
      %v608 = vpack.c.b16 %v486, %v484
      %v609 = vpack.c.b16 %v489, %v487
      %v610 = vpack.c.b16 %v490, %v488
      %v611 = vpack.c.b16 %v493, %v491
      %v612 = vpack.c.b16 %v494, %v492
      %v613 = vpack.c.b16 %v497, %v495
      %v614 = vpack.c.b16 %v498, %v496
      %v615 = vpack.c.b16 %v501, %v499
      %v616 = vpack.c.b16 %v502, %v500
      %v617 = vpack.c.b16 %v505, %v503
      %v618 = vpack.c.b16 %v506, %v504
      %v619 = vpack.c.b16 %v509, %v507
      %v620 = vpack.c.b16 %v510, %v508
      %v621 = vpack.c.b16 %v513, %v511
      %v622 = vpack.c.b16 %v514, %v512
      %v623 = vpack.c.b16 %v517, %v515
      %v624 = vpack.c.b16 %v518, %v516
      %v625 = vpack.c.b16 %v521, %v519
      %v626 = vpack.c.b16 %v522, %v520
      %v627 = vpack.c.b16 %v525, %v523
      %v628 = vpack.c.b16 %v526, %v524
      %v629 = vpack.c.b16 %v529, %v527
      %v630 = vpack.c.b16 %v530, %v528
      %v631 = vpack.c.b16 %v533, %v531
      %v632 = vpack.c.b16 %v534, %v532
      %v633 = vpack.c.b16 %v537, %v535
      %v634 = vpack.c.b16 %v538, %v536
      %v635 = vpack.c.b16 %v541, %v539
      %v636 = vpack.c.b16 %v542, %v540
      %v637 = vpack.c.b16 %v545, %v543
      %v638 = vpack.c.b16 %v546, %v544
      %v639 = vpack.c.b16 %v549, %v547
      %v640 = vpack.c.b16 %v550, %v548
      %v641 = vpack.c.b16 %v553, %v551
      %v642 = vpack.c.b16 %v554, %v552
      %v643 = vpack.c.b16 %v557, %v555
      %v644 = vpack.c.b16 %v558, %v556
      %v645 = vpack.c.b16 %v561, %v559
      %v646 = vpack.c.b16 %v562, %v560
      %v647 = vpack.c.b16 %v565, %v563
      %v648 = vpack.c.b16 %v566, %v564
      %v649 = vpack.c.b16 %v569, %v567
      %v650 = vpack.c.b16 %v570, %v568
      %v651 = vpack.c.b16 %v573, %v571
      %v652 = vpack.c.b16 %v574, %v572
      %v653 = vpack.c.b16 %v577, %v575
      %v654 = vpack.c.b16 %v578, %v576
      %v655 = vpack.c.b16 %v581, %v579
      %v656 = vpack.c.b16 %v582, %v580
      %v657 = vpack.c.b16 %v585, %v583
      %v658 = vpack.c.b16 %v586, %v584
      %v659 = vpack.c.b16 %v589, %v587
      %v660 = vpack.c.b16 %v590, %v588
      %v661 = vpack.c.b16 %v593, %v591
      %v662 = vpack.c.b16 %v594, %v592
      %v663 = vpack.c.b16 %v597, %v595
      %v664 = vpack.c.b16 %v598, %v596
      %v665 = vpack.c.b16 %v601, %v599
      %v666 = vpack.c.b16 %v602, %v600
      %731 = vmatpush.bf16.msra.mxu0 %v617
      %732 = vmatpush.bf16.msra.mxu0 %v615
      %733 = vmatpush.bf16.msra.mxu0 %v613
      %734 = vmatpush.bf16.msra.mxu0 %v611
      %735 = vmatpush.bf16.msra.mxu0 %v609
      %736 = vmatpush.bf16.msra.mxu0 %v607
      %737 = vmatpush.bf16.msra.mxu0 %v605
      %738 = vmatpush.bf16.msra.mxu0 %v603
      %739 = vmatmul.bf16.gmra.mxu0 %v403
      %v740 = vpop.f32.mrf.mxu0
      %v741 = vadd.f32 0.0, %v740
      %v742 = vpop.f32.mrf.mxu0
      %743 = vdwg.mxu0
      %744 = vmatpush.bf16.msra.mxu0 %v633
      %745 = vmatpush.bf16.msra.mxu0 %v631
      %746 = vmatpush.bf16.msra.mxu0 %v629
      %747 = vmatpush.bf16.msra.mxu0 %v627
      %748 = vmatpush.bf16.msra.mxu0 %v625
      %749 = vmatpush.bf16.msra.mxu0 %v623
      %750 = vmatpush.bf16.msra.mxu0 %v621
      %751 = vmatpush.bf16.msra.mxu0 %v619
      %752 = vmatmul.bf16.gmra.mxu0 %v404
      %v753 = vpop.f32.mrf.mxu0
      %v754 = vadd.f32 %v741, %v753
      %v755 = vpop.f32.mrf.mxu0
      %756 = vdwg.mxu0
      %757 = vmatpush.bf16.msra.mxu0 %v649
      %758 = vmatpush.bf16.msra.mxu0 %v647
      %759 = vmatpush.bf16.msra.mxu0 %v645
      %760 = vmatpush.bf16.msra.mxu0 %v643
      %761 = vmatpush.bf16.msra.mxu0 %v641
      %762 = vmatpush.bf16.msra.mxu0 %v639
      %763 = vmatpush.bf16.msra.mxu0 %v637
      %764 = vmatpush.bf16.msra.mxu0 %v635
      %765 = vmatmul.bf16.gmra.mxu0 %v405
      %v766 = vpop.f32.mrf.mxu0
      %v767 = vadd.f32 %v754, %v766
      %v768 = vpop.f32.mrf.mxu0
      %769 = vdwg.mxu0
      %770 = vmatpush.bf16.msra.mxu0 %v665
      %771 = vmatpush.bf16.msra.mxu0 %v663
      %772 = vmatpush.bf16.msra.mxu0 %v661
      %773 = vmatpush.bf16.msra.mxu0 %v659
      %774 = vmatpush.bf16.msra.mxu0 %v657
      %775 = vmatpush.bf16.msra.mxu0 %v655
      %776 = vmatpush.bf16.msra.mxu0 %v653
      %777 = vmatpush.bf16.msra.mxu0 %v651
      %778 = vmatmul.bf16.gmra.mxu0 %v406
      %v779 = vpop.f32.mrf.mxu0
      %v780 = vadd.f32 %v767, %v779
      %v781 = vpop.f32.mrf.mxu0
      %782 = vdwg.mxu0
      %783 = vmatpush.bf16.msra.mxu0 %v618
      %784 = vmatpush.bf16.msra.mxu0 %v616
      %785 = vmatpush.bf16.msra.mxu0 %v614
      %786 = vmatpush.bf16.msra.mxu0 %v612
      %787 = vmatpush.bf16.msra.mxu0 %v610
      %788 = vmatpush.bf16.msra.mxu0 %v608
      %789 = vmatpush.bf16.msra.mxu0 %v606
      %790 = vmatpush.bf16.msra.mxu0 %v604
      %791 = vmatmul.bf16.gmra.mxu0 %v403
      %v792 = vpop.f32.mrf.mxu0
      %v793 = vadd.f32 0.0, %v792
      %v794 = vpop.f32.mrf.mxu0
      %795 = vdwg.mxu0
      %796 = vmatpush.bf16.msra.mxu0 %v634
      %797 = vmatpush.bf16.msra.mxu0 %v632
      %798 = vmatpush.bf16.msra.mxu0 %v630
      %799 = vmatpush.bf16.msra.mxu0 %v628
      %800 = vmatpush.bf16.msra.mxu0 %v626
      %801 = vmatpush.bf16.msra.mxu0 %v624
      %802 = vmatpush.bf16.msra.mxu0 %v622
      %803 = vmatpush.bf16.msra.mxu0 %v620
      %804 = vmatmul.bf16.gmra.mxu0 %v404
      %v805 = vpop.f32.mrf.mxu0
      %v806 = vadd.f32 %v793, %v805
      %v807 = vpop.f32.mrf.mxu0
      %808 = vdwg.mxu0
      %809 = vmatpush.bf16.msra.mxu0 %v650
      %810 = vmatpush.bf16.msra.mxu0 %v648
      %811 = vmatpush.bf16.msra.mxu0 %v646
      %812 = vmatpush.bf16.msra.mxu0 %v644
      %813 = vmatpush.bf16.msra.mxu0 %v642
      %814 = vmatpush.bf16.msra.mxu0 %v640
      %815 = vmatpush.bf16.msra.mxu0 %v638
      %816 = vmatpush.bf16.msra.mxu0 %v636
      %817 = vmatmul.bf16.gmra.mxu0 %v405
      %v818 = vpop.f32.mrf.mxu0
      %v819 = vadd.f32 %v806, %v818
      %v820 = vpop.f32.mrf.mxu0
      %821 = vdwg.mxu0
      %822 = vmatpush.bf16.msra.mxu0 %v666
      %823 = vmatpush.bf16.msra.mxu0 %v664
      %824 = vmatpush.bf16.msra.mxu0 %v662
      %825 = vmatpush.bf16.msra.mxu0 %v660
      %826 = vmatpush.bf16.msra.mxu0 %v658
      %827 = vmatpush.bf16.msra.mxu0 %v656
      %828 = vmatpush.bf16.msra.mxu0 %v654
      %829 = vmatpush.bf16.msra.mxu0 %v652
      %830 = vmatmul.bf16.gmra.mxu0 %v406
      %v831 = vpop.f32.mrf.mxu0
      %v832 = vadd.f32 %v819, %v831
      %v833 = vpop.f32.mrf.mxu0
      %834 = vdwg.mxu0
      %v835 = vadd.f32 %v329, %v780
      %v836 = vadd.f32 %v330, %v832
      %837 = vst [vmem:[%s321] sm:$0xff] %v835
      %838 = vst [vmem:[%s321 + $0x8] sm:$0xff] %v836
      %p839 = scmp.eq.s32.totalorder %s22, 3
      // Predicated region
      $region41: #{instance_branch_forward.6} parent=35 // pred_check
        %p840 = pneg %p839
      $region42: #{instance_branch_forward.6} parent=35 // pred_check_branch
        %842 = sbr.rel (%p840) target = $region44
      $region43: #{instance_branch_forward.6} parent=35 // pred_region
        %v843 = vld [vmem:[%s321] sm:$0xff]
        %v844 = vld [vmem:[%s321 + $0x8] sm:$0xff]
        %v845 = vld [vmem:[%s306] sm:$0x3]
        %v847 = vperm.slane %v845, 0
        %v848 = vperm.slane %v845, 1
        %v851 = vmul.f32 %v843, %v847
        %v852 = vmul.f32 %v844, %v848
        %v853 = vld [vmem:[%s311] sm:$0x3]
        %v855 = vperm.slane %v853, 0
        %v856 = vperm.slane %v853, 1
        %v859 = vadd.f32 %v851, %v855
        %v860 = vadd.f32 %v852, %v856
        %v861 = vmax.f32 %v859, 0.0
        %v862 = vmax.f32 %v860, 0.0
        %863 = vst [vmem:[%s321] sm:$0xff] %v861
        %864 = vst [vmem:[%s321 + $0x8] sm:$0xff] %v862
      $region44: #{instance_branch_forward.6} parent=35 // pred_fallthru
        _
      %s865 = smul.u32 2, %s21
      %p866 = scmp.lt.s32.totalorder %s20, 0
      %s867 = scalar_select %p866, %s20, 0
      %p868 = scmp.lt.s32.totalorder %s865, 1
      %s869 = scalar_select %p868, %s865, 1
      %s870 = smul.addr %s867, 2
      %s871 = sadd.s32 %s869, %s870
      %s872 = smul.addr %s871, 8
      %s873 = scalar_lea.vmem %s4, %s872
      // Predicated region
      $region45: #{instance_branch_forward.6} parent=35 // pred_check
        %p874 = pneg %p162
      $region46: #{instance_branch_forward.6} parent=35 // pred_check_branch
        %876 = sbr.rel (%p874) target = $region48
      $region47: #{instance_branch_forward.6} parent=35 // pred_region
        %s877 = smul.u32 2, %s21
      $region48: #{instance_branch_forward.6} parent=35 // pred_fallthru
        _
      // Predicated region
      $region49: #{instance_branch_forward.6} parent=35 // pred_check
        %p878 = pneg %p162
      $region50: #{instance_branch_forward.6} parent=35 // pred_check_branch
        %880 = sbr.rel (%p878) target = $region52
      $region51: #{instance_branch_forward.6} parent=35 // pred_region
        %s881 = smul.u32 2, %s21
        %p882 = scmp.lt.s32.totalorder %s20, 0
        %s883 = scalar_select %p882, %s20, 0
        %p884 = scmp.lt.s32.totalorder %s881, 1
        %s885 = scalar_select %p884, %s881, 1
        %s886 = smul.addr %s883, 2
        %s887 = sadd.s32 %s885, %s886
        %s888 = smul.addr %s887, 8
        %s889 = scalar_lea.vmem %s4, %s888
      $region52: #{instance_branch_forward.6} parent=35 // pred_fallthru
        _
    $region36: #{instance_branch_forward.6} parent=5 // pred_fallthru
      _
    %p890 = scmp.le.s32.totalorder 2, %s10
    // Predicated region
    $region53: #{instance_branch_forward.6} parent=5 // pred_check
      %p891 = pneg %p890
    $region54: #{instance_branch_forward.6} parent=5 // pred_check_branch
      %893 = sbr.rel (%p891) target = $region56
    $region55: #{instance_branch_forward.6} parent=5 // pred_region
      %s894 = ssub.s32 %s10, 2
    $region56: #{instance_branch_forward.6} parent=5 // pred_fallthru
      _
  $region6: #{instance_branch_forward.6} parent=0 // loop_footer
    %s14 = sadd.s32 1, %s10
  $region7: #{instance_branch_forward.6} parent=0 // loop_footer_branch
    %9 = sbr.rel target = $region3
  $region8: #{instance_branch_forward.6} parent=0 // loop_exit
    _

// kernel: instance_branch_forward.7
$region0: #{instance_branch_forward.7}
  #allocation0 [shape = 'u32[]', space=smem, size = 0x4, offset = 0x4, fixed_abs, tag = 'smem constant byte address 0x4 - core index']
  #allocation1 [shape = 'u32[72,128]{1,0:T(1,128)}', space=vmem, size = 0x9000, scoped, tag = 'internal scratch']
  %s0 = inlined_call_operand.vmem [shape: bf16[8,256], index: 0, kind: input, shape index: {}]
  %s1 = inlined_call_operand.vmem [shape: bf16[8,256], index: 1, kind: input, shape index: {}]
  %s2 = inlined_call_operand.vmem [shape: bf16[8,256], index: 2, kind: input, shape index: {}]
  %s3 = inlined_call_operand.vmem [shape: bf16[8,256], index: 3, kind: input, shape index: {}]
  %s4 = inlined_call_operand.vmem [shape: bf16[8,256], index: 4, kind: input, shape index: {}]
  %s5 = inlined_call_operand.vmem [shape: bf16[5,256,256], index: 5, kind: input, shape index: {}]
  %s6 = inlined_call_operand.vmem [shape: bf16[256,128], index: 6, kind: input, shape index: {}]
  %s7 = inlined_call_operand.vmem [shape: f32[8,128], index: 7, kind: output, shape index: {}]
  %s8 = sld [smem:[#allocation0]]
  $region38: #{instance_branch_forward.7} parent=0
    _
  %s10 = ssub.s32 1, %s8
  %s11 = scalar_select 0, %s10, %s8
  // Predicated region
  $region2: #{instance_branch_forward.7} parent=0 // pred_check
    _
  $region3: #{instance_branch_forward.7} parent=0 // pred_check_branch
    %13 = sbr.rel (0) target = $region5
  $region4: #{instance_branch_forward.7} parent=0 // pred_region
    _
  $region5: #{instance_branch_forward.7} parent=0 // pred_fallthru
    _
  // Predicated region
  $region6: #{instance_branch_forward.7} parent=0 // pred_check
    _
  $region7: #{instance_branch_forward.7} parent=0 // pred_check_branch
    %15 = sbr.rel (0) target = $region9
  $region8: #{instance_branch_forward.7} parent=0 // pred_region
    _
  $region9: #{instance_branch_forward.7} parent=0 // pred_fallthru
    _
  // Predicated region
  $region10: #{instance_branch_forward.7} parent=0 // pred_check
    _
  $region11: #{instance_branch_forward.7} parent=0 // pred_check_branch
    %17 = sbr.rel (0) target = $region13
  $region12: #{instance_branch_forward.7} parent=0 // pred_region
    _
  $region13: #{instance_branch_forward.7} parent=0 // pred_fallthru
    _
  // Predicated region
  $region14: #{instance_branch_forward.7} parent=0 // pred_check
    _
  $region15: #{instance_branch_forward.7} parent=0 // pred_check_branch
    %19 = sbr.rel (0) target = $region17
  $region16: #{instance_branch_forward.7} parent=0 // pred_region
    _
  $region17: #{instance_branch_forward.7} parent=0 // pred_fallthru
    _
  // Predicated region
  $region18: #{instance_branch_forward.7} parent=0 // pred_check
    _
  $region19: #{instance_branch_forward.7} parent=0 // pred_check_branch
    %21 = sbr.rel (0) target = $region21
  $region20: #{instance_branch_forward.7} parent=0 // pred_region
    _
  $region21: #{instance_branch_forward.7} parent=0 // pred_fallthru
    _
  // Predicated region
  $region22: #{instance_branch_forward.7} parent=0 // pred_check
    _
  $region23: #{instance_branch_forward.7} parent=0 // pred_check_branch
    %23 = sbr.rel (0) target = $region25
  $region24: #{instance_branch_forward.7} parent=0 // pred_region
    _
  $region25: #{instance_branch_forward.7} parent=0 // pred_fallthru
    _
  // Predicated region
  $region26: #{instance_branch_forward.7} parent=0 // pred_check
    _
  $region27: #{instance_branch_forward.7} parent=0 // pred_check_branch
    %25 = sbr.rel (0) target = $region29
  $region28: #{instance_branch_forward.7} parent=0 // pred_region
    _
  $region29: #{instance_branch_forward.7} parent=0 // pred_fallthru
    _
  %v26 = vld [vmem:[%s0] sm:$0xff]
  %v27 = vld [vmem:[%s5] sm:$0xff]
  %v28 = vld [vmem:[%s5 + $0x8] sm:$0xff]
  %v29 = vld [vmem:[%s5 + $0x10] sm:$0xff]
  %v30 = vld [vmem:[%s5 + $0x18] sm:$0xff]
  %v31 = vld [vmem:[%s5 + $0x20] sm:$0xff]
  %v32 = vld [vmem:[%s5 + $0x28] sm:$0xff]
  %v33 = vld [vmem:[%s5 + $0x30] sm:$0xff]
  %v34 = vld [vmem:[%s5 + $0x38] sm:$0xff]
  %v35 = vld [vmem:[%s5 + $0x40] sm:$0xff]
  %v36 = vld [vmem:[%s5 + $0x48] sm:$0xff]
  %v37 = vld [vmem:[%s5 + $0x50] sm:$0xff]
  %v38 = vld [vmem:[%s5 + $0x58] sm:$0xff]
  %v39 = vld [vmem:[%s5 + $0x60] sm:$0xff]
  %v40 = vld [vmem:[%s5 + $0x68] sm:$0xff]
  %v41 = vld [vmem:[%s5 + $0x70] sm:$0xff]
  %v42 = vld [vmem:[%s5 + $0x78] sm:$0xff]
  %v43 = vld [vmem:[%s5 + $0x80] sm:$0xff]
  %v44 = vld [vmem:[%s5 + $0x88] sm:$0xff]
  %v45 = vld [vmem:[%s5 + $0x90] sm:$0xff]
  %v46 = vld [vmem:[%s5 + $0x98] sm:$0xff]
  %v47 = vld [vmem:[%s5 + $0xa0] sm:$0xff]
  %v48 = vld [vmem:[%s5 + $0xa8] sm:$0xff]
  %v49 = vld [vmem:[%s5 + $0xb0] sm:$0xff]
  %v50 = vld [vmem:[%s5 + $0xb8] sm:$0xff]
  %v51 = vld [vmem:[%s5 + $0xc0] sm:$0xff]
  %v52 = vld [vmem:[%s5 + $0xc8] sm:$0xff]
  %v53 = vld [vmem:[%s5 + $0xd0] sm:$0xff]
  %v54 = vld [vmem:[%s5 + $0xd8] sm:$0xff]
  %v55 = vld [vmem:[%s5 + $0xe0] sm:$0xff]
  %v56 = vld [vmem:[%s5 + $0xe8] sm:$0xff]
  %v57 = vld [vmem:[%s5 + $0xf0] sm:$0xff]
  %v58 = vld [vmem:[%s5 + $0xf8] sm:$0xff]
  %v59 = vld [vmem:[%s1] sm:$0xff]
  %s60 = scalar_lea.vmem %s5, 256
  %v61 = vld [vmem:[%s60] sm:$0xff]
  %v62 = vld [vmem:[%s60 + $0x8] sm:$0xff]
  %v63 = vld [vmem:[%s60 + $0x10] sm:$0xff]
  %v64 = vld [vmem:[%s60 + $0x18] sm:$0xff]
  %v65 = vld [vmem:[%s60 + $0x20] sm:$0xff]
  %v66 = vld [vmem:[%s60 + $0x28] sm:$0xff]
  %v67 = vld [vmem:[%s60 + $0x30] sm:$0xff]
  %v68 = vld [vmem:[%s60 + $0x38] sm:$0xff]
  %v69 = vld [vmem:[%s60 + $0x40] sm:$0xff]
  %v70 = vld [vmem:[%s60 + $0x48] sm:$0xff]
  %v71 = vld [vmem:[%s60 + $0x50] sm:$0xff]
  %v72 = vld [vmem:[%s60 + $0x58] sm:$0xff]
  %v73 = vld [vmem:[%s60 + $0x60] sm:$0xff]
  %v74 = vld [vmem:[%s60 + $0x68] sm:$0xff]
  %v75 = vld [vmem:[%s60 + $0x70] sm:$0xff]
  %v76 = vld [vmem:[%s60 + $0x78] sm:$0xff]
  %v77 = vld [vmem:[%s60 + $0x80] sm:$0xff]
  %v78 = vld [vmem:[%s60 + $0x88] sm:$0xff]
  %v79 = vld [vmem:[%s60 + $0x90] sm:$0xff]
  %v80 = vld [vmem:[%s60 + $0x98] sm:$0xff]
  %v81 = vld [vmem:[%s60 + $0xa0] sm:$0xff]
  %v82 = vld [vmem:[%s60 + $0xa8] sm:$0xff]
  %v83 = vld [vmem:[%s60 + $0xb0] sm:$0xff]
  %v84 = vld [vmem:[%s60 + $0xb8] sm:$0xff]
  %v85 = vld [vmem:[%s60 + $0xc0] sm:$0xff]
  %v86 = vld [vmem:[%s60 + $0xc8] sm:$0xff]
  %v87 = vld [vmem:[%s60 + $0xd0] sm:$0xff]
  %v88 = vld [vmem:[%s60 + $0xd8] sm:$0xff]
  %v89 = vld [vmem:[%s60 + $0xe0] sm:$0xff]
  %v90 = vld [vmem:[%s60 + $0xe8] sm:$0xff]
  %v91 = vld [vmem:[%s60 + $0xf0] sm:$0xff]
  %v92 = vld [vmem:[%s60 + $0xf8] sm:$0xff]
  %v94 = vunpack.c.l.b16 %v59
  %v95 = vunpack.c.h.b16 %v59
  %v96 = vpack.c.b16 %v94, %v94
  %v97 = vpack.c.b16 %v95, %v95
  %v132 = vunpack.c.l.b16 %v61
  %v133 = vunpack.c.h.b16 %v61
  %v134 = vunpack.c.l.b16 %v62
  %v135 = vunpack.c.h.b16 %v62
  %v136 = vunpack.c.l.b16 %v63
  %v137 = vunpack.c.h.b16 %v63
  %v138 = vunpack.c.l.b16 %v64
  %v139 = vunpack.c.h.b16 %v64
  %v140 = vunpack.c.l.b16 %v65
  %v141 = vunpack.c.h.b16 %v65
  %v142 = vunpack.c.l.b16 %v66
  %v143 = vunpack.c.h.b16 %v66
  %v144 = vunpack.c.l.b16 %v67
  %v145 = vunpack.c.h.b16 %v67
  %v146 = vunpack.c.l.b16 %v68
  %v147 = vunpack.c.h.b16 %v68
  %v148 = vunpack.c.l.b16 %v69
  %v149 = vunpack.c.h.b16 %v69
  %v150 = vunpack.c.l.b16 %v70
  %v151 = vunpack.c.h.b16 %v70
  %v152 = vunpack.c.l.b16 %v71
  %v153 = vunpack.c.h.b16 %v71
  %v154 = vunpack.c.l.b16 %v72
  %v155 = vunpack.c.h.b16 %v72
  %v156 = vunpack.c.l.b16 %v73
  %v157 = vunpack.c.h.b16 %v73
  %v158 = vunpack.c.l.b16 %v74
  %v159 = vunpack.c.h.b16 %v74
  %v160 = vunpack.c.l.b16 %v75
  %v161 = vunpack.c.h.b16 %v75
  %v162 = vunpack.c.l.b16 %v76
  %v163 = vunpack.c.h.b16 %v76
  %v164 = vunpack.c.l.b16 %v77
  %v165 = vunpack.c.h.b16 %v77
  %v166 = vunpack.c.l.b16 %v78
  %v167 = vunpack.c.h.b16 %v78
  %v168 = vunpack.c.l.b16 %v79
  %v169 = vunpack.c.h.b16 %v79
  %v170 = vunpack.c.l.b16 %v80
  %v171 = vunpack.c.h.b16 %v80
  %v172 = vunpack.c.l.b16 %v81
  %v173 = vunpack.c.h.b16 %v81
  %v174 = vunpack.c.l.b16 %v82
  %v175 = vunpack.c.h.b16 %v82
  %v176 = vunpack.c.l.b16 %v83
  %v177 = vunpack.c.h.b16 %v83
  %v178 = vunpack.c.l.b16 %v84
  %v179 = vunpack.c.h.b16 %v84
  %v180 = vunpack.c.l.b16 %v85
  %v181 = vunpack.c.h.b16 %v85
  %v182 = vunpack.c.l.b16 %v86
  %v183 = vunpack.c.h.b16 %v86
  %v184 = vunpack.c.l.b16 %v87
  %v185 = vunpack.c.h.b16 %v87
  %v186 = vunpack.c.l.b16 %v88
  %v187 = vunpack.c.h.b16 %v88
  %v188 = vunpack.c.l.b16 %v89
  %v189 = vunpack.c.h.b16 %v89
  %v190 = vunpack.c.l.b16 %v90
  %v191 = vunpack.c.h.b16 %v90
  %v192 = vunpack.c.l.b16 %v91
  %v193 = vunpack.c.h.b16 %v91
  %v194 = vunpack.c.l.b16 %v92
  %v195 = vunpack.c.h.b16 %v92
  %v196 = vpack.c.b16 %v134, %v132
  %v197 = vpack.c.b16 %v135, %v133
  %v198 = vpack.c.b16 %v138, %v136
  %v199 = vpack.c.b16 %v139, %v137
  %v200 = vpack.c.b16 %v142, %v140
  %v201 = vpack.c.b16 %v143, %v141
  %v202 = vpack.c.b16 %v146, %v144
  %v203 = vpack.c.b16 %v147, %v145
  %v204 = vpack.c.b16 %v150, %v148
  %v205 = vpack.c.b16 %v151, %v149
  %v206 = vpack.c.b16 %v154, %v152
  %v207 = vpack.c.b16 %v155, %v153
  %v208 = vpack.c.b16 %v158, %v156
  %v209 = vpack.c.b16 %v159, %v157
  %v210 = vpack.c.b16 %v162, %v160
  %v211 = vpack.c.b16 %v163, %v161
  %v212 = vpack.c.b16 %v166, %v164
  %v213 = vpack.c.b16 %v167, %v165
  %v214 = vpack.c.b16 %v170, %v168
  %v215 = vpack.c.b16 %v171, %v169
  %v216 = vpack.c.b16 %v174, %v172
  %v217 = vpack.c.b16 %v175, %v173
  %v218 = vpack.c.b16 %v178, %v176
  %v219 = vpack.c.b16 %v179, %v177
  %v220 = vpack.c.b16 %v182, %v180
  %v221 = vpack.c.b16 %v183, %v181
  %v222 = vpack.c.b16 %v186, %v184
  %v223 = vpack.c.b16 %v187, %v185
  %v224 = vpack.c.b16 %v190, %v188
  %v225 = vpack.c.b16 %v191, %v189
  %v226 = vpack.c.b16 %v194, %v192
  %v227 = vpack.c.b16 %v195, %v193
  %260 = vmatpush.bf16.msra.mxu0 %v210
  %261 = vmatpush.bf16.msra.mxu0 %v208
  %262 = vmatpush.bf16.msra.mxu0 %v206
  %263 = vmatpush.bf16.msra.mxu0 %v204
  %264 = vmatpush.bf16.msra.mxu0 %v202
  %265 = vmatpush.bf16.msra.mxu0 %v200
  %266 = vmatpush.bf16.msra.mxu0 %v198
  %267 = vmatpush.bf16.msra.mxu0 %v196
  %268 = vmatmul.bf16.gmra.mxu0 %v96
  %v269 = vpop.f32.mrf.mxu0
  %v270 = vadd.f32 0.0, %v269
  %v271 = vpop.f32.mrf.mxu0
  %272 = vdwg.mxu0
  %273 = vmatpush.bf16.msra.mxu0 %v226
  %274 = vmatpush.bf16.msra.mxu0 %v224
  %275 = vmatpush.bf16.msra.mxu0 %v222
  %276 = vmatpush.bf16.msra.mxu0 %v220
  %277 = vmatpush.bf16.msra.mxu0 %v218
  %278 = vmatpush.bf16.msra.mxu0 %v216
  %279 = vmatpush.bf16.msra.mxu0 %v214
  %280 = vmatpush.bf16.msra.mxu0 %v212
  %281 = vmatmul.bf16.gmra.mxu0 %v97
  %v282 = vpop.f32.mrf.mxu0
  %v283 = vadd.f32 %v270, %v282
  %v284 = vpop.f32.mrf.mxu0
  %285 = vdwg.mxu0
  %286 = vmatpush.bf16.msra.mxu0 %v211
  %287 = vmatpush.bf16.msra.mxu0 %v209
  %288 = vmatpush.bf16.msra.mxu0 %v207
  %289 = vmatpush.bf16.msra.mxu0 %v205
  %290 = vmatpush.bf16.msra.mxu0 %v203
  %291 = vmatpush.bf16.msra.mxu0 %v201
  %292 = vmatpush.bf16.msra.mxu0 %v199
  %293 = vmatpush.bf16.msra.mxu0 %v197
  %294 = vmatmul.bf16.gmra.mxu0 %v96
  %v295 = vpop.f32.mrf.mxu0
  %v296 = vadd.f32 0.0, %v295
  %v297 = vpop.f32.mrf.mxu0
  %298 = vdwg.mxu0
  %299 = vmatpush.bf16.msra.mxu0 %v227
  %300 = vmatpush.bf16.msra.mxu0 %v225
  %301 = vmatpush.bf16.msra.mxu0 %v223
  %302 = vmatpush.bf16.msra.mxu0 %v221
  %303 = vmatpush.bf16.msra.mxu0 %v219
  %304 = vmatpush.bf16.msra.mxu0 %v217
  %305 = vmatpush.bf16.msra.mxu0 %v215
  %306 = vmatpush.bf16.msra.mxu0 %v213
  %307 = vmatmul.bf16.gmra.mxu0 %v97
  %v308 = vpop.f32.mrf.mxu0
  %v309 = vadd.f32 %v296, %v308
  %v310 = vpop.f32.mrf.mxu0
  %311 = vdwg.mxu0
  %v313 = vunpack.c.l.b16 %v26
  %v314 = vunpack.c.h.b16 %v26
  %v315 = vpack.c.b16 %v313, %v313
  %v316 = vpack.c.b16 %v314, %v314
  %v351 = vunpack.c.l.b16 %v27
  %v352 = vunpack.c.h.b16 %v27
  %v353 = vunpack.c.l.b16 %v28
  %v354 = vunpack.c.h.b16 %v28
  %v355 = vunpack.c.l.b16 %v29
  %v356 = vunpack.c.h.b16 %v29
  %v357 = vunpack.c.l.b16 %v30
  %v358 = vunpack.c.h.b16 %v30
  %v359 = vunpack.c.l.b16 %v31
  %v360 = vunpack.c.h.b16 %v31
  %v361 = vunpack.c.l.b16 %v32
  %v362 = vunpack.c.h.b16 %v32
  %v363 = vunpack.c.l.b16 %v33
  %v364 = vunpack.c.h.b16 %v33
  %v365 = vunpack.c.l.b16 %v34
  %v366 = vunpack.c.h.b16 %v34
  %v367 = vunpack.c.l.b16 %v35
  %v368 = vunpack.c.h.b16 %v35
  %v369 = vunpack.c.l.b16 %v36
  %v370 = vunpack.c.h.b16 %v36
  %v371 = vunpack.c.l.b16 %v37
  %v372 = vunpack.c.h.b16 %v37
  %v373 = vunpack.c.l.b16 %v38
  %v374 = vunpack.c.h.b16 %v38
  %v375 = vunpack.c.l.b16 %v39
  %v376 = vunpack.c.h.b16 %v39
  %v377 = vunpack.c.l.b16 %v40
  %v378 = vunpack.c.h.b16 %v40
  %v379 = vunpack.c.l.b16 %v41
  %v380 = vunpack.c.h.b16 %v41
  %v381 = vunpack.c.l.b16 %v42
  %v382 = vunpack.c.h.b16 %v42
  %v383 = vunpack.c.l.b16 %v43
  %v384 = vunpack.c.h.b16 %v43
  %v385 = vunpack.c.l.b16 %v44
  %v386 = vunpack.c.h.b16 %v44
  %v387 = vunpack.c.l.b16 %v45
  %v388 = vunpack.c.h.b16 %v45
  %v389 = vunpack.c.l.b16 %v46
  %v390 = vunpack.c.h.b16 %v46
  %v391 = vunpack.c.l.b16 %v47
  %v392 = vunpack.c.h.b16 %v47
  %v393 = vunpack.c.l.b16 %v48
  %v394 = vunpack.c.h.b16 %v48
  %v395 = vunpack.c.l.b16 %v49
  %v396 = vunpack.c.h.b16 %v49
  %v397 = vunpack.c.l.b16 %v50
  %v398 = vunpack.c.h.b16 %v50
  %v399 = vunpack.c.l.b16 %v51
  %v400 = vunpack.c.h.b16 %v51
  %v401 = vunpack.c.l.b16 %v52
  %v402 = vunpack.c.h.b16 %v52
  %v403 = vunpack.c.l.b16 %v53
  %v404 = vunpack.c.h.b16 %v53
  %v405 = vunpack.c.l.b16 %v54
  %v406 = vunpack.c.h.b16 %v54
  %v407 = vunpack.c.l.b16 %v55
  %v408 = vunpack.c.h.b16 %v55
  %v409 = vunpack.c.l.b16 %v56
  %v410 = vunpack.c.h.b16 %v56
  %v411 = vunpack.c.l.b16 %v57
  %v412 = vunpack.c.h.b16 %v57
  %v413 = vunpack.c.l.b16 %v58
  %v414 = vunpack.c.h.b16 %v58
  %v415 = vpack.c.b16 %v353, %v351
  %v416 = vpack.c.b16 %v354, %v352
  %v417 = vpack.c.b16 %v357, %v355
  %v418 = vpack.c.b16 %v358, %v356
  %v419 = vpack.c.b16 %v361, %v359
  %v420 = vpack.c.b16 %v362, %v360
  %v421 = vpack.c.b16 %v365, %v363
  %v422 = vpack.c.b16 %v366, %v364
  %v423 = vpack.c.b16 %v369, %v367
  %v424 = vpack.c.b16 %v370, %v368
  %v425 = vpack.c.b16 %v373, %v371
  %v426 = vpack.c.b16 %v374, %v372
  %v427 = vpack.c.b16 %v377, %v375
  %v428 = vpack.c.b16 %v378, %v376
  %v429 = vpack.c.b16 %v381, %v379
  %v430 = vpack.c.b16 %v382, %v380
  %v431 = vpack.c.b16 %v385, %v383
  %v432 = vpack.c.b16 %v386, %v384
  %v433 = vpack.c.b16 %v389, %v387
  %v434 = vpack.c.b16 %v390, %v388
  %v435 = vpack.c.b16 %v393, %v391
  %v436 = vpack.c.b16 %v394, %v392
  %v437 = vpack.c.b16 %v397, %v395
  %v438 = vpack.c.b16 %v398, %v396
  %v439 = vpack.c.b16 %v401, %v399
  %v440 = vpack.c.b16 %v402, %v400
  %v441 = vpack.c.b16 %v405, %v403
  %v442 = vpack.c.b16 %v406, %v404
  %v443 = vpack.c.b16 %v409, %v407
  %v444 = vpack.c.b16 %v410, %v408
  %v445 = vpack.c.b16 %v413, %v411
  %v446 = vpack.c.b16 %v414, %v412
  %479 = vmatpush.bf16.msra.mxu0 %v429
  %480 = vmatpush.bf16.msra.mxu0 %v427
  %481 = vmatpush.bf16.msra.mxu0 %v425
  %482 = vmatpush.bf16.msra.mxu0 %v423
  %483 = vmatpush.bf16.msra.mxu0 %v421
  %484 = vmatpush.bf16.msra.mxu0 %v419
  %485 = vmatpush.bf16.msra.mxu0 %v417
  %486 = vmatpush.bf16.msra.mxu0 %v415
  %487 = vmatmul.bf16.gmra.mxu0 %v315
  %v488 = vpop.f32.mrf.mxu0
  %v489 = vadd.f32 %v283, %v488
  %v490 = vpop.f32.mrf.mxu0
  %491 = vdwg.mxu0
  %492 = vmatpush.bf16.msra.mxu0 %v445
  %493 = vmatpush.bf16.msra.mxu0 %v443
  %494 = vmatpush.bf16.msra.mxu0 %v441
  %495 = vmatpush.bf16.msra.mxu0 %v439
  %496 = vmatpush.bf16.msra.mxu0 %v437
  %497 = vmatpush.bf16.msra.mxu0 %v435
  %498 = vmatpush.bf16.msra.mxu0 %v433
  %499 = vmatpush.bf16.msra.mxu0 %v431
  %500 = vmatmul.bf16.gmra.mxu0 %v316
  %v501 = vpop.f32.mrf.mxu0
  %v502 = vadd.f32 %v489, %v501
  %v503 = vpop.f32.mrf.mxu0
  %504 = vdwg.mxu0
  %505 = vmatpush.bf16.msra.mxu0 %v430
  %506 = vmatpush.bf16.msra.mxu0 %v428
  %507 = vmatpush.bf16.msra.mxu0 %v426
  %508 = vmatpush.bf16.msra.mxu0 %v424
  %509 = vmatpush.bf16.msra.mxu0 %v422
  %510 = vmatpush.bf16.msra.mxu0 %v420
  %511 = vmatpush.bf16.msra.mxu0 %v418
  %512 = vmatpush.bf16.msra.mxu0 %v416
  %513 = vmatmul.bf16.gmra.mxu0 %v315
  %v514 = vpop.f32.mrf.mxu0
  %v515 = vadd.f32 %v309, %v514
  %v516 = vpop.f32.mrf.mxu0
  %517 = vdwg.mxu0
  %518 = vmatpush.bf16.msra.mxu0 %v446
  %519 = vmatpush.bf16.msra.mxu0 %v444
  %520 = vmatpush.bf16.msra.mxu0 %v442
  %521 = vmatpush.bf16.msra.mxu0 %v440
  %522 = vmatpush.bf16.msra.mxu0 %v438
  %523 = vmatpush.bf16.msra.mxu0 %v436
  %524 = vmatpush.bf16.msra.mxu0 %v434
  %525 = vmatpush.bf16.msra.mxu0 %v432
  %526 = vmatmul.bf16.gmra.mxu0 %v316
  %v527 = vpop.f32.mrf.mxu0
  %v528 = vadd.f32 %v515, %v527
  %v529 = vpop.f32.mrf.mxu0
  %530 = vdwg.mxu0
  %v531 = vld [vmem:[%s2] sm:$0xff]
  %s532 = scalar_lea.vmem %s5, 512
  %v533 = vld [vmem:[%s532] sm:$0xff]
  %v534 = vld [vmem:[%s532 + $0x8] sm:$0xff]
  %v535 = vld [vmem:[%s532 + $0x10] sm:$0xff]
  %v536 = vld [vmem:[%s532 + $0x18] sm:$0xff]
  %v537 = vld [vmem:[%s532 + $0x20] sm:$0xff]
  %v538 = vld [vmem:[%s532 + $0x28] sm:$0xff]
  %v539 = vld [vmem:[%s532 + $0x30] sm:$0xff]
  %v540 = vld [vmem:[%s532 + $0x38] sm:$0xff]
  %v541 = vld [vmem:[%s532 + $0x40] sm:$0xff]
  %v542 = vld [vmem:[%s532 + $0x48] sm:$0xff]
  %v543 = vld [vmem:[%s532 + $0x50] sm:$0xff]
  %v544 = vld [vmem:[%s532 + $0x58] sm:$0xff]
  %v545 = vld [vmem:[%s532 + $0x60] sm:$0xff]
  %v546 = vld [vmem:[%s532 + $0x68] sm:$0xff]
  %v547 = vld [vmem:[%s532 + $0x70] sm:$0xff]
  %v548 = vld [vmem:[%s532 + $0x78] sm:$0xff]
  %v549 = vld [vmem:[%s532 + $0x80] sm:$0xff]
  %v550 = vld [vmem:[%s532 + $0x88] sm:$0xff]
  %v551 = vld [vmem:[%s532 + $0x90] sm:$0xff]
  %v552 = vld [vmem:[%s532 + $0x98] sm:$0xff]
  %v553 = vld [vmem:[%s532 + $0xa0] sm:$0xff]
  %v554 = vld [vmem:[%s532 + $0xa8] sm:$0xff]
  %v555 = vld [vmem:[%s532 + $0xb0] sm:$0xff]
  %v556 = vld [vmem:[%s532 + $0xb8] sm:$0xff]
  %v557 = vld [vmem:[%s532 + $0xc0] sm:$0xff]
  %v558 = vld [vmem:[%s532 + $0xc8] sm:$0xff]
  %v559 = vld [vmem:[%s532 + $0xd0] sm:$0xff]
  %v560 = vld [vmem:[%s532 + $0xd8] sm:$0xff]
  %v561 = vld [vmem:[%s532 + $0xe0] sm:$0xff]
  %v562 = vld [vmem:[%s532 + $0xe8] sm:$0xff]
  %v563 = vld [vmem:[%s532 + $0xf0] sm:$0xff]
  %v564 = vld [vmem:[%s532 + $0xf8] sm:$0xff]
  %v566 = vunpack.c.l.b16 %v531
  %v567 = vunpack.c.h.b16 %v531
  %v568 = vpack.c.b16 %v566, %v566
  %v569 = vpack.c.b16 %v567, %v567
  %v604 = vunpack.c.l.b16 %v533
  %v605 = vunpack.c.h.b16 %v533
  %v606 = vunpack.c.l.b16 %v534
  %v607 = vunpack.c.h.b16 %v534
  %v608 = vunpack.c.l.b16 %v535
  %v609 = vunpack.c.h.b16 %v535
  %v610 = vunpack.c.l.b16 %v536
  %v611 = vunpack.c.h.b16 %v536
  %v612 = vunpack.c.l.b16 %v537
  %v613 = vunpack.c.h.b16 %v537
  %v614 = vunpack.c.l.b16 %v538
  %v615 = vunpack.c.h.b16 %v538
  %v616 = vunpack.c.l.b16 %v539
  %v617 = vunpack.c.h.b16 %v539
  %v618 = vunpack.c.l.b16 %v540
  %v619 = vunpack.c.h.b16 %v540
  %v620 = vunpack.c.l.b16 %v541
  %v621 = vunpack.c.h.b16 %v541
  %v622 = vunpack.c.l.b16 %v542
  %v623 = vunpack.c.h.b16 %v542
  %v624 = vunpack.c.l.b16 %v543
  %v625 = vunpack.c.h.b16 %v543
  %v626 = vunpack.c.l.b16 %v544
  %v627 = vunpack.c.h.b16 %v544
  %v628 = vunpack.c.l.b16 %v545
  %v629 = vunpack.c.h.b16 %v545
  %v630 = vunpack.c.l.b16 %v546
  %v631 = vunpack.c.h.b16 %v546
  %v632 = vunpack.c.l.b16 %v547
  %v633 = vunpack.c.h.b16 %v547
  %v634 = vunpack.c.l.b16 %v548
  %v635 = vunpack.c.h.b16 %v548
  %v636 = vunpack.c.l.b16 %v549
  %v637 = vunpack.c.h.b16 %v549
  %v638 = vunpack.c.l.b16 %v550
  %v639 = vunpack.c.h.b16 %v550
  %v640 = vunpack.c.l.b16 %v551
  %v641 = vunpack.c.h.b16 %v551
  %v642 = vunpack.c.l.b16 %v552
  %v643 = vunpack.c.h.b16 %v552
  %v644 = vunpack.c.l.b16 %v553
  %v645 = vunpack.c.h.b16 %v553
  %v646 = vunpack.c.l.b16 %v554
  %v647 = vunpack.c.h.b16 %v554
  %v648 = vunpack.c.l.b16 %v555
  %v649 = vunpack.c.h.b16 %v555
  %v650 = vunpack.c.l.b16 %v556
  %v651 = vunpack.c.h.b16 %v556
  %v652 = vunpack.c.l.b16 %v557
  %v653 = vunpack.c.h.b16 %v557
  %v654 = vunpack.c.l.b16 %v558
  %v655 = vunpack.c.h.b16 %v558
  %v656 = vunpack.c.l.b16 %v559
  %v657 = vunpack.c.h.b16 %v559
  %v658 = vunpack.c.l.b16 %v560
  %v659 = vunpack.c.h.b16 %v560
  %v660 = vunpack.c.l.b16 %v561
  %v661 = vunpack.c.h.b16 %v561
  %v662 = vunpack.c.l.b16 %v562
  %v663 = vunpack.c.h.b16 %v562
  %v664 = vunpack.c.l.b16 %v563
  %v665 = vunpack.c.h.b16 %v563
  %v666 = vunpack.c.l.b16 %v564
  %v667 = vunpack.c.h.b16 %v564
  %v668 = vpack.c.b16 %v606, %v604
  %v669 = vpack.c.b16 %v607, %v605
  %v670 = vpack.c.b16 %v610, %v608
  %v671 = vpack.c.b16 %v611, %v609
  %v672 = vpack.c.b16 %v614, %v612
  %v673 = vpack.c.b16 %v615, %v613
  %v674 = vpack.c.b16 %v618, %v616
  %v675 = vpack.c.b16 %v619, %v617
  %v676 = vpack.c.b16 %v622, %v620
  %v677 = vpack.c.b16 %v623, %v621
  %v678 = vpack.c.b16 %v626, %v624
  %v679 = vpack.c.b16 %v627, %v625
  %v680 = vpack.c.b16 %v630, %v628
  %v681 = vpack.c.b16 %v631, %v629
  %v682 = vpack.c.b16 %v634, %v632
  %v683 = vpack.c.b16 %v635, %v633
  %v684 = vpack.c.b16 %v638, %v636
  %v685 = vpack.c.b16 %v639, %v637
  %v686 = vpack.c.b16 %v642, %v640
  %v687 = vpack.c.b16 %v643, %v641
  %v688 = vpack.c.b16 %v646, %v644
  %v689 = vpack.c.b16 %v647, %v645
  %v690 = vpack.c.b16 %v650, %v648
  %v691 = vpack.c.b16 %v651, %v649
  %v692 = vpack.c.b16 %v654, %v652
  %v693 = vpack.c.b16 %v655, %v653
  %v694 = vpack.c.b16 %v658, %v656
  %v695 = vpack.c.b16 %v659, %v657
  %v696 = vpack.c.b16 %v662, %v660
  %v697 = vpack.c.b16 %v663, %v661
  %v698 = vpack.c.b16 %v666, %v664
  %v699 = vpack.c.b16 %v667, %v665
  %732 = vmatpush.bf16.msra.mxu0 %v682
  %733 = vmatpush.bf16.msra.mxu0 %v680
  %734 = vmatpush.bf16.msra.mxu0 %v678
  %735 = vmatpush.bf16.msra.mxu0 %v676
  %736 = vmatpush.bf16.msra.mxu0 %v674
  %737 = vmatpush.bf16.msra.mxu0 %v672
  %738 = vmatpush.bf16.msra.mxu0 %v670
  %739 = vmatpush.bf16.msra.mxu0 %v668
  %740 = vmatmul.bf16.gmra.mxu0 %v568
  %v741 = vpop.f32.mrf.mxu0
  %v742 = vadd.f32 0.0, %v741
  %v743 = vpop.f32.mrf.mxu0
  %744 = vdwg.mxu0
  %745 = vmatpush.bf16.msra.mxu0 %v698
  %746 = vmatpush.bf16.msra.mxu0 %v696
  %747 = vmatpush.bf16.msra.mxu0 %v694
  %748 = vmatpush.bf16.msra.mxu0 %v692
  %749 = vmatpush.bf16.msra.mxu0 %v690
  %750 = vmatpush.bf16.msra.mxu0 %v688
  %751 = vmatpush.bf16.msra.mxu0 %v686
  %752 = vmatpush.bf16.msra.mxu0 %v684
  %753 = vmatmul.bf16.gmra.mxu0 %v569
  %v754 = vpop.f32.mrf.mxu0
  %v755 = vadd.f32 %v742, %v754
  %v756 = vpop.f32.mrf.mxu0
  %757 = vdwg.mxu0
  %758 = vmatpush.bf16.msra.mxu0 %v683
  %759 = vmatpush.bf16.msra.mxu0 %v681
  %760 = vmatpush.bf16.msra.mxu0 %v679
  %761 = vmatpush.bf16.msra.mxu0 %v677
  %762 = vmatpush.bf16.msra.mxu0 %v675
  %763 = vmatpush.bf16.msra.mxu0 %v673
  %764 = vmatpush.bf16.msra.mxu0 %v671
  %765 = vmatpush.bf16.msra.mxu0 %v669
  %766 = vmatmul.bf16.gmra.mxu0 %v568
  %v767 = vpop.f32.mrf.mxu0
  %v768 = vadd.f32 0.0, %v767
  %v769 = vpop.f32.mrf.mxu0
  %770 = vdwg.mxu0
  %771 = vmatpush.bf16.msra.mxu0 %v699
  %772 = vmatpush.bf16.msra.mxu0 %v697
  %773 = vmatpush.bf16.msra.mxu0 %v695
  %774 = vmatpush.bf16.msra.mxu0 %v693
  %775 = vmatpush.bf16.msra.mxu0 %v691
  %776 = vmatpush.bf16.msra.mxu0 %v689
  %777 = vmatpush.bf16.msra.mxu0 %v687
  %778 = vmatpush.bf16.msra.mxu0 %v685
  %779 = vmatmul.bf16.gmra.mxu0 %v569
  %v780 = vpop.f32.mrf.mxu0
  %v781 = vadd.f32 %v768, %v780
  %v782 = vpop.f32.mrf.mxu0
  %783 = vdwg.mxu0
  %v784 = vadd.f32 %v502, %v755
  %v785 = vadd.f32 %v528, %v781
  %v786 = vld [vmem:[%s3] sm:$0xff]
  %s787 = scalar_lea.vmem %s5, 768
  %v788 = vld [vmem:[%s787] sm:$0xff]
  %v789 = vld [vmem:[%s787 + $0x8] sm:$0xff]
  %v790 = vld [vmem:[%s787 + $0x10] sm:$0xff]
  %v791 = vld [vmem:[%s787 + $0x18] sm:$0xff]
  %v792 = vld [vmem:[%s787 + $0x20] sm:$0xff]
  %v793 = vld [vmem:[%s787 + $0x28] sm:$0xff]
  %v794 = vld [vmem:[%s787 + $0x30] sm:$0xff]
  %v795 = vld [vmem:[%s787 + $0x38] sm:$0xff]
  %v796 = vld [vmem:[%s787 + $0x40] sm:$0xff]
  %v797 = vld [vmem:[%s787 + $0x48] sm:$0xff]
  %v798 = vld [vmem:[%s787 + $0x50] sm:$0xff]
  %v799 = vld [vmem:[%s787 + $0x58] sm:$0xff]
  %v800 = vld [vmem:[%s787 + $0x60] sm:$0xff]
  %v801 = vld [vmem:[%s787 + $0x68] sm:$0xff]
  %v802 = vld [vmem:[%s787 + $0x70] sm:$0xff]
  %v803 = vld [vmem:[%s787 + $0x78] sm:$0xff]
  %v804 = vld [vmem:[%s787 + $0x80] sm:$0xff]
  %v805 = vld [vmem:[%s787 + $0x88] sm:$0xff]
  %v806 = vld [vmem:[%s787 + $0x90] sm:$0xff]
  %v807 = vld [vmem:[%s787 + $0x98] sm:$0xff]
  %v808 = vld [vmem:[%s787 + $0xa0] sm:$0xff]
  %v809 = vld [vmem:[%s787 + $0xa8] sm:$0xff]
  %v810 = vld [vmem:[%s787 + $0xb0] sm:$0xff]
  %v811 = vld [vmem:[%s787 + $0xb8] sm:$0xff]
  %v812 = vld [vmem:[%s787 + $0xc0] sm:$0xff]
  %v813 = vld [vmem:[%s787 + $0xc8] sm:$0xff]
  %v814 = vld [vmem:[%s787 + $0xd0] sm:$0xff]
  %v815 = vld [vmem:[%s787 + $0xd8] sm:$0xff]
  %v816 = vld [vmem:[%s787 + $0xe0] sm:$0xff]
  %v817 = vld [vmem:[%s787 + $0xe8] sm:$0xff]
  %v818 = vld [vmem:[%s787 + $0xf0] sm:$0xff]
  %v819 = vld [vmem:[%s787 + $0xf8] sm:$0xff]
  %v821 = vunpack.c.l.b16 %v786
  %v822 = vunpack.c.h.b16 %v786
  %v823 = vpack.c.b16 %v821, %v821
  %v824 = vpack.c.b16 %v822, %v822
  %v859 = vunpack.c.l.b16 %v788
  %v860 = vunpack.c.h.b16 %v788
  %v861 = vunpack.c.l.b16 %v789
  %v862 = vunpack.c.h.b16 %v789
  %v863 = vunpack.c.l.b16 %v790
  %v864 = vunpack.c.h.b16 %v790
  %v865 = vunpack.c.l.b16 %v791
  %v866 = vunpack.c.h.b16 %v791
  %v867 = vunpack.c.l.b16 %v792
  %v868 = vunpack.c.h.b16 %v792
  %v869 = vunpack.c.l.b16 %v793
  %v870 = vunpack.c.h.b16 %v793
  %v871 = vunpack.c.l.b16 %v794
  %v872 = vunpack.c.h.b16 %v794
  %v873 = vunpack.c.l.b16 %v795
  %v874 = vunpack.c.h.b16 %v795
  %v875 = vunpack.c.l.b16 %v796
  %v876 = vunpack.c.h.b16 %v796
  %v877 = vunpack.c.l.b16 %v797
  %v878 = vunpack.c.h.b16 %v797
  %v879 = vunpack.c.l.b16 %v798
  %v880 = vunpack.c.h.b16 %v798
  %v881 = vunpack.c.l.b16 %v799
  %v882 = vunpack.c.h.b16 %v799
  %v883 = vunpack.c.l.b16 %v800
  %v884 = vunpack.c.h.b16 %v800
  %v885 = vunpack.c.l.b16 %v801
  %v886 = vunpack.c.h.b16 %v801
  %v887 = vunpack.c.l.b16 %v802
  %v888 = vunpack.c.h.b16 %v802
  %v889 = vunpack.c.l.b16 %v803
  %v890 = vunpack.c.h.b16 %v803
  %v891 = vunpack.c.l.b16 %v804
  %v892 = vunpack.c.h.b16 %v804
  %v893 = vunpack.c.l.b16 %v805
  %v894 = vunpack.c.h.b16 %v805
  %v895 = vunpack.c.l.b16 %v806
  %v896 = vunpack.c.h.b16 %v806
  %v897 = vunpack.c.l.b16 %v807
  %v898 = vunpack.c.h.b16 %v807
  %v899 = vunpack.c.l.b16 %v808
  %v900 = vunpack.c.h.b16 %v808
  %v901 = vunpack.c.l.b16 %v809
  %v902 = vunpack.c.h.b16 %v809
  %v903 = vunpack.c.l.b16 %v810
  %v904 = vunpack.c.h.b16 %v810
  %v905 = vunpack.c.l.b16 %v811
  %v906 = vunpack.c.h.b16 %v811
  %v907 = vunpack.c.l.b16 %v812
  %v908 = vunpack.c.h.b16 %v812
  %v909 = vunpack.c.l.b16 %v813
  %v910 = vunpack.c.h.b16 %v813
  %v911 = vunpack.c.l.b16 %v814
  %v912 = vunpack.c.h.b16 %v814
  %v913 = vunpack.c.l.b16 %v815
  %v914 = vunpack.c.h.b16 %v815
  %v915 = vunpack.c.l.b16 %v816
  %v916 = vunpack.c.h.b16 %v816
  %v917 = vunpack.c.l.b16 %v817
  %v918 = vunpack.c.h.b16 %v817
  %v919 = vunpack.c.l.b16 %v818
  %v920 = vunpack.c.h.b16 %v818
  %v921 = vunpack.c.l.b16 %v819
  %v922 = vunpack.c.h.b16 %v819
  %v923 = vpack.c.b16 %v861, %v859
  %v924 = vpack.c.b16 %v862, %v860
  %v925 = vpack.c.b16 %v865, %v863
  %v926 = vpack.c.b16 %v866, %v864
  %v927 = vpack.c.b16 %v869, %v867
  %v928 = vpack.c.b16 %v870, %v868
  %v929 = vpack.c.b16 %v873, %v871
  %v930 = vpack.c.b16 %v874, %v872
  %v931 = vpack.c.b16 %v877, %v875
  %v932 = vpack.c.b16 %v878, %v876
  %v933 = vpack.c.b16 %v881, %v879
  %v934 = vpack.c.b16 %v882, %v880
  %v935 = vpack.c.b16 %v885, %v883
  %v936 = vpack.c.b16 %v886, %v884
  %v937 = vpack.c.b16 %v889, %v887
  %v938 = vpack.c.b16 %v890, %v888
  %v939 = vpack.c.b16 %v893, %v891
  %v940 = vpack.c.b16 %v894, %v892
  %v941 = vpack.c.b16 %v897, %v895
  %v942 = vpack.c.b16 %v898, %v896
  %v943 = vpack.c.b16 %v901, %v899
  %v944 = vpack.c.b16 %v902, %v900
  %v945 = vpack.c.b16 %v905, %v903
  %v946 = vpack.c.b16 %v906, %v904
  %v947 = vpack.c.b16 %v909, %v907
  %v948 = vpack.c.b16 %v910, %v908
  %v949 = vpack.c.b16 %v913, %v911
  %v950 = vpack.c.b16 %v914, %v912
  %v951 = vpack.c.b16 %v917, %v915
  %v952 = vpack.c.b16 %v918, %v916
  %v953 = vpack.c.b16 %v921, %v919
  %v954 = vpack.c.b16 %v922, %v920
  %987 = vmatpush.bf16.msra.mxu0 %v937
  %988 = vmatpush.bf16.msra.mxu0 %v935
  %989 = vmatpush.bf16.msra.mxu0 %v933
  %990 = vmatpush.bf16.msra.mxu0 %v931
  %991 = vmatpush.bf16.msra.mxu0 %v929
  %992 = vmatpush.bf16.msra.mxu0 %v927
  %993 = vmatpush.bf16.msra.mxu0 %v925
  %994 = vmatpush.bf16.msra.mxu0 %v923
  %995 = vmatmul.bf16.gmra.mxu0 %v823
  %v996 = vpop.f32.mrf.mxu0
  %v997 = vadd.f32 0.0, %v996
  %v998 = vpop.f32.mrf.mxu0
  %999 = vdwg.mxu0
  %1000 = vmatpush.bf16.msra.mxu0 %v953
  %1001 = vmatpush.bf16.msra.mxu0 %v951
  %1002 = vmatpush.bf16.msra.mxu0 %v949
  %1003 = vmatpush.bf16.msra.mxu0 %v947
  %1004 = vmatpush.bf16.msra.mxu0 %v945
  %1005 = vmatpush.bf16.msra.mxu0 %v943
  %1006 = vmatpush.bf16.msra.mxu0 %v941
  %1007 = vmatpush.bf16.msra.mxu0 %v939
  %1008 = vmatmul.bf16.gmra.mxu0 %v824
  %v1009 = vpop.f32.mrf.mxu0
  %v1010 = vadd.f32 %v997, %v1009
  %v1011 = vpop.f32.mrf.mxu0
  %1012 = vdwg.mxu0
  %1013 = vmatpush.bf16.msra.mxu0 %v938
  %1014 = vmatpush.bf16.msra.mxu0 %v936
  %1015 = vmatpush.bf16.msra.mxu0 %v934
  %1016 = vmatpush.bf16.msra.mxu0 %v932
  %1017 = vmatpush.bf16.msra.mxu0 %v930
  %1018 = vmatpush.bf16.msra.mxu0 %v928
  %1019 = vmatpush.bf16.msra.mxu0 %v926
  %1020 = vmatpush.bf16.msra.mxu0 %v924
  %1021 = vmatmul.bf16.gmra.mxu0 %v823
  %v1022 = vpop.f32.mrf.mxu0
  %v1023 = vadd.f32 0.0, %v1022
  %v1024 = vpop.f32.mrf.mxu0
  %1025 = vdwg.mxu0
  %1026 = vmatpush.bf16.msra.mxu0 %v954
  %1027 = vmatpush.bf16.msra.mxu0 %v952
  %1028 = vmatpush.bf16.msra.mxu0 %v950
  %1029 = vmatpush.bf16.msra.mxu0 %v948
  %1030 = vmatpush.bf16.msra.mxu0 %v946
  %1031 = vmatpush.bf16.msra.mxu0 %v944
  %1032 = vmatpush.bf16.msra.mxu0 %v942
  %1033 = vmatpush.bf16.msra.mxu0 %v940
  %1034 = vmatmul.bf16.gmra.mxu0 %v824
  %v1035 = vpop.f32.mrf.mxu0
  %v1036 = vadd.f32 %v1023, %v1035
  %v1037 = vpop.f32.mrf.mxu0
  %1038 = vdwg.mxu0
  %v1039 = vadd.f32 %v784, %v1010
  %v1040 = vadd.f32 %v785, %v1036
  %v1041 = vld [vmem:[%s4] sm:$0xff]
  %s1042 = scalar_lea.vmem %s5, 1024
  %v1043 = vld [vmem:[%s1042] sm:$0xff]
  %v1044 = vld [vmem:[%s1042 + $0x8] sm:$0xff]
  %v1045 = vld [vmem:[%s1042 + $0x10] sm:$0xff]
  %v1046 = vld [vmem:[%s1042 + $0x18] sm:$0xff]
  %v1047 = vld [vmem:[%s1042 + $0x20] sm:$0xff]
  %v1048 = vld [vmem:[%s1042 + $0x28] sm:$0xff]
  %v1049 = vld [vmem:[%s1042 + $0x30] sm:$0xff]
  %v1050 = vld [vmem:[%s1042 + $0x38] sm:$0xff]
  %v1051 = vld [vmem:[%s1042 + $0x40] sm:$0xff]
  %v1052 = vld [vmem:[%s1042 + $0x48] sm:$0xff]
  %v1053 = vld [vmem:[%s1042 + $0x50] sm:$0xff]
  %v1054 = vld [vmem:[%s1042 + $0x58] sm:$0xff]
  %v1055 = vld [vmem:[%s1042 + $0x60] sm:$0xff]
  %v1056 = vld [vmem:[%s1042 + $0x68] sm:$0xff]
  %v1057 = vld [vmem:[%s1042 + $0x70] sm:$0xff]
  %v1058 = vld [vmem:[%s1042 + $0x78] sm:$0xff]
  %v1059 = vld [vmem:[%s1042 + $0x80] sm:$0xff]
  %v1060 = vld [vmem:[%s1042 + $0x88] sm:$0xff]
  %v1061 = vld [vmem:[%s1042 + $0x90] sm:$0xff]
  %v1062 = vld [vmem:[%s1042 + $0x98] sm:$0xff]
  %v1063 = vld [vmem:[%s1042 + $0xa0] sm:$0xff]
  %v1064 = vld [vmem:[%s1042 + $0xa8] sm:$0xff]
  %v1065 = vld [vmem:[%s1042 + $0xb0] sm:$0xff]
  %v1066 = vld [vmem:[%s1042 + $0xb8] sm:$0xff]
  %v1067 = vld [vmem:[%s1042 + $0xc0] sm:$0xff]
  %v1068 = vld [vmem:[%s1042 + $0xc8] sm:$0xff]
  %v1069 = vld [vmem:[%s1042 + $0xd0] sm:$0xff]
  %v1070 = vld [vmem:[%s1042 + $0xd8] sm:$0xff]
  %v1071 = vld [vmem:[%s1042 + $0xe0] sm:$0xff]
  %v1072 = vld [vmem:[%s1042 + $0xe8] sm:$0xff]
  %v1073 = vld [vmem:[%s1042 + $0xf0] sm:$0xff]
  %v1074 = vld [vmem:[%s1042 + $0xf8] sm:$0xff]
  %v1076 = vunpack.c.l.b16 %v1041
  %v1077 = vunpack.c.h.b16 %v1041
  %v1078 = vpack.c.b16 %v1076, %v1076
  %v1079 = vpack.c.b16 %v1077, %v1077
  %v1114 = vunpack.c.l.b16 %v1043
  %v1115 = vunpack.c.h.b16 %v1043
  %v1116 = vunpack.c.l.b16 %v1044
  %v1117 = vunpack.c.h.b16 %v1044
  %v1118 = vunpack.c.l.b16 %v1045
  %v1119 = vunpack.c.h.b16 %v1045
  %v1120 = vunpack.c.l.b16 %v1046
  %v1121 = vunpack.c.h.b16 %v1046
  %v1122 = vunpack.c.l.b16 %v1047
  %v1123 = vunpack.c.h.b16 %v1047
  %v1124 = vunpack.c.l.b16 %v1048
  %v1125 = vunpack.c.h.b16 %v1048
  %v1126 = vunpack.c.l.b16 %v1049
  %v1127 = vunpack.c.h.b16 %v1049
  %v1128 = vunpack.c.l.b16 %v1050
  %v1129 = vunpack.c.h.b16 %v1050
  %v1130 = vunpack.c.l.b16 %v1051
  %v1131 = vunpack.c.h.b16 %v1051
  %v1132 = vunpack.c.l.b16 %v1052
  %v1133 = vunpack.c.h.b16 %v1052
  %v1134 = vunpack.c.l.b16 %v1053
  %v1135 = vunpack.c.h.b16 %v1053
  %v1136 = vunpack.c.l.b16 %v1054
  %v1137 = vunpack.c.h.b16 %v1054
  %v1138 = vunpack.c.l.b16 %v1055
  %v1139 = vunpack.c.h.b16 %v1055
  %v1140 = vunpack.c.l.b16 %v1056
  %v1141 = vunpack.c.h.b16 %v1056
  %v1142 = vunpack.c.l.b16 %v1057
  %v1143 = vunpack.c.h.b16 %v1057
  %v1144 = vunpack.c.l.b16 %v1058
  %v1145 = vunpack.c.h.b16 %v1058
  %v1146 = vunpack.c.l.b16 %v1059
  %v1147 = vunpack.c.h.b16 %v1059
  %v1148 = vunpack.c.l.b16 %v1060
  %v1149 = vunpack.c.h.b16 %v1060
  %v1150 = vunpack.c.l.b16 %v1061
  %v1151 = vunpack.c.h.b16 %v1061
  %v1152 = vunpack.c.l.b16 %v1062
  %v1153 = vunpack.c.h.b16 %v1062
  %v1154 = vunpack.c.l.b16 %v1063
  %v1155 = vunpack.c.h.b16 %v1063
  %v1156 = vunpack.c.l.b16 %v1064
  %v1157 = vunpack.c.h.b16 %v1064
  %v1158 = vunpack.c.l.b16 %v1065
  %v1159 = vunpack.c.h.b16 %v1065
  %v1160 = vunpack.c.l.b16 %v1066
  %v1161 = vunpack.c.h.b16 %v1066
  %v1162 = vunpack.c.l.b16 %v1067
  %v1163 = vunpack.c.h.b16 %v1067
  %v1164 = vunpack.c.l.b16 %v1068
  %v1165 = vunpack.c.h.b16 %v1068
  %v1166 = vunpack.c.l.b16 %v1069
  %v1167 = vunpack.c.h.b16 %v1069
  %v1168 = vunpack.c.l.b16 %v1070
  %v1169 = vunpack.c.h.b16 %v1070
  %v1170 = vunpack.c.l.b16 %v1071
  %v1171 = vunpack.c.h.b16 %v1071
  %v1172 = vunpack.c.l.b16 %v1072
  %v1173 = vunpack.c.h.b16 %v1072
  %v1174 = vunpack.c.l.b16 %v1073
  %v1175 = vunpack.c.h.b16 %v1073
  %v1176 = vunpack.c.l.b16 %v1074
  %v1177 = vunpack.c.h.b16 %v1074
  %v1178 = vpack.c.b16 %v1116, %v1114
  %v1179 = vpack.c.b16 %v1117, %v1115
  %v1180 = vpack.c.b16 %v1120, %v1118
  %v1181 = vpack.c.b16 %v1121, %v1119
  %v1182 = vpack.c.b16 %v1124, %v1122
  %v1183 = vpack.c.b16 %v1125, %v1123
  %v1184 = vpack.c.b16 %v1128, %v1126
  %v1185 = vpack.c.b16 %v1129, %v1127
  %v1186 = vpack.c.b16 %v1132, %v1130
  %v1187 = vpack.c.b16 %v1133, %v1131
  %v1188 = vpack.c.b16 %v1136, %v1134
  %v1189 = vpack.c.b16 %v1137, %v1135
  %v1190 = vpack.c.b16 %v1140, %v1138
  %v1191 = vpack.c.b16 %v1141, %v1139
  %v1192 = vpack.c.b16 %v1144, %v1142
  %v1193 = vpack.c.b16 %v1145, %v1143
  %v1194 = vpack.c.b16 %v1148, %v1146
  %v1195 = vpack.c.b16 %v1149, %v1147
  %v1196 = vpack.c.b16 %v1152, %v1150
  %v1197 = vpack.c.b16 %v1153, %v1151
  %v1198 = vpack.c.b16 %v1156, %v1154
  %v1199 = vpack.c.b16 %v1157, %v1155
  %v1200 = vpack.c.b16 %v1160, %v1158
  %v1201 = vpack.c.b16 %v1161, %v1159
  %v1202 = vpack.c.b16 %v1164, %v1162
  %v1203 = vpack.c.b16 %v1165, %v1163
  %v1204 = vpack.c.b16 %v1168, %v1166
  %v1205 = vpack.c.b16 %v1169, %v1167
  %v1206 = vpack.c.b16 %v1172, %v1170
  %v1207 = vpack.c.b16 %v1173, %v1171
  %v1208 = vpack.c.b16 %v1176, %v1174
  %v1209 = vpack.c.b16 %v1177, %v1175
  %1242 = vmatpush.bf16.msra.mxu0 %v1192
  %1243 = vmatpush.bf16.msra.mxu0 %v1190
  %1244 = vmatpush.bf16.msra.mxu0 %v1188
  %1245 = vmatpush.bf16.msra.mxu0 %v1186
  %1246 = vmatpush.bf16.msra.mxu0 %v1184
  %1247 = vmatpush.bf16.msra.mxu0 %v1182
  %1248 = vmatpush.bf16.msra.mxu0 %v1180
  %1249 = vmatpush.bf16.msra.mxu0 %v1178
  %1250 = vmatmul.bf16.gmra.mxu0 %v1078
  %v1251 = vpop.f32.mrf.mxu0
  %v1252 = vadd.f32 0.0, %v1251
  %v1253 = vpop.f32.mrf.mxu0
  %1254 = vdwg.mxu0
  %1255 = vmatpush.bf16.msra.mxu0 %v1208
  %1256 = vmatpush.bf16.msra.mxu0 %v1206
  %1257 = vmatpush.bf16.msra.mxu0 %v1204
  %1258 = vmatpush.bf16.msra.mxu0 %v1202
  %1259 = vmatpush.bf16.msra.mxu0 %v1200
  %1260 = vmatpush.bf16.msra.mxu0 %v1198
  %1261 = vmatpush.bf16.msra.mxu0 %v1196
  %1262 = vmatpush.bf16.msra.mxu0 %v1194
  %1263 = vmatmul.bf16.gmra.mxu0 %v1079
  %v1264 = vpop.f32.mrf.mxu0
  %v1265 = vadd.f32 %v1252, %v1264
  %v1266 = vpop.f32.mrf.mxu0
  %1267 = vdwg.mxu0
  %1268 = vmatpush.bf16.msra.mxu0 %v1193
  %1269 = vmatpush.bf16.msra.mxu0 %v1191
  %1270 = vmatpush.bf16.msra.mxu0 %v1189
  %1271 = vmatpush.bf16.msra.mxu0 %v1187
  %1272 = vmatpush.bf16.msra.mxu0 %v1185
  %1273 = vmatpush.bf16.msra.mxu0 %v1183
  %1274 = vmatpush.bf16.msra.mxu0 %v1181
  %1275 = vmatpush.bf16.msra.mxu0 %v1179
  %1276 = vmatmul.bf16.gmra.mxu0 %v1078
  %v1277 = vpop.f32.mrf.mxu0
  %v1278 = vadd.f32 0.0, %v1277
  %v1279 = vpop.f32.mrf.mxu0
  %1280 = vdwg.mxu0
  %1281 = vmatpush.bf16.msra.mxu0 %v1209
  %1282 = vmatpush.bf16.msra.mxu0 %v1207
  %1283 = vmatpush.bf16.msra.mxu0 %v1205
  %1284 = vmatpush.bf16.msra.mxu0 %v1203
  %1285 = vmatpush.bf16.msra.mxu0 %v1201
  %1286 = vmatpush.bf16.msra.mxu0 %v1199
  %1287 = vmatpush.bf16.msra.mxu0 %v1197
  %1288 = vmatpush.bf16.msra.mxu0 %v1195
  %1289 = vmatmul.bf16.gmra.mxu0 %v1079
  %v1290 = vpop.f32.mrf.mxu0
  %v1291 = vadd.f32 %v1278, %v1290
  %v1292 = vpop.f32.mrf.mxu0
  %1293 = vdwg.mxu0
  %v1294 = vadd.f32 %v1039, %v1265
  %v1295 = vadd.f32 %v1040, %v1291
  %v1296 = vpack.c.bf16 %v1294, %v1294
  %v1297 = vpack.c.bf16 %v1295, %v1295
  %v1298 = vld [vmem:[%s6] sm:$0xf]
  %v1299 = vld [vmem:[%s6 + $0x4] sm:$0xf]
  %v1300 = vld [vmem:[%s6 + $0x8] sm:$0xf]
  %v1301 = vld [vmem:[%s6 + $0xc] sm:$0xf]
  %v1302 = vld [vmem:[%s6 + $0x10] sm:$0xf]
  %v1303 = vld [vmem:[%s6 + $0x14] sm:$0xf]
  %v1304 = vld [vmem:[%s6 + $0x18] sm:$0xf]
  %v1305 = vld [vmem:[%s6 + $0x1c] sm:$0xf]
  %v1306 = vld [vmem:[%s6 + $0x20] sm:$0xf]
  %v1307 = vld [vmem:[%s6 + $0x24] sm:$0xf]
  %v1308 = vld [vmem:[%s6 + $0x28] sm:$0xf]
  %v1309 = vld [vmem:[%s6 + $0x2c] sm:$0xf]
  %v1310 = vld [vmem:[%s6 + $0x30] sm:$0xf]
  %v1311 = vld [vmem:[%s6 + $0x34] sm:$0xf]
  %v1312 = vld [vmem:[%s6 + $0x38] sm:$0xf]
  %v1313 = vld [vmem:[%s6 + $0x3c] sm:$0xf]
  %v1314 = vld [vmem:[%s6 + $0x40] sm:$0xf]
  %v1315 = vld [vmem:[%s6 + $0x44] sm:$0xf]
  %v1316 = vld [vmem:[%s6 + $0x48] sm:$0xf]
  %v1317 = vld [vmem:[%s6 + $0x4c] sm:$0xf]
  %v1318 = vld [vmem:[%s6 + $0x50] sm:$0xf]
  %v1319 = vld [vmem:[%s6 + $0x54] sm:$0xf]
  %v1320 = vld [vmem:[%s6 + $0x58] sm:$0xf]
  %v1321 = vld [vmem:[%s6 + $0x5c] sm:$0xf]
  %v1322 = vld [vmem:[%s6 + $0x60] sm:$0xf]
  %v1323 = vld [vmem:[%s6 + $0x64] sm:$0xf]
  %v1324 = vld [vmem:[%s6 + $0x68] sm:$0xf]
  %v1325 = vld [vmem:[%s6 + $0x6c] sm:$0xf]
  %v1326 = vld [vmem:[%s6 + $0x70] sm:$0xf]
  %v1327 = vld [vmem:[%s6 + $0x74] sm:$0xf]
  %v1328 = vld [vmem:[%s6 + $0x78] sm:$0xf]
  %v1329 = vld [vmem:[%s6 + $0x7c] sm:$0xf]
  %v1362 = vunpack.c.l.b16 %v1298
  %v1363 = vunpack.c.l.b16 %v1299
  %v1364 = vunpack.c.l.b16 %v1300
  %v1365 = vunpack.c.l.b16 %v1301
  %v1366 = vunpack.c.l.b16 %v1302
  %v1367 = vunpack.c.l.b16 %v1303
  %v1368 = vunpack.c.l.b16 %v1304
  %v1369 = vunpack.c.l.b16 %v1305
  %v1370 = vunpack.c.l.b16 %v1306
  %v1371 = vunpack.c.l.b16 %v1307
  %v1372 = vunpack.c.l.b16 %v1308
  %v1373 = vunpack.c.l.b16 %v1309
  %v1374 = vunpack.c.l.b16 %v1310
  %v1375 = vunpack.c.l.b16 %v1311
  %v1376 = vunpack.c.l.b16 %v1312
  %v1377 = vunpack.c.l.b16 %v1313
  %v1378 = vunpack.c.l.b16 %v1314
  %v1379 = vunpack.c.l.b16 %v1315
  %v1380 = vunpack.c.l.b16 %v1316
  %v1381 = vunpack.c.l.b16 %v1317
  %v1382 = vunpack.c.l.b16 %v1318
  %v1383 = vunpack.c.l.b16 %v1319
  %v1384 = vunpack.c.l.b16 %v1320
  %v1385 = vunpack.c.l.b16 %v1321
  %v1386 = vunpack.c.l.b16 %v1322
  %v1387 = vunpack.c.l.b16 %v1323
  %v1388 = vunpack.c.l.b16 %v1324
  %v1389 = vunpack.c.l.b16 %v1325
  %v1390 = vunpack.c.l.b16 %v1326
  %v1391 = vunpack.c.l.b16 %v1327
  %v1392 = vunpack.c.l.b16 %v1328
  %v1393 = vunpack.c.l.b16 %v1329
  %v1394 = vpack.c.b16 %v1363, %v1362
  %v1395 = vpack.c.b16 %v1365, %v1364
  %v1396 = vpack.c.b16 %v1367, %v1366
  %v1397 = vpack.c.b16 %v1369, %v1368
  %v1398 = vpack.c.b16 %v1371, %v1370
  %v1399 = vpack.c.b16 %v1373, %v1372
  %v1400 = vpack.c.b16 %v1375, %v1374
  %v1401 = vpack.c.b16 %v1377, %v1376
  %v1402 = vpack.c.b16 %v1379, %v1378
  %v1403 = vpack.c.b16 %v1381, %v1380
  %v1404 = vpack.c.b16 %v1383, %v1382
  %v1405 = vpack.c.b16 %v1385, %v1384
  %v1406 = vpack.c.b16 %v1387, %v1386
  %v1407 = vpack.c.b16 %v1389, %v1388
  %v1408 = vpack.c.b16 %v1391, %v1390
  %v1409 = vpack.c.b16 %v1393, %v1392
  %1426 = vmatpush.bf16.msra.mxu0 %v1401
  %1427 = vmatpush.bf16.msra.mxu0 %v1400
  %1428 = vmatpush.bf16.msra.mxu0 %v1399
  %1429 = vmatpush.bf16.msra.mxu0 %v1398
  %1430 = vmatpush.bf16.msra.mxu0 %v1397
  %1431 = vmatpush.bf16.msra.mxu0 %v1396
  %1432 = vmatpush.bf16.msra.mxu0 %v1395
  %1433 = vmatpush.bf16.msra.mxu0 %v1394
  %1434 = vmatmul.bf16.gmra.mxu0 %v1296
  %v1435 = vpop.f32.mrf.mxu0
  %v1436 = vadd.f32 0.0, %v1435
  %v1437 = vpop.f32.mrf.mxu0
  %1438 = vdwg.mxu0
  %1439 = vmatpush.bf16.msra.mxu0 %v1409
  %1440 = vmatpush.bf16.msra.mxu0 %v1408
  %1441 = vmatpush.bf16.msra.mxu0 %v1407
  %1442 = vmatpush.bf16.msra.mxu0 %v1406
  %1443 = vmatpush.bf16.msra.mxu0 %v1405
  %1444 = vmatpush.bf16.msra.mxu0 %v1404
  %1445 = vmatpush.bf16.msra.mxu0 %v1403
  %1446 = vmatpush.bf16.msra.mxu0 %v1402
  %1447 = vmatmul.bf16.gmra.mxu0 %v1297
  %v1448 = vpop.f32.mrf.mxu0
  %v1449 = vadd.f32 %v1436, %v1448
  %v1450 = vpop.f32.mrf.mxu0
  %1451 = vdwg.mxu0
  %v1452 = vsub.f32 0.0, %v1449
  %v1453 = vmul.f32 %v1452, 1.442695
  %v1454 = vpow.pop %v1453
  %v1455 = vadd.f32 %v1454, 1.0
  %v1456 = vrcp.pop %v1455
  %1457 = vst [vmem:[%s7] sm:$0xff] %v1456
  // Predicated region
  $region30: #{instance_branch_forward.7} parent=0 // pred_check
    _
  $region31: #{instance_branch_forward.7} parent=0 // pred_check_branch
    %1459 = sbr.rel (0) target = $region33
  $region32: #{instance_branch_forward.7} parent=0 // pred_region
    _
  $region33: #{instance_branch_forward.7} parent=0 // pred_fallthru
    _
  // Predicated region
  $region34: #{instance_branch_forward.7} parent=0 // pred_check
    _
  $region35: #{instance_branch_forward.7} parent=0 // pred_check_branch
    %1461 = sbr.rel (0) target = $region37
  $region36: #{instance_branch_forward.7} parent=0 // pred_region
    _
  $region37: #{instance_branch_forward.7} parent=0 // pred_fallthru
    _

</llo_original>
